<compile_context>
chip_gen: v7x
topology: tpu7x:2x2x1
jax: 0.10.0
libtpu: 0.0.40
codegen_flags: <defaults>
</compile_context>

<pallas_src>
import functools

import jax
import jax.numpy as jnp
from jax import lax
from jax.experimental import pallas as pl
from jax.experimental.pallas import tpu as pltpu


# ---------------------------------------------------------------------------
# Pallas kernels: in-kernel im2col ("shifted window") conv + folded-BN shift
# [+ masked ReLU] [+ fused residual add].
# ---------------------------------------------------------------------------
def _tap_conv_kernel(x_ref, w_ref, shift_ref, o_ref, *, starts, relu_cols):
    rows, n_cols = o_ref.shape
    acc = jnp.zeros((rows, n_cols), jnp.float32)
    for t, s in enumerate(starts):
        acc += jnp.dot(x_ref[pl.ds(s, rows), :], w_ref[t],
                       preferred_element_type=jnp.float32)
    y = acc + shift_ref[...]
    if relu_cols is None:           # ReLU on every output column
        y = jnp.maximum(y, 0.0)
    else:                           # ReLU only on the conv columns (identity raw)
        col = lax.broadcasted_iota(jnp.int32, y.shape, 1)
        y = jnp.where(col < relu_cols, jnp.maximum(y, 0.0), y)
    o_ref[...] = y.astype(o_ref.dtype)


def _tap_conv_res_kernel(x_ref, w_ref, shift_ref, res_ref, o_ref, *, starts):
    rows, n_cols = o_ref.shape
    acc = jnp.zeros((rows, n_cols), jnp.float32)
    for t, s in enumerate(starts):
        acc += jnp.dot(x_ref[pl.ds(s, rows), :], w_ref[t],
                       preferred_element_type=jnp.float32)
    y = jnp.maximum(acc + shift_ref[...], 0.0) + res_ref[...].astype(jnp.float32)
    o_ref[...] = y.astype(o_ref.dtype)


def tap_conv(x_flat, w, shift, *, starts, out_rows, relu_cols=None, residual=None,
             out_dtype=jnp.bfloat16):
    """Fused multi-tap conv as shifted-window matmuls (in-kernel im2col).

    x_flat:   (N, R, K)      flattened, padded activation.
    w:        (T, K, Ncols)  per-tap weight matrices (BN scale folded in).
    shift:    (Ncols,)       folded BN shift / bias (f32).
    starts:   static per-tap window offsets into the R axis.
    out_rows: window length (rows of the accumulator / output).
    """
    N, R, K = x_flat.shape
    T, Kw, n_cols = w.shape
    assert Kw == K and T == len(starts)
    assert max(starts) + out_rows <= R

    xb = x_flat.astype(jnp.bfloat16)
    wb = w.astype(jnp.bfloat16)
    shift2 = shift.reshape(1, n_cols).astype(jnp.float32)

    in_specs = [
        pl.BlockSpec((None, R, K), lambda n: (n, 0, 0)),
        pl.BlockSpec((T, K, n_cols), lambda n: (0, 0, 0)),
        pl.BlockSpec((1, n_cols), lambda n: (0, 0)),
    ]
    args = [xb, wb, shift2]
    if residual is not None:
        in_specs.append(pl.BlockSpec((None, out_rows, n_cols), lambda n: (n, 0, 0)))
        args.append(residual.astype(jnp.bfloat16))
        kernel = functools.partial(_tap_conv_res_kernel, starts=tuple(starts))
    else:
        kernel = functools.partial(_tap_conv_kernel, starts=tuple(starts),
                                   relu_cols=relu_cols)

    flops = 2 * N * out_rows * K * n_cols * T
    bytes_accessed = (N * R * K * 2 + T * K * n_cols * 2 + n_cols * 4
                      + N * out_rows * n_cols * 2
                      + (N * out_rows * n_cols * 2 if residual is not None else 0))

    return pl.pallas_call(
        kernel,
        out_shape=jax.ShapeDtypeStruct((N, out_rows, n_cols), out_dtype),
        grid=(N,),
        in_specs=in_specs,
        out_specs=pl.BlockSpec((None, out_rows, n_cols), lambda n: (n, 0, 0)),
        compiler_params=pltpu.CompilerParams(
            dimension_semantics=("parallel",),
            vmem_limit_bytes=32 * 1024 * 1024),
        cost_estimate=pl.CostEstimate(flops=int(flops), transcendentals=0,
                                      bytes_accessed=int(bytes_accessed)),
    )(*args)


# ---------------------------------------------------------------------------
# Eval-mode BatchNorm folding + weight builders (plain JAX, tiny tensors).
# ---------------------------------------------------------------------------
def fold_bn(bn, conv_bias=None, eps=1e-5):
    scale = bn["gamma"] / jnp.sqrt(bn["var"] + eps)
    bias = 0.0 if conv_bias is None else conv_bias
    shift = bn["beta"] + (bias - bn["mean"]) * scale
    return scale, shift


def _conv3x3_weight(w, bn):
    """(O, I, 3, 3) conv weight + BN  ->  (9, I, O) per-tap matrices + shift."""
    O, I = w.shape[0], w.shape[1]
    scale, shift = fold_bn(bn)
    wmat = jnp.transpose(w, (2, 3, 1, 0)) * scale          # (3, 3, I, O)
    return wmat.reshape(9, I, O), shift


def _s2d_conv1_weight(w1, bn1, wd, bd, bnd):
    """Stride-2 3x3 conv (+BN) fused with 1x1 stride-2 downsample (+bias+BN)
    as a 4-tap conv over the space-to-depth image.

    Returns ((4, 4*Cin, 2*Cout), (2*Cout,)); output columns [:Cout] are the
    conv path (ReLU'd in-kernel), [Cout:] the identity path (no ReLU)."""
    Cout, Cin = w1.shape[0], w1.shape[1]
    s1, sh1 = fold_bn(bn1)
    sd, shd = fold_bn(bnd, conv_bias=bd)
    w1f = jnp.transpose(w1, (2, 3, 1, 0)) * s1              # (3, 3, Cin, Cout)
    wdf = wd[:, :, 0, 0].T * sd                              # (Cin, Cout)
    zero = jnp.zeros((Cin, Cout), w1.dtype)

    taps = []
    for by in range(2):
        for bx in range(2):
            rows = []
            for py in range(2):
                for px in range(2):
                    dy, dx = 2 * by + py, 2 * bx + px
                    conv_part = w1f[dy, dx] if (dy <= 2 and dx <= 2) else zero
                    id_part = wdf if (by == 0 and bx == 0 and py == 1 and px == 1) else zero
                    rows.append(jnp.concatenate([conv_part, id_part], axis=1))
            taps.append(jnp.concatenate(rows, axis=0))       # (4*Cin, 2*Cout)
    w = jnp.stack(taps, axis=0)                              # (4, 4*Cin, 2*Cout)
    return w, jnp.concatenate([sh1, shd])


def _upconv_weight(w, b):
    """ConvTranspose2d(k=3, s=2, p=1, op=1) as a 4-tap conv producing the 4
    output sub-pixel phases.  w: (Cin, Cout, 3, 3)  ->  (4, Cin, 4*Cout)."""
    Cin, Cout = w.shape[0], w.shape[1]
    zero = jnp.zeros((Cin, Cout), w.dtype)

    def ktap(phase, off):                                    # kernel index or None
        if phase == 0:
            return 1 if off == 0 else None
        return 2 if off == 0 else 0

    taps = []
    for a in range(2):
        for bb in range(2):
            cols = []
            for py in range(2):
                for px in range(2):
                    ky, kx = ktap(py, a), ktap(px, bb)
                    cols.append(zero if (ky is None or kx is None) else w[:, :, ky, kx])
            taps.append(jnp.concatenate(cols, axis=1))       # (Cin, 4*Cout)
    return jnp.stack(taps, axis=0), jnp.tile(b, 4)


# ---------------------------------------------------------------------------
# Network blocks (NHWC, bf16 activations end-to-end).
# ---------------------------------------------------------------------------
def conv_block(x, p):
    """Detector.conv: [Conv3x3-BN-ReLU]x3 (first stride=2) + 1x1 downsample residual."""
    N, H, W, Cin = x.shape
    Cout = p["w1"].shape[0]
    OH, OW = H // 2, W // 2
    Wq = OW + 1            # space-to-depth image width (one junk column)
    Wp = OW + 2            # padded width for the stride-1 convs

    # conv1 (stride 2) + BN + ReLU with the downsample identity fused as extra columns
    w1c, sh1c = _s2d_conv1_weight(p["w1"], p["bn1"], p["wd"], p["bd"], p["bnd"])
    xp = jnp.pad(x, ((0, 0), (1, 3), (1, 1), (0, 0)))
    s2d = xp.reshape(N, OH + 2, 2, Wq, 2, Cin).transpose(0, 1, 3, 2, 4, 5)
    s2d = s2d.reshape(N, (OH + 2) * Wq, 4 * Cin)
    y1 = tap_conv(s2d, w1c, sh1c, starts=(0, 1, Wq, Wq + 1),
                  out_rows=OH * Wq, relu_cols=Cout)
    y1 = y1.reshape(N, OH, Wq, 2 * Cout)
    h = y1[:, :, :OW, :Cout]            # conv1 + BN + ReLU
    idt = y1[:, :, :OW, Cout:]          # downsample + BN (no ReLU), bf16

    starts9 = tuple(dy * Wp + dx for dy in range(3) for dx in range(3))

    # conv2 (stride 1) + BN + ReLU
    w2, sh2 = _conv3x3_weight(p["w2"], p["bn2"])
    h_in = jnp.pad(h, ((0, 0), (1, 2), (1, 1), (0, 0))).reshape(N, (OH + 3) * Wp, Cout)
    h2 = tap_conv(h_in, w2, sh2, starts=starts9, out_rows=OH * Wp)
    h2 = h2.reshape(N, OH, Wp, Cout)[:, :, :OW, :]

    # conv3 (stride 1) + BN + ReLU, residual add fused in the kernel epilogue
    w3, sh3 = _conv3x3_weight(p["w3"], p["bn3"])
    h_in = jnp.pad(h2, ((0, 0), (1, 2), (1, 1), (0, 0))).reshape(N, (OH + 3) * Wp, Cout)
    res = jnp.pad(idt, ((0, 0), (0, 0), (0, 2), (0, 0))).reshape(N, OH * Wp, Cout)
    h3 = tap_conv(h_in, w3, sh3, starts=starts9, out_rows=OH * Wp, residual=res)
    return h3.reshape(N, OH, Wp, Cout)[:, :, :OW, :]


def upconv_block(x, p, out_h, out_w):
    """Detector.upconv: ConvTranspose2d(k=3,s=2,p=1,op=1) + ReLU (4-phase, in-kernel taps)."""
    N, H, W, Cin = x.shape
    Cout = p["w"].shape[1]
    Wq = W + 1
    wt, sh = _upconv_weight(p["w"], p["b"])
    xq = jnp.pad(x, ((0, 0), (0, 2), (0, 1), (0, 0))).reshape(N, (H + 2) * Wq, Cin)
    y = tap_conv(xq, wt, sh, starts=(0, 1, Wq, Wq + 1), out_rows=H * Wq)
    # phase interleave (fuses with the following crop + skip concat + pad in XLA)
    y = y.reshape(N, H, Wq, 2, 2, Cout)[:, :, :W]
    y = jnp.transpose(y, (0, 1, 3, 2, 4, 5)).reshape(N, 2 * H, 2 * W, Cout)
    return y[:, :out_h, :out_w, :]


def detector_forward(params, x_nchw, layers=(32, 64, 128)):
    N, C, H, W = x_nchw.shape
    x = jnp.transpose(x_nchw, (0, 2, 3, 1))                  # NHWC once, at the boundary
    scale, shift = fold_bn(params["norm"])
    x = (x * scale + shift).astype(jnp.bfloat16)             # input BN: XLA, fuses w/ transpose
    skips = []
    for i in range(len(layers)):
        skips.append(x)
        x = conv_block(x, params["conv%d" % i])
    for i in reversed(range(len(layers))):
        x = upconv_block(x, params["upconv%d" % i],
                         skips[i].shape[1], skips[i].shape[2])
        x = jnp.concatenate([x, skips[i]], axis=-1)          # lane-axis skip concat
    # final 1x1 "size" head: only 2 output channels -> XLA einsum
    w1 = params["size"]["w"][:, :, 0, 0].T.astype(jnp.float32)
    y = jnp.einsum("nhwc,co->nhwo", x.astype(jnp.float32), w1) + params["size"]["b"]
    pred = y[:, :H, :W, 0]
    width = y[:, :H, :W, 1]
    return pred, width


# ---------------------------------------------------------------------------
# Deterministic parameter construction (shapes follow Detector.__init__)
# ---------------------------------------------------------------------------
def init_params(key, layers=(32, 64, 128), n_in=3, n_out=2, ks=3):
    state = {"key": key}

    def nxt():
        state["key"], k = jax.random.split(state["key"])
        return k

    def conv_w(o, i, kh, kw):
        return jax.random.normal(nxt(), (o, i, kh, kw), jnp.float32) * 0.1

    def bn(c):
        return dict(
            gamma=jax.random.uniform(nxt(), (c,), jnp.float32, 0.5, 1.5),
            beta=jax.random.normal(nxt(), (c,), jnp.float32) * 0.1,
            mean=jax.random.normal(nxt(), (c,), jnp.float32) * 0.1,
            var=jax.random.uniform(nxt(), (c,), jnp.float32, 0.5, 1.5),
        )

    params = {"norm": bn(n_in)}
    c = n_in
    for i, l in enumerate(layers):
        params["conv%d" % i] = dict(
            w1=conv_w(l, c, ks, ks), bn1=bn(l),
            w2=conv_w(l, l, ks, ks), bn2=bn(l),
            w3=conv_w(l, l, ks, ks), bn3=bn(l),
            wd=conv_w(l, c, 1, 1),
            bd=jax.random.normal(nxt(), (l,), jnp.float32) * 0.1,
            bnd=bn(l),
        )
        c = l
    skip_layers = [n_in] + list(layers[:-1])
    for i, l in list(enumerate(layers))[::-1]:
        params["upconv%d" % i] = dict(
            w=jax.random.normal(nxt(), (c, l, ks, ks), jnp.float32) * 0.1,
            b=jax.random.normal(nxt(), (l,), jnp.float32) * 0.1,
        )
        c = l + skip_layers[i]
    params["size"] = dict(
        w=jax.random.normal(nxt(), (n_out, c, 1, 1), jnp.float32) * 0.1,
        b=jax.random.normal(nxt(), (n_out,), jnp.float32) * 0.1,
    )
    return params


# ---------------------------------------------------------------------------
# Pure-XLA references for the sanity checks (bf16-rounded inputs like Pallas).
# ---------------------------------------------------------------------------
def _ref_conv_block(x, p):
    def c16(a):
        return a.astype(jnp.bfloat16).astype(jnp.float32)

    def conv(h, w, stride, pad):
        return lax.conv_general_dilated(
            c16(h), c16(w), (stride, stride), [(pad, pad), (pad, pad)],
            dimension_numbers=("NHWC", "OIHW", "NHWC"))

    def bn(h, b):
        s, sh = fold_bn(b)
        return h * s + sh

    h = jnp.maximum(bn(conv(x, p["w1"], 2, 1), p["bn1"]), 0.0)
    h = jnp.maximum(bn(conv(h, p["w2"], 1, 1), p["bn2"]), 0.0)
    h = jnp.maximum(bn(conv(h, p["w3"], 1, 1), p["bn3"]), 0.0)
    idt = bn(conv(x, p["wd"], 2, 0) + p["bd"], p["bnd"])
    return h + idt


def _ref_upconv(x, w, b):
    xb = x.astype(jnp.bfloat16).astype(jnp.float32)
    wb = w.astype(jnp.bfloat16).astype(jnp.float32)
    wt = jnp.transpose(jnp.flip(wb, (2, 3)), (1, 0, 2, 3))   # (Cout, Cin, 3, 3)
    y = lax.conv_general_dilated(xb, wt, (1, 1), [(1, 2), (1, 2)],
                                 lhs_dilation=(2, 2),
                                 dimension_numbers=("NHWC", "OIHW", "NHWC"))
    return jnp.maximum(y + b, 0.0)


if __name__ == "__main__":
    key = jax.random.PRNGKey(0)
    kp, kx, kc, ku, kw, kb = jax.random.split(key, 6)
    params = init_params(kp)
    x = jax.random.normal(kx, (2, 3, 16, 16), jnp.float32)   # NCHW, min_size = 16

    # sanity 1: fused conv block (s2d conv1 + fused identity + 2 stride-1 convs + residual)
    xb = jax.random.normal(kc, (2, 16, 16, 3), jnp.float32)
    got = jax.jit(conv_block)(xb.astype(jnp.bfloat16),
                              params["conv0"]).astype(jnp.float32)
    ref = _ref_conv_block(xb, params["conv0"])
    assert got.shape == ref.shape
    assert jnp.allclose(got, ref, atol=5e-2, rtol=5e-2), float(jnp.abs(got - ref).max())

    # sanity 2: 4-phase transposed conv vs XLA reference
    ci, co = 8, 16
    xu = jax.random.normal(ku, (2, 4, 4, ci), jnp.float32)
    wu = jax.random.normal(kw, (ci, co, 3, 3), jnp.float32) * 0.1
    bu = jax.random.normal(kb, (co,), jnp.float32) * 0.1
    got_u = jax.jit(lambda a, q: upconv_block(a, q, 8, 8))(
        xu.astype(jnp.bfloat16), {"w": wu, "b": bu}).astype(jnp.float32)
    ref_u = _ref_upconv(xu, wu, bu)
    assert got_u.shape == ref_u.shape
    assert jnp.allclose(got_u, ref_u, atol=3e-2, rtol=3e-2), \
        float(jnp.abs(got_u - ref_u).max())

    # full forward
    pred, width = jax.jit(detector_forward)(params, x)
    jax.block_until_ready((pred, width))
    assert pred.shape == (2, 16, 16) and width.shape == (2, 16, 16)
    assert bool(jnp.isfinite(pred).all()) and bool(jnp.isfinite(width).all())
    print("KERNEL_OK")
</pallas_src>

<mosaic_0001>
module attributes {stable_mosaic.version = 11 : i64} {
  func.func @_tap_conv_kernel(%arg0: i32, %arg1: memref<1x90x12xbf16, #tpu.memory_space<vmem>>, %arg2: memref<4x12x64xbf16, #tpu.memory_space<vmem>>, %arg3: memref<1x64xf32, #tpu.memory_space<vmem>>, %arg4: memref<1x72x64xbf16, #tpu.memory_space<vmem>>) attributes {dimension_semantics = [#tpu.dimension_semantics<parallel>], iteration_bounds = array<i64: 2>, scalar_prefetch = 0 : i64, scratch_operands = 0 : i64, tpu.core_type = #tpu.core_type<tc>, window_params = [{transform_indices = @transform_0, window_bounds = array<i64: 1, 90, 12>}, {pipeline_mode = #tpu.pipeline_mode<synchronous>, transform_indices = @transform_1, window_bounds = array<i64: 4, 12, 64>}, {pipeline_mode = #tpu.pipeline_mode<synchronous>, transform_indices = @transform_2, window_bounds = array<i64: 1, 64>}, {transform_indices = @transform_3, window_bounds = array<i64: 1, 72, 64>}]} {
    %cst = arith.constant 0.000000e+00 : f32
    %0 = vector.broadcast %cst : f32 to vector<72x64xf32>
    %c0 = arith.constant 0 : index
    %c0_0 = arith.constant 0 : index
    %c0_1 = arith.constant 0 : index
    %1 = vector.load %arg1[%c0, %c0_0, %c0_1] : memref<1x90x12xbf16, #tpu.memory_space<vmem>>, vector<1x72x12xbf16>
    %2 = vector.shape_cast %1 : vector<1x72x12xbf16> to vector<72x12xbf16>
    %c0_2 = arith.constant 0 : index
    %c0_3 = arith.constant 0 : index
    %c0_4 = arith.constant 0 : index
    %3 = vector.load %arg2[%c0_2, %c0_3, %c0_4] : memref<4x12x64xbf16, #tpu.memory_space<vmem>>, vector<1x12x64xbf16>
    %4 = vector.shape_cast %3 : vector<1x12x64xbf16> to vector<12x64xbf16>
    %cst_5 = arith.constant dense<0.000000e+00> : vector<72x64xf32>
    %5 = tpu.matmul %2, %4, %cst_5 {dimension_numbers = #tpu.dot_dimension_numbers<[1], [0], [0], [1], [0, 0, 1, 1], [], []>} : vector<72x12xbf16>, vector<12x64xbf16>, vector<72x64xf32> -> vector<72x64xf32>
    %6 = arith.addf %0, %5 : vector<72x64xf32>
    %c0_6 = arith.constant 0 : index
    %c1 = arith.constant 1 : index
    %c0_7 = arith.constant 0 : index
    %7 = vector.load %arg1[%c0_6, %c1, %c0_7] : memref<1x90x12xbf16, #tpu.memory_space<vmem>>, vector<1x72x12xbf16>
    %8 = vector.shape_cast %7 : vector<1x72x12xbf16> to vector<72x12xbf16>
    %c1_8 = arith.constant 1 : index
    %c0_9 = arith.constant 0 : index
    %c0_10 = arith.constant 0 : index
    %9 = vector.load %arg2[%c1_8, %c0_9, %c0_10] : memref<4x12x64xbf16, #tpu.memory_space<vmem>>, vector<1x12x64xbf16>
    %10 = vector.shape_cast %9 : vector<1x12x64xbf16> to vector<12x64xbf16>
    %cst_11 = arith.constant dense<0.000000e+00> : vector<72x64xf32>
    %11 = tpu.matmul %8, %10, %cst_11 {dimension_numbers = #tpu.dot_dimension_numbers<[1], [0], [0], [1], [0, 0, 1, 1], [], []>} : vector<72x12xbf16>, vector<12x64xbf16>, vector<72x64xf32> -> vector<72x64xf32>
    %12 = arith.addf %6, %11 : vector<72x64xf32>
    %c0_12 = arith.constant 0 : index
    %c9 = arith.constant 9 : index
    %c0_13 = arith.constant 0 : index
    %13 = vector.load %arg1[%c0_12, %c9, %c0_13] : memref<1x90x12xbf16, #tpu.memory_space<vmem>>, vector<1x72x12xbf16>
    %14 = vector.shape_cast %13 : vector<1x72x12xbf16> to vector<72x12xbf16>
    %c2 = arith.constant 2 : index
    %c0_14 = arith.constant 0 : index
    %c0_15 = arith.constant 0 : index
    %15 = vector.load %arg2[%c2, %c0_14, %c0_15] : memref<4x12x64xbf16, #tpu.memory_space<vmem>>, vector<1x12x64xbf16>
    %16 = vector.shape_cast %15 : vector<1x12x64xbf16> to vector<12x64xbf16>
    %cst_16 = arith.constant dense<0.000000e+00> : vector<72x64xf32>
    %17 = tpu.matmul %14, %16, %cst_16 {dimension_numbers = #tpu.dot_dimension_numbers<[1], [0], [0], [1], [0, 0, 1, 1], [], []>} : vector<72x12xbf16>, vector<12x64xbf16>, vector<72x64xf32> -> vector<72x64xf32>
    %18 = arith.addf %12, %17 : vector<72x64xf32>
    %c0_17 = arith.constant 0 : index
    %c10 = arith.constant 10 : index
    %c0_18 = arith.constant 0 : index
    %19 = vector.load %arg1[%c0_17, %c10, %c0_18] : memref<1x90x12xbf16, #tpu.memory_space<vmem>>, vector<1x72x12xbf16>
    %20 = vector.shape_cast %19 : vector<1x72x12xbf16> to vector<72x12xbf16>
    %c3 = arith.constant 3 : index
    %c0_19 = arith.constant 0 : index
    %c0_20 = arith.constant 0 : index
    %21 = vector.load %arg2[%c3, %c0_19, %c0_20] : memref<4x12x64xbf16, #tpu.memory_space<vmem>>, vector<1x12x64xbf16>
    %22 = vector.shape_cast %21 : vector<1x12x64xbf16> to vector<12x64xbf16>
    %cst_21 = arith.constant dense<0.000000e+00> : vector<72x64xf32>
    %23 = tpu.matmul %20, %22, %cst_21 {dimension_numbers = #tpu.dot_dimension_numbers<[1], [0], [0], [1], [0, 0, 1, 1], [], []>} : vector<72x12xbf16>, vector<12x64xbf16>, vector<72x64xf32> -> vector<72x64xf32>
    %24 = arith.addf %18, %23 : vector<72x64xf32>
    %c0_22 = arith.constant 0 : index
    %c0_23 = arith.constant 0 : index
    %25 = vector.load %arg3[%c0_22, %c0_23] : memref<1x64xf32, #tpu.memory_space<vmem>>, vector<1x64xf32>
    %26 = vector.broadcast %25 : vector<1x64xf32> to vector<72x64xf32>
    %27 = arith.addf %24, %26 : vector<72x64xf32>
    %28 = tpu.iota {dimensions = array<i32: 1>} : vector<72x64xi32>
    %c32_i32 = arith.constant 32 : i32
    %29 = vector.broadcast %c32_i32 : i32 to vector<72x64xi32>
    %30 = arith.cmpi slt, %28, %29 : vector<72x64xi32>
    %cst_24 = arith.constant 0.000000e+00 : f32
    %31 = vector.broadcast %cst_24 : f32 to vector<72x64xf32>
    %32 = arith.maximumf %27, %31 : vector<72x64xf32>
    %33 = arith.select %30, %32, %27 : vector<72x64xi1>, vector<72x64xf32>
    %34 = arith.truncf %33 : vector<72x64xf32> to vector<72x64xbf16>
    %c0_25 = arith.constant 0 : index
    %c0_26 = arith.constant 0 : index
    %c0_27 = arith.constant 0 : index
    %35 = vector.load %arg4[%c0_25, %c0_26, %c0_27] : memref<1x72x64xbf16, #tpu.memory_space<vmem>>, vector<1x72x64xbf16>
    %36 = vector.shape_cast %35 : vector<1x72x64xbf16> to vector<72x64xbf16>
    %37 = vector.shape_cast %34 : vector<72x64xbf16> to vector<1x72x64xbf16>
    tpu.vector_store %arg4[%c0_25, %c0_26, %c0_27], %37 {strides = array<i32>} : memref<1x72x64xbf16, #tpu.memory_space<vmem>>, vector<1x72x64xbf16>,
    return
  }
  func.func @transform_0(%arg0: i32) -> (i32, i32, i32) {
    %c0_i32 = arith.constant 0 : i32
    %c0_i32_0 = arith.constant 0 : i32
    %c0_i32_1 = arith.constant 0 : i32
    return %arg0, %c0_i32, %c0_i32_0 : i32, i32, i32
  }
  func.func @transform_1(%arg0: i32) -> (i32, i32, i32) {
    %c0_i32 = arith.constant 0 : i32
    %c0_i32_0 = arith.constant 0 : i32
    %c0_i32_1 = arith.constant 0 : i32
    %c0_i32_2 = arith.constant 0 : i32
    return %c0_i32, %c0_i32_0, %c0_i32_1 : i32, i32, i32
  }
  func.func @transform_2(%arg0: i32) -> (i32, i32) {
    %c0_i32 = arith.constant 0 : i32
    %c0_i32_0 = arith.constant 0 : i32
    %c0_i32_1 = arith.constant 0 : i32
    return %c0_i32, %c0_i32_0 : i32, i32
  }
  func.func @transform_3(%arg0: i32) -> (i32, i32, i32) {
    %c0_i32 = arith.constant 0 : i32
    %c0_i32_0 = arith.constant 0 : i32
    %c0_i32_1 = arith.constant 0 : i32
    return %arg0, %c0_i32, %c0_i32_0 : i32, i32, i32
  }
}

module attributes {stable_mosaic.version = 11 : i64} {
  func.func @_tap_conv_kernel(%arg0: i32, %arg1: memref<1x110x32xbf16, #tpu.memory_space<vmem>>, %arg2: memref<9x32x32xbf16, #tpu.memory_space<vmem>>, %arg3: memref<1x32xf32, #tpu.memory_space<vmem>>, %arg4: memref<1x80x32xbf16, #tpu.memory_space<vmem>>) attributes {dimension_semantics = [#tpu.dimension_semantics<parallel>], iteration_bounds = array<i64: 2>, scalar_prefetch = 0 : i64, scratch_operands = 0 : i64, tpu.core_type = #tpu.core_type<tc>, window_params = [{transform_indices = @transform_0, window_bounds = array<i64: 1, 110, 32>}, {pipeline_mode = #tpu.pipeline_mode<synchronous>, transform_indices = @transform_1, window_bounds = array<i64: 9, 32, 32>}, {pipeline_mode = #tpu.pipeline_mode<synchronous>, transform_indices = @transform_2, window_bounds = array<i64: 1, 32>}, {transform_indices = @transform_3, window_bounds = array<i64: 1, 80, 32>}]} {
    %cst = arith.constant 0.000000e+00 : f32
    %0 = vector.broadcast %cst : f32 to vector<80x32xf32>
    %c0 = arith.constant 0 : index
    %c0_0 = arith.constant 0 : index
    %c0_1 = arith.constant 0 : index
    %1 = vector.load %arg1[%c0, %c0_0, %c0_1] : memref<1x110x32xbf16, #tpu.memory_space<vmem>>, vector<1x80x32xbf16>
    %2 = vector.shape_cast %1 : vector<1x80x32xbf16> to vector<80x32xbf16>
    %c0_2 = arith.constant 0 : index
    %c0_3 = arith.constant 0 : index
    %c0_4 = arith.constant 0 : index
    %3 = vector.load %arg2[%c0_2, %c0_3, %c0_4] : memref<9x32x32xbf16, #tpu.memory_space<vmem>>, vector<1x32x32xbf16>
    %4 = vector.shape_cast %3 : vector<1x32x32xbf16> to vector<32x32xbf16>
    %cst_5 = arith.constant dense<0.000000e+00> : vector<80x32xf32>
    %5 = tpu.matmul %2, %4, %cst_5 {dimension_numbers = #tpu.dot_dimension_numbers<[1], [0], [0], [1], [0, 0, 1, 1], [], []>} : vector<80x32xbf16>, vector<32x32xbf16>, vector<80x32xf32> -> vector<80x32xf32>
    %6 = arith.addf %0, %5 : vector<80x32xf32>
    %c0_6 = arith.constant 0 : index
    %c1 = arith.constant 1 : index
    %c0_7 = arith.constant 0 : index
    %7 = vector.load %arg1[%c0_6, %c1, %c0_7] : memref<1x110x32xbf16, #tpu.memory_space<vmem>>, vector<1x80x32xbf16>
    %8 = vector.shape_cast %7 : vector<1x80x32xbf16> to vector<80x32xbf16>
    %c1_8 = arith.constant 1 : index
    %c0_9 = arith.constant 0 : index
    %c0_10 = arith.constant 0 : index
    %9 = vector.load %arg2[%c1_8, %c0_9, %c0_10] : memref<9x32x32xbf16, #tpu.memory_space<vmem>>, vector<1x32x32xbf16>
    %10 = vector.shape_cast %9 : vector<1x32x32xbf16> to vector<32x32xbf16>
    %cst_11 = arith.constant dense<0.000000e+00> : vector<80x32xf32>
    %11 = tpu.matmul %8, %10, %cst_11 {dimension_numbers = #tpu.dot_dimension_numbers<[1], [0], [0], [1], [0, 0, 1, 1], [], []>} : vector<80x32xbf16>, vector<32x32xbf16>, vector<80x32xf32> -> vector<80x32xf32>
    %12 = arith.addf %6, %11 : vector<80x32xf32>
    %c0_12 = arith.constant 0 : index
    %c2 = arith.constant 2 : index
    %c0_13 = arith.constant 0 : index
    %13 = vector.load %arg1[%c0_12, %c2, %c0_13] : memref<1x110x32xbf16, #tpu.memory_space<vmem>>, vector<1x80x32xbf16>
    %14 = vector.shape_cast %13 : vector<1x80x32xbf16> to vector<80x32xbf16>
    %c2_14 = arith.constant 2 : index
    %c0_15 = arith.constant 0 : index
    %c0_16 = arith.constant 0 : index
    %15 = vector.load %arg2[%c2_14, %c0_15, %c0_16] : memref<9x32x32xbf16, #tpu.memory_space<vmem>>, vector<1x32x32xbf16>
    %16 = vector.shape_cast %15 : vector<1x32x32xbf16> to vector<32x32xbf16>
    %cst_17 = arith.constant dense<0.000000e+00> : vector<80x32xf32>
    %17 = tpu.matmul %14, %16, %cst_17 {dimension_numbers = #tpu.dot_dimension_numbers<[1], [0], [0], [1], [0, 0, 1, 1], [], []>} : vector<80x32xbf16>, vector<32x32xbf16>, vector<80x32xf32> -> vector<80x32xf32>
    %18 = arith.addf %12, %17 : vector<80x32xf32>
    %c0_18 = arith.constant 0 : index
    %c10 = arith.constant 10 : index
    %c0_19 = arith.constant 0 : index
    %19 = vector.load %arg1[%c0_18, %c10, %c0_19] : memref<1x110x32xbf16, #tpu.memory_space<vmem>>, vector<1x80x32xbf16>
    %20 = vector.shape_cast %19 : vector<1x80x32xbf16> to vector<80x32xbf16>
    %c3 = arith.constant 3 : index
    %c0_20 = arith.constant 0 : index
    %c0_21 = arith.constant 0 : index
    %21 = vector.load %arg2[%c3, %c0_20, %c0_21] : memref<9x32x32xbf16, #tpu.memory_space<vmem>>, vector<1x32x32xbf16>
    %22 = vector.shape_cast %21 : vector<1x32x32xbf16> to vector<32x32xbf16>
    %cst_22 = arith.constant dense<0.000000e+00> : vector<80x32xf32>
    %23 = tpu.matmul %20, %22, %cst_22 {dimension_numbers = #tpu.dot_dimension_numbers<[1], [0], [0], [1], [0, 0, 1, 1], [], []>} : vector<80x32xbf16>, vector<32x32xbf16>, vector<80x32xf32> -> vector<80x32xf32>
    %24 = arith.addf %18, %23 : vector<80x32xf32>
    %c0_23 = arith.constant 0 : index
    %c11 = arith.constant 11 : index
    %c0_24 = arith.constant 0 : index
    %25 = vector.load %arg1[%c0_23, %c11, %c0_24] : memref<1x110x32xbf16, #tpu.memory_space<vmem>>, vector<1x80x32xbf16>
    %26 = vector.shape_cast %25 : vector<1x80x32xbf16> to vector<80x32xbf16>
    %c4 = arith.constant 4 : index
    %c0_25 = arith.constant 0 : index
    %c0_26 = arith.constant 0 : index
    %27 = vector.load %arg2[%c4, %c0_25, %c0_26] : memref<9x32x32xbf16, #tpu.memory_space<vmem>>, vector<1x32x32xbf16>
    %28 = vector.shape_cast %27 : vector<1x32x32xbf16> to vector<32x32xbf16>
    %cst_27 = arith.constant dense<0.000000e+00> : vector<80x32xf32>
    %29 = tpu.matmul %26, %28, %cst_27 {dimension_numbers = #tpu.dot_dimension_numbers<[1], [0], [0], [1], [0, 0, 1, 1], [], []>} : vector<80x32xbf16>, vector<32x32xbf16>, vector<80x32xf32> -> vector<80x32xf32>
    %30 = arith.addf %24, %29 : vector<80x32xf32>
    %c0_28 = arith.constant 0 : index
    %c12 = arith.constant 12 : index
    %c0_29 = arith.constant 0 : index
    %31 = vector.load %arg1[%c0_28, %c12, %c0_29] : memref<1x110x32xbf16, #tpu.memory_space<vmem>>, vector<1x80x32xbf16>
    %32 = vector.shape_cast %31 : vector<1x80x32xbf16> to vector<80x32xbf16>
    %c5 = arith.constant 5 : index
    %c0_30 = arith.constant 0 : index
    %c0_31 = arith.constant 0 : index
    %33 = vector.load %arg2[%c5, %c0_30, %c0_31] : memref<9x32x32xbf16, #tpu.memory_space<vmem>>, vector<1x32x32xbf16>
    %34 = vector.shape_cast %33 : vector<1x32x32xbf16> to vector<32x32xbf16>
    %cst_32 = arith.constant dense<0.000000e+00> : vector<80x32xf32>
    %35 = tpu.matmul %32, %34, %cst_32 {dimension_numbers = #tpu.dot_dimension_numbers<[1], [0], [0], [1], [0, 0, 1, 1], [], []>} : vector<80x32xbf16>, vector<32x32xbf16>, vector<80x32xf32> -> vector<80x32xf32>
    %36 = arith.addf %30, %35 : vector<80x32xf32>
    %c0_33 = arith.constant 0 : index
    %c20 = arith.constant 20 : index
    %c0_34 = arith.constant 0 : index
    %37 = vector.load %arg1[%c0_33, %c20, %c0_34] : memref<1x110x32xbf16, #tpu.memory_space<vmem>>, vector<1x80x32xbf16>
    %38 = vector.shape_cast %37 : vector<1x80x32xbf16> to vector<80x32xbf16>
    %c6 = arith.constant 6 : index
    %c0_35 = arith.constant 0 : index
    %c0_36 = arith.constant 0 : index
    %39 = vector.load %arg2[%c6, %c0_35, %c0_36] : memref<9x32x32xbf16, #tpu.memory_space<vmem>>, vector<1x32x32xbf16>
    %40 = vector.shape_cast %39 : vector<1x32x32xbf16> to vector<32x32xbf16>
    %cst_37 = arith.constant dense<0.000000e+00> : vector<80x32xf32>
    %41 = tpu.matmul %38, %40, %cst_37 {dimension_numbers = #tpu.dot_dimension_numbers<[1], [0], [0], [1], [0, 0, 1, 1], [], []>} : vector<80x32xbf16>, vector<32x32xbf16>, vector<80x32xf32> -> vector<80x32xf32>
    %42 = arith.addf %36, %41 : vector<80x32xf32>
    %c0_38 = arith.constant 0 : index
    %c21 = arith.constant 21 : index
    %c0_39 = arith.constant 0 : index
    %43 = vector.load %arg1[%c0_38, %c21, %c0_39] : memref<1x110x32xbf16, #tpu.memory_space<vmem>>, vector<1x80x32xbf16>
    %44 = vector.shape_cast %43 : vector<1x80x32xbf16> to vector<80x32xbf16>
    %c7 = arith.constant 7 : index
    %c0_40 = arith.constant 0 : index
    %c0_41 = arith.constant 0 : index
    %45 = vector.load %arg2[%c7, %c0_40, %c0_41] : memref<9x32x32xbf16, #tpu.memory_space<vmem>>, vector<1x32x32xbf16>
    %46 = vector.shape_cast %45 : vector<1x32x32xbf16> to vector<32x32xbf16>
    %cst_42 = arith.constant dense<0.000000e+00> : vector<80x32xf32>
    %47 = tpu.matmul %44, %46, %cst_42 {dimension_numbers = #tpu.dot_dimension_numbers<[1], [0], [0], [1], [0, 0, 1, 1], [], []>} : vector<80x32xbf16>, vector<32x32xbf16>, vector<80x32xf32> -> vector<80x32xf32>
    %48 = arith.addf %42, %47 : vector<80x32xf32>
    %c0_43 = arith.constant 0 : index
    %c22 = arith.constant 22 : index
    %c0_44 = arith.constant 0 : index
    %49 = vector.load %arg1[%c0_43, %c22, %c0_44] : memref<1x110x32xbf16, #tpu.memory_space<vmem>>, vector<1x80x32xbf16>
    %50 = vector.shape_cast %49 : vector<1x80x32xbf16> to vector<80x32xbf16>
    %c8 = arith.constant 8 : index
    %c0_45 = arith.constant 0 : index
    %c0_46 = arith.constant 0 : index
    %51 = vector.load %arg2[%c8, %c0_45, %c0_46] : memref<9x32x32xbf16, #tpu.memory_space<vmem>>, vector<1x32x32xbf16>
    %52 = vector.shape_cast %51 : vector<1x32x32xbf16> to vector<32x32xbf16>
    %cst_47 = arith.constant dense<0.000000e+00> : vector<80x32xf32>
    %53 = tpu.matmul %50, %52, %cst_47 {dimension_numbers = #tpu.dot_dimension_numbers<[1], [0], [0], [1], [0, 0, 1, 1], [], []>} : vector<80x32xbf16>, vector<32x32xbf16>, vector<80x32xf32> -> vector<80x32xf32>
    %54 = arith.addf %48, %53 : vector<80x32xf32>
    %c0_48 = arith.constant 0 : index
    %c0_49 = arith.constant 0 : index
    %55 = vector.load %arg3[%c0_48, %c0_49] : memref<1x32xf32, #tpu.memory_space<vmem>>, vector<1x32xf32>
    %56 = vector.broadcast %55 : vector<1x32xf32> to vector<80x32xf32>
    %57 = arith.addf %54, %56 : vector<80x32xf32>
    %cst_50 = arith.constant 0.000000e+00 : f32
    %58 = vector.broadcast %cst_50 : f32 to vector<80x32xf32>
    %59 = arith.maximumf %57, %58 : vector<80x32xf32>
    %60 = arith.truncf %59 : vector<80x32xf32> to vector<80x32xbf16>
    %c0_51 = arith.constant 0 : index
    %c0_52 = arith.constant 0 : index
    %c0_53 = arith.constant 0 : index
    %61 = vector.load %arg4[%c0_51, %c0_52, %c0_53] : memref<1x80x32xbf16, #tpu.memory_space<vmem>>, vector<1x80x32xbf16>
    %62 = vector.shape_cast %61 : vector<1x80x32xbf16> to vector<80x32xbf16>
    %63 = vector.shape_cast %60 : vector<80x32xbf16> to vector<1x80x32xbf16>
    tpu.vector_store %arg4[%c0_51, %c0_52, %c0_53], %63 {strides = array<i32>} : memref<1x80x32xbf16, #tpu.memory_space<vmem>>, vector<1x80x32xbf16>,
    return
  }
  func.func @transform_0(%arg0: i32) -> (i32, i32, i32) {
    %c0_i32 = arith.constant 0 : i32
    %c0_i32_0 = arith.constant 0 : i32
    %c0_i32_1 = arith.constant 0 : i32
    return %arg0, %c0_i32, %c0_i32_0 : i32, i32, i32
  }
  func.func @transform_1(%arg0: i32) -> (i32, i32, i32) {
    %c0_i32 = arith.constant 0 : i32
    %c0_i32_0 = arith.constant 0 : i32
    %c0_i32_1 = arith.constant 0 : i32
    %c0_i32_2 = arith.constant 0 : i32
    return %c0_i32, %c0_i32_0, %c0_i32_1 : i32, i32, i32
  }
  func.func @transform_2(%arg0: i32) -> (i32, i32) {
    %c0_i32 = arith.constant 0 : i32
    %c0_i32_0 = arith.constant 0 : i32
    %c0_i32_1 = arith.constant 0 : i32
    return %c0_i32, %c0_i32_0 : i32, i32
  }
  func.func @transform_3(%arg0: i32) -> (i32, i32, i32) {
    %c0_i32 = arith.constant 0 : i32
    %c0_i32_0 = arith.constant 0 : i32
    %c0_i32_1 = arith.constant 0 : i32
    return %arg0, %c0_i32, %c0_i32_0 : i32, i32, i32
  }
}

module attributes {stable_mosaic.version = 11 : i64} {
  func.func @_tap_conv_res_kernel(%arg0: i32, %arg1: memref<1x110x32xbf16, #tpu.memory_space<vmem>>, %arg2: memref<9x32x32xbf16, #tpu.memory_space<vmem>>, %arg3: memref<1x32xf32, #tpu.memory_space<vmem>>, %arg4: memref<1x80x32xbf16, #tpu.memory_space<vmem>>, %arg5: memref<1x80x32xbf16, #tpu.memory_space<vmem>>) attributes {dimension_semantics = [#tpu.dimension_semantics<parallel>], iteration_bounds = array<i64: 2>, scalar_prefetch = 0 : i64, scratch_operands = 0 : i64, tpu.core_type = #tpu.core_type<tc>, window_params = [{transform_indices = @transform_0, window_bounds = array<i64: 1, 110, 32>}, {pipeline_mode = #tpu.pipeline_mode<synchronous>, transform_indices = @transform_1, window_bounds = array<i64: 9, 32, 32>}, {pipeline_mode = #tpu.pipeline_mode<synchronous>, transform_indices = @transform_2, window_bounds = array<i64: 1, 32>}, {transform_indices = @transform_3, window_bounds = array<i64: 1, 80, 32>}, {transform_indices = @transform_4, window_bounds = array<i64: 1, 80, 32>}]} {
    %cst = arith.constant 0.000000e+00 : f32
    %0 = vector.broadcast %cst : f32 to vector<80x32xf32>
    %c0 = arith.constant 0 : index
    %c0_0 = arith.constant 0 : index
    %c0_1 = arith.constant 0 : index
    %1 = vector.load %arg1[%c0, %c0_0, %c0_1] : memref<1x110x32xbf16, #tpu.memory_space<vmem>>, vector<1x80x32xbf16>
    %2 = vector.shape_cast %1 : vector<1x80x32xbf16> to vector<80x32xbf16>
    %c0_2 = arith.constant 0 : index
    %c0_3 = arith.constant 0 : index
    %c0_4 = arith.constant 0 : index
    %3 = vector.load %arg2[%c0_2, %c0_3, %c0_4] : memref<9x32x32xbf16, #tpu.memory_space<vmem>>, vector<1x32x32xbf16>
    %4 = vector.shape_cast %3 : vector<1x32x32xbf16> to vector<32x32xbf16>
    %cst_5 = arith.constant dense<0.000000e+00> : vector<80x32xf32>
    %5 = tpu.matmul %2, %4, %cst_5 {dimension_numbers = #tpu.dot_dimension_numbers<[1], [0], [0], [1], [0, 0, 1, 1], [], []>} : vector<80x32xbf16>, vector<32x32xbf16>, vector<80x32xf32> -> vector<80x32xf32>
    %6 = arith.addf %0, %5 : vector<80x32xf32>
    %c0_6 = arith.constant 0 : index
    %c1 = arith.constant 1 : index
    %c0_7 = arith.constant 0 : index
    %7 = vector.load %arg1[%c0_6, %c1, %c0_7] : memref<1x110x32xbf16, #tpu.memory_space<vmem>>, vector<1x80x32xbf16>
    %8 = vector.shape_cast %7 : vector<1x80x32xbf16> to vector<80x32xbf16>
    %c1_8 = arith.constant 1 : index
    %c0_9 = arith.constant 0 : index
    %c0_10 = arith.constant 0 : index
    %9 = vector.load %arg2[%c1_8, %c0_9, %c0_10] : memref<9x32x32xbf16, #tpu.memory_space<vmem>>, vector<1x32x32xbf16>
    %10 = vector.shape_cast %9 : vector<1x32x32xbf16> to vector<32x32xbf16>
    %cst_11 = arith.constant dense<0.000000e+00> : vector<80x32xf32>
    %11 = tpu.matmul %8, %10, %cst_11 {dimension_numbers = #tpu.dot_dimension_numbers<[1], [0], [0], [1], [0, 0, 1, 1], [], []>} : vector<80x32xbf16>, vector<32x32xbf16>, vector<80x32xf32> -> vector<80x32xf32>
    %12 = arith.addf %6, %11 : vector<80x32xf32>
    %c0_12 = arith.constant 0 : index
    %c2 = arith.constant 2 : index
    %c0_13 = arith.constant 0 : index
    %13 = vector.load %arg1[%c0_12, %c2, %c0_13] : memref<1x110x32xbf16, #tpu.memory_space<vmem>>, vector<1x80x32xbf16>
    %14 = vector.shape_cast %13 : vector<1x80x32xbf16> to vector<80x32xbf16>
    %c2_14 = arith.constant 2 : index
    %c0_15 = arith.constant 0 : index
    %c0_16 = arith.constant 0 : index
    %15 = vector.load %arg2[%c2_14, %c0_15, %c0_16] : memref<9x32x32xbf16, #tpu.memory_space<vmem>>, vector<1x32x32xbf16>
    %16 = vector.shape_cast %15 : vector<1x32x32xbf16> to vector<32x32xbf16>
    %cst_17 = arith.constant dense<0.000000e+00> : vector<80x32xf32>
    %17 = tpu.matmul %14, %16, %cst_17 {dimension_numbers = #tpu.dot_dimension_numbers<[1], [0], [0], [1], [0, 0, 1, 1], [], []>} : vector<80x32xbf16>, vector<32x32xbf16>, vector<80x32xf32> -> vector<80x32xf32>
    %18 = arith.addf %12, %17 : vector<80x32xf32>
    %c0_18 = arith.constant 0 : index
    %c10 = arith.constant 10 : index
    %c0_19 = arith.constant 0 : index
    %19 = vector.load %arg1[%c0_18, %c10, %c0_19] : memref<1x110x32xbf16, #tpu.memory_space<vmem>>, vector<1x80x32xbf16>
    %20 = vector.shape_cast %19 : vector<1x80x32xbf16> to vector<80x32xbf16>
    %c3 = arith.constant 3 : index
    %c0_20 = arith.constant 0 : index
    %c0_21 = arith.constant 0 : index
    %21 = vector.load %arg2[%c3, %c0_20, %c0_21] : memref<9x32x32xbf16, #tpu.memory_space<vmem>>, vector<1x32x32xbf16>
    %22 = vector.shape_cast %21 : vector<1x32x32xbf16> to vector<32x32xbf16>
    %cst_22 = arith.constant dense<0.000000e+00> : vector<80x32xf32>
    %23 = tpu.matmul %20, %22, %cst_22 {dimension_numbers = #tpu.dot_dimension_numbers<[1], [0], [0], [1], [0, 0, 1, 1], [], []>} : vector<80x32xbf16>, vector<32x32xbf16>, vector<80x32xf32> -> vector<80x32xf32>
    %24 = arith.addf %18, %23 : vector<80x32xf32>
    %c0_23 = arith.constant 0 : index
    %c11 = arith.constant 11 : index
    %c0_24 = arith.constant 0 : index
    %25 = vector.load %arg1[%c0_23, %c11, %c0_24] : memref<1x110x32xbf16, #tpu.memory_space<vmem>>, vector<1x80x32xbf16>
    %26 = vector.shape_cast %25 : vector<1x80x32xbf16> to vector<80x32xbf16>
    %c4 = arith.constant 4 : index
    %c0_25 = arith.constant 0 : index
    %c0_26 = arith.constant 0 : index
    %27 = vector.load %arg2[%c4, %c0_25, %c0_26] : memref<9x32x32xbf16, #tpu.memory_space<vmem>>, vector<1x32x32xbf16>
    %28 = vector.shape_cast %27 : vector<1x32x32xbf16> to vector<32x32xbf16>
    %cst_27 = arith.constant dense<0.000000e+00> : vector<80x32xf32>
    %29 = tpu.matmul %26, %28, %cst_27 {dimension_numbers = #tpu.dot_dimension_numbers<[1], [0], [0], [1], [0, 0, 1, 1], [], []>} : vector<80x32xbf16>, vector<32x32xbf16>, vector<80x32xf32> -> vector<80x32xf32>
    %30 = arith.addf %24, %29 : vector<80x32xf32>
    %c0_28 = arith.constant 0 : index
    %c12 = arith.constant 12 : index
    %c0_29 = arith.constant 0 : index
    %31 = vector.load %arg1[%c0_28, %c12, %c0_29] : memref<1x110x32xbf16, #tpu.memory_space<vmem>>, vector<1x80x32xbf16>
    %32 = vector.shape_cast %31 : vector<1x80x32xbf16> to vector<80x32xbf16>
    %c5 = arith.constant 5 : index
    %c0_30 = arith.constant 0 : index
    %c0_31 = arith.constant 0 : index
    %33 = vector.load %arg2[%c5, %c0_30, %c0_31] : memref<9x32x32xbf16, #tpu.memory_space<vmem>>, vector<1x32x32xbf16>
    %34 = vector.shape_cast %33 : vector<1x32x32xbf16> to vector<32x32xbf16>
    %cst_32 = arith.constant dense<0.000000e+00> : vector<80x32xf32>
    %35 = tpu.matmul %32, %34, %cst_32 {dimension_numbers = #tpu.dot_dimension_numbers<[1], [0], [0], [1], [0, 0, 1, 1], [], []>} : vector<80x32xbf16>, vector<32x32xbf16>, vector<80x32xf32> -> vector<80x32xf32>
    %36 = arith.addf %30, %35 : vector<80x32xf32>
    %c0_33 = arith.constant 0 : index
    %c20 = arith.constant 20 : index
    %c0_34 = arith.constant 0 : index
    %37 = vector.load %arg1[%c0_33, %c20, %c0_34] : memref<1x110x32xbf16, #tpu.memory_space<vmem>>, vector<1x80x32xbf16>
    %38 = vector.shape_cast %37 : vector<1x80x32xbf16> to vector<80x32xbf16>
    %c6 = arith.constant 6 : index
    %c0_35 = arith.constant 0 : index
    %c0_36 = arith.constant 0 : index
    %39 = vector.load %arg2[%c6, %c0_35, %c0_36] : memref<9x32x32xbf16, #tpu.memory_space<vmem>>, vector<1x32x32xbf16>
    %40 = vector.shape_cast %39 : vector<1x32x32xbf16> to vector<32x32xbf16>
    %cst_37 = arith.constant dense<0.000000e+00> : vector<80x32xf32>
    %41 = tpu.matmul %38, %40, %cst_37 {dimension_numbers = #tpu.dot_dimension_numbers<[1], [0], [0], [1], [0, 0, 1, 1], [], []>} : vector<80x32xbf16>, vector<32x32xbf16>, vector<80x32xf32> -> vector<80x32xf32>
    %42 = arith.addf %36, %41 : vector<80x32xf32>
    %c0_38 = arith.constant 0 : index
    %c21 = arith.constant 21 : index
    %c0_39 = arith.constant 0 : index
    %43 = vector.load %arg1[%c0_38, %c21, %c0_39] : memref<1x110x32xbf16, #tpu.memory_space<vmem>>, vector<1x80x32xbf16>
    %44 = vector.shape_cast %43 : vector<1x80x32xbf16> to vector<80x32xbf16>
    %c7 = arith.constant 7 : index
    %c0_40 = arith.constant 0 : index
    %c0_41 = arith.constant 0 : index
    %45 = vector.load %arg2[%c7, %c0_40, %c0_41] : memref<9x32x32xbf16, #tpu.memory_space<vmem>>, vector<1x32x32xbf16>
    %46 = vector.shape_cast %45 : vector<1x32x32xbf16> to vector<32x32xbf16>
    %cst_42 = arith.constant dense<0.000000e+00> : vector<80x32xf32>
    %47 = tpu.matmul %44, %46, %cst_42 {dimension_numbers = #tpu.dot_dimension_numbers<[1], [0], [0], [1], [0, 0, 1, 1], [], []>} : vector<80x32xbf16>, vector<32x32xbf16>, vector<80x32xf32> -> vector<80x32xf32>
    %48 = arith.addf %42, %47 : vector<80x32xf32>
    %c0_43 = arith.constant 0 : index
    %c22 = arith.constant 22 : index
    %c0_44 = arith.constant 0 : index
    %49 = vector.load %arg1[%c0_43, %c22, %c0_44] : memref<1x110x32xbf16, #tpu.memory_space<vmem>>, vector<1x80x32xbf16>
    %50 = vector.shape_cast %49 : vector<1x80x32xbf16> to vector<80x32xbf16>
    %c8 = arith.constant 8 : index
    %c0_45 = arith.constant 0 : index
    %c0_46 = arith.constant 0 : index
    %51 = vector.load %arg2[%c8, %c0_45, %c0_46] : memref<9x32x32xbf16, #tpu.memory_space<vmem>>, vector<1x32x32xbf16>
    %52 = vector.shape_cast %51 : vector<1x32x32xbf16> to vector<32x32xbf16>
    %cst_47 = arith.constant dense<0.000000e+00> : vector<80x32xf32>
    %53 = tpu.matmul %50, %52, %cst_47 {dimension_numbers = #tpu.dot_dimension_numbers<[1], [0], [0], [1], [0, 0, 1, 1], [], []>} : vector<80x32xbf16>, vector<32x32xbf16>, vector<80x32xf32> -> vector<80x32xf32>
    %54 = arith.addf %48, %53 : vector<80x32xf32>
    %c0_48 = arith.constant 0 : index
    %c0_49 = arith.constant 0 : index
    %55 = vector.load %arg3[%c0_48, %c0_49] : memref<1x32xf32, #tpu.memory_space<vmem>>, vector<1x32xf32>
    %56 = vector.broadcast %55 : vector<1x32xf32> to vector<80x32xf32>
    %57 = arith.addf %54, %56 : vector<80x32xf32>
    %cst_50 = arith.constant 0.000000e+00 : f32
    %58 = vector.broadcast %cst_50 : f32 to vector<80x32xf32>
    %59 = arith.maximumf %57, %58 : vector<80x32xf32>
    %c0_51 = arith.constant 0 : index
    %c0_52 = arith.constant 0 : index
    %c0_53 = arith.constant 0 : index
    %60 = vector.load %arg4[%c0_51, %c0_52, %c0_53] : memref<1x80x32xbf16, #tpu.memory_space<vmem>>, vector<1x80x32xbf16>
    %61 = vector.shape_cast %60 : vector<1x80x32xbf16> to vector<80x32xbf16>
    %62 = arith.extf %61 : vector<80x32xbf16> to vector<80x32xf32>
    %63 = arith.addf %59, %62 : vector<80x32xf32>
    %64 = arith.truncf %63 : vector<80x32xf32> to vector<80x32xbf16>
    %c0_54 = arith.constant 0 : index
    %c0_55 = arith.constant 0 : index
    %c0_56 = arith.constant 0 : index
    %65 = vector.load %arg5[%c0_54, %c0_55, %c0_56] : memref<1x80x32xbf16, #tpu.memory_space<vmem>>, vector<1x80x32xbf16>
    %66 = vector.shape_cast %65 : vector<1x80x32xbf16> to vector<80x32xbf16>
    %67 = vector.shape_cast %64 : vector<80x32xbf16> to vector<1x80x32xbf16>
    tpu.vector_store %arg5[%c0_54, %c0_55, %c0_56], %67 {strides = array<i32>} : memref<1x80x32xbf16, #tpu.memory_space<vmem>>, vector<1x80x32xbf16>,
    return
  }
  func.func @transform_0(%arg0: i32) -> (i32, i32, i32) {
    %c0_i32 = arith.constant 0 : i32
    %c0_i32_0 = arith.constant 0 : i32
    %c0_i32_1 = arith.constant 0 : i32
    return %arg0, %c0_i32, %c0_i32_0 : i32, i32, i32
  }
  func.func @transform_1(%arg0: i32) -> (i32, i32, i32) {
    %c0_i32 = arith.constant 0 : i32
    %c0_i32_0 = arith.constant 0 : i32
    %c0_i32_1 = arith.constant 0 : i32
    %c0_i32_2 = arith.constant 0 : i32
    return %c0_i32, %c0_i32_0, %c0_i32_1 : i32, i32, i32
  }
  func.func @transform_2(%arg0: i32) -> (i32, i32) {
    %c0_i32 = arith.constant 0 : i32
    %c0_i32_0 = arith.constant 0 : i32
    %c0_i32_1 = arith.constant 0 : i32
    return %c0_i32, %c0_i32_0 : i32, i32
  }
  func.func @transform_3(%arg0: i32) -> (i32, i32, i32) {
    %c0_i32 = arith.constant 0 : i32
    %c0_i32_0 = arith.constant 0 : i32
    %c0_i32_1 = arith.constant 0 : i32
    return %arg0, %c0_i32, %c0_i32_0 : i32, i32, i32
  }
  func.func @transform_4(%arg0: i32) -> (i32, i32, i32) {
    %c0_i32 = arith.constant 0 : i32
    %c0_i32_0 = arith.constant 0 : i32
    %c0_i32_1 = arith.constant 0 : i32
    return %arg0, %c0_i32, %c0_i32_0 : i32, i32, i32
  }
}

</mosaic_0001>

<llo_original>
// kernel: conv_block.3
$region0: #{conv_block.3}
  #allocation0 [shape = 'u32[]', space=smem, size = 0x4, offset = 0x4, fixed_abs, tag = 'smem constant byte address 0x4 - core index']
  #allocation1 [shape = 'u32[144,128]{1,0:T(1,128)}', space=vmem, size = 0x12000, scoped, tag = 'internal scratch']
  %s0 = inlined_call_operand.vmem [shape: bf16[2,90,12], index: 0, kind: input, shape index: {}]
  %s1 = inlined_call_operand.vmem [shape: bf16[4,12,64], index: 1, kind: input, shape index: {}]
  %s2 = inlined_call_operand.vmem [shape: f32[1,64], index: 2, kind: input, shape index: {}]
  %s3 = inlined_call_operand.vmem [shape: bf16[2,72,64], index: 3, kind: output, shape index: {}]
  %s4 = sld [smem:[#allocation0]]
  $region45: #{conv_block.3} parent=0
    _
  %s6 = ssub.s32 1, %s4
  %s7 = scalar_select 0, %s6, %s4
  loop: start=0, step=1, limit=4
  $region2: #{conv_block.3} parent=0 // loop_pre_header
    _
  $region3: #{conv_block.3} parent=0 // loop_header
    %s9 = sphi 0, %s13
    %p10 = scmp.ge.s32.totalorder %s9, 4
    %s19 = sphi 0, %s21
    %s22 = sphi 0, %s19
    %s23 = sphi 0, %s22
    %s39 = sphi 0, %s23
    %s43 = sphi 0, %s43
    %s45 = sphi 0, %s43
    %s46 = sphi 0, %s45
    %s60 = sphi 0, %s46
    %s64 = sphi 0, %s64
    %s66 = sphi 0, %s64
    %s67 = sphi 0, %s66
    %s81 = sphi 0, %s67
    %s87 = sphi 0, %s89
    %s90 = sphi 0, %s87
    %s91 = sphi 0, %s90
    %s107 = sphi 0, %s91
  $region4: #{conv_block.3} parent=0 // loop_header_branch
    %12 = sbr.rel (%p10) target = $region8
  $region5: #{conv_block.3} parent=0 // loop_body
    %s14 = ssub.s32 %s9, 1
    %s15 = ssub.s32 %s9, 2
    %s16 = sadd.s32 %s9, 1
    %s17 = ssub.s32 %s9, %s16
    %p18 = scmp.eq.s32.totalorder %s17, 0
    %s20 = sadd.s32 %s19, 1
    %s21 = scalar_select %p18, %s19, %s20
    %p24 = pneg %p18
    %p25 = scmp.eq.s32.totalorder %s9, 1
    %p26 = por %p24, %p25
    %p27 = scmp.ne.s32.totalorder %s19, %s22
    %p28 = scmp.eq.s32.totalorder %s9, 0
    %p29 = por %p27, %p28
    %p30 = scmp.ne.s32.totalorder %s19, %s22
    %p31 = scmp.eq.s32.totalorder %s14, 1
    %p32 = por %p30, %p31
    %p33 = scmp.ne.s32.totalorder %s22, %s23
    %p34 = scmp.eq.s32.totalorder %s14, 0
    %p35 = por %p33, %p34
    %p36 = scmp.ne.s32.totalorder %s22, %s23
    %p37 = scmp.eq.s32.totalorder %s15, 1
    %p38 = por %p36, %p37
    %p40 = scmp.ne.s32.totalorder %s23, %s39
    %p41 = scmp.eq.s32.totalorder %s15, 0
    %p42 = por %p40, %p41
    %s44 = sadd.s32 %s43, 1
    %p47 = scmp.eq.s32.totalorder %s9, 1
    %p48 = scmp.ne.s32.totalorder %s43, %s45
    %p49 = scmp.eq.s32.totalorder %s9, 0
    %p50 = por %p48, %p49
    %p51 = scmp.ne.s32.totalorder %s43, %s45
    %p52 = scmp.eq.s32.totalorder %s14, 1
    %p53 = por %p51, %p52
    %p54 = scmp.ne.s32.totalorder %s45, %s46
    %p55 = scmp.eq.s32.totalorder %s14, 0
    %p56 = por %p54, %p55
    %p57 = scmp.ne.s32.totalorder %s45, %s46
    %p58 = scmp.eq.s32.totalorder %s15, 1
    %p59 = por %p57, %p58
    %p61 = scmp.ne.s32.totalorder %s46, %s60
    %p62 = scmp.eq.s32.totalorder %s15, 0
    %p63 = por %p61, %p62
    %s65 = sadd.s32 %s64, 1
    %p68 = scmp.eq.s32.totalorder %s9, 1
    %p69 = scmp.ne.s32.totalorder %s64, %s66
    %p70 = scmp.eq.s32.totalorder %s9, 0
    %p71 = por %p69, %p70
    %p72 = scmp.ne.s32.totalorder %s64, %s66
    %p73 = scmp.eq.s32.totalorder %s14, 1
    %p74 = por %p72, %p73
    %p75 = scmp.ne.s32.totalorder %s66, %s67
    %p76 = scmp.eq.s32.totalorder %s14, 0
    %p77 = por %p75, %p76
    %p78 = scmp.ne.s32.totalorder %s66, %s67
    %p79 = scmp.eq.s32.totalorder %s15, 1
    %p80 = por %p78, %p79
    %p82 = scmp.ne.s32.totalorder %s67, %s81
    %p83 = scmp.eq.s32.totalorder %s15, 0
    %p84 = por %p82, %p83
    %s85 = ssub.s32 %s9, %s16
    %p86 = scmp.eq.s32.totalorder %s85, 0
    %s88 = sadd.s32 %s87, 1
    %s89 = scalar_select %p86, %s87, %s88
    %p92 = pneg %p86
    %p93 = scmp.eq.s32.totalorder %s9, 1
    %p94 = por %p92, %p93
    %p95 = scmp.ne.s32.totalorder %s87, %s90
    %p96 = scmp.eq.s32.totalorder %s9, 0
    %p97 = por %p95, %p96
    %p98 = scmp.ne.s32.totalorder %s87, %s90
    %p99 = scmp.eq.s32.totalorder %s14, 1
    %p100 = por %p98, %p99
    %p101 = scmp.ne.s32.totalorder %s90, %s91
    %p102 = scmp.eq.s32.totalorder %s14, 0
    %p103 = por %p101, %p102
    %p104 = scmp.ne.s32.totalorder %s90, %s91
    %p105 = scmp.eq.s32.totalorder %s15, 1
    %p106 = por %p104, %p105
    %p108 = scmp.ne.s32.totalorder %s91, %s107
    %p109 = scmp.eq.s32.totalorder %s15, 0
    %p110 = por %p108, %p109
    %p111 = scmp.le.s32.totalorder 1, %s9
    %p112 = scmp.lt.s32.totalorder %s9, 3
    %p113 = pnand %p111, %p112
    %p114 = pneg %p113
    // Predicated region
    $region9: #{conv_block.3} parent=5 // pred_check
      _
    $region10: #{conv_block.3} parent=5 // pred_check_branch
      %116 = sbr.rel (%p113) target = $region12
    $region11: #{conv_block.3} parent=5 // pred_region
      %s117 = ssub.s32 %s9, 1
      // Predicated region
      $region13: #{conv_block.3} parent=11 // pred_check
        %p118 = pneg %p56
      $region14: #{conv_block.3} parent=11 // pred_check_branch
        %120 = sbr.rel (%p118) target = $region16
      $region15: #{conv_block.3} parent=11 // pred_region
        _
      $region16: #{conv_block.3} parent=11 // pred_fallthru
        _
      // Predicated region
      $region17: #{conv_block.3} parent=11 // pred_check
        %p121 = pneg %p77
      $region18: #{conv_block.3} parent=11 // pred_check_branch
        %123 = sbr.rel (%p121) target = $region20
      $region19: #{conv_block.3} parent=11 // pred_region
        _
      $region20: #{conv_block.3} parent=11 // pred_fallthru
        _
    $region12: #{conv_block.3} parent=5 // pred_fallthru
      _
    %p124 = scmp.lt.s32.totalorder %s9, 2
    // Predicated region
    $region21: #{conv_block.3} parent=5 // pred_check
      %p125 = pneg %p124
    $region22: #{conv_block.3} parent=5 // pred_check_branch
      %127 = sbr.rel (%p125) target = $region24
    $region23: #{conv_block.3} parent=5 // pred_region
      // Predicated region
      $region25: #{conv_block.3} parent=23 // pred_check
        %p128 = pneg %p29
      $region26: #{conv_block.3} parent=23 // pred_check_branch
        %130 = sbr.rel (%p128) target = $region28
      $region27: #{conv_block.3} parent=23 // pred_region
        %p131 = scmp.lt.s32.totalorder %s9, 1
        %s132 = scalar_select %p131, %s9, 1
        %s133 = smul.addr %s132, 12
        %s134 = smul.addr %s133, 4
        %s135 = scalar_lea.vmem %s0, %s134
      $region28: #{conv_block.3} parent=23 // pred_fallthru
        _
    $region24: #{conv_block.3} parent=5 // pred_fallthru
      _
    %p136 = scmp.le.s32.totalorder 1, %s9
    %p137 = scmp.lt.s32.totalorder %s9, 3
    %p138 = pnand %p136, %p137
    %p139 = pneg %p138
    // Predicated region
    $region29: #{conv_block.3} parent=5 // pred_check
      _
    $region30: #{conv_block.3} parent=5 // pred_check_branch
      %141 = sbr.rel (%p138) target = $region32
    $region31: #{conv_block.3} parent=5 // pred_region
      %s142 = ssub.s32 %s9, 1
      %p143 = scmp.lt.s32.totalorder %s14, 1
      %s144 = scalar_select %p143, %s14, 1
      %s145 = smul.addr %s144, 12
      %s146 = smul.addr %s145, 4
      %s147 = scalar_lea.vmem %s0, %s146
      %p148 = pneg %p35
      %p149 = pneg %p32
      %p150 = pneg %p56
      %p151 = pneg %p53
      %p152 = pneg %p77
      %p153 = pneg %p74
      %p154 = pneg %p103
      %p155 = pneg %p100
      %p156 = scmp.lt.s32.totalorder %s14, 1
      %s157 = scalar_select %p156, %s14, 1
      %s158 = smul.addr %s157, 9
      %s159 = smul.addr %s158, 4
      %s160 = scalar_lea.vmem %s3, %s159
      %p161 = scmp.lt.s32.totalorder %s14, 1
      %s162 = scalar_select %p161, %s14, 1
      %s163 = smul.addr %s162, 12
      %s164 = smul.addr %s163, 4
      %s165 = scalar_lea.vmem %s0, %s164
      %p166 = scmp.lt.s32.totalorder %s14, 1
      %s167 = scalar_select %p166, %s14, 1
      %s168 = smul.addr %s167, 9
      %s169 = smul.addr %s168, 4
      %s170 = scalar_lea.vmem %s3, %s169
      %v172 = vld [vmem:[%s165] sm:$0xf]
      %v173 = vld [vmem:[%s165 + $0x4] sm:$0xf]
      %v174 = vld [vmem:[%s165 + $0x8] sm:$0xf]
      %v175 = vld [vmem:[%s165 + $0xc] sm:$0xf]
      %v176 = vld [vmem:[%s165 + $0x10] sm:$0xf]
      %v177 = vld [vmem:[%s165 + $0x14] sm:$0xf]
      %v178 = vld [vmem:[%s165 + $0x18] sm:$0xf]
      %v179 = vld [vmem:[%s165 + $0x1c] sm:$0xf]
      %v180 = vld [vmem:[%s165 + $0x20] sm:$0xf]
      %v181 = vld [vmem:[%s1] sm:$0xf]
      %v182 = vld [vmem:[%s1 + $0x4] sm:$0x3]
      %v183 = vld [vmem:[%s165 + $0x24] sm:$0x1]
      %s184 = scalar_lea.vmem %s1, 8
      %v185 = vld [vmem:[%s184] sm:$0xf]
      %v186 = vld [vmem:[%s184 + $0x4] sm:$0x3]
      %v197 = vunpack.c.l.b16 %v172
      %v198 = vunpack.c.l.b16 %v173
      %v199 = vunpack.c.l.b16 %v174
      %v200 = vunpack.c.l.b16 %v175
      %v201 = vunpack.c.l.b16 %v176
      %v202 = vunpack.c.l.b16 %v177
      %v203 = vunpack.c.l.b16 %v178
      %v204 = vunpack.c.l.b16 %v179
      %v205 = vunpack.c.l.b16 %v180
      %v206 = vunpack.c.l.b16 %v183
      %v207 = vpack.c.b16 %v198, %v197
      %v208 = vpack.c.b16 %v200, %v199
      %v209 = vpack.c.b16 %v202, %v201
      %v210 = vpack.c.b16 %v204, %v203
      %v211 = vpack.c.b16 %v206, %v205
      %vm212 = vsmask.f32 7424
      %v214 = vshrl.u32 %v207, 16
      %v216 = vshll.u32 %v207, 16
      %v218 = vrot.slane %v216, 1
      %v219 = vor.u32 %v214, %v218
      %v221 = vshll.u32 %v208, 16
      %v223 = vrot.slane %v221, 1
      %v224 = vsel %vm212, %v219, %v223
      %v225 = vshrl.u32 %v208, 16
      %v227 = vor.u32 %v225, %v223
      %v229 = vshll.u32 %v209, 16
      %v231 = vrot.slane %v229, 1
      %v232 = vsel %vm212, %v227, %v231
      %v233 = vshrl.u32 %v209, 16
      %v235 = vor.u32 %v233, %v231
      %v237 = vshll.u32 %v210, 16
      %v239 = vrot.slane %v237, 1
      %v240 = vsel %vm212, %v235, %v239
      %v241 = vshrl.u32 %v210, 16
      %v243 = vor.u32 %v241, %v239
      %v245 = vshll.u32 %v211, 16
      %v247 = vrot.slane %v245, 1
      %v248 = vsel %vm212, %v243, %v247
      %v249 = vshrl.u32 %v211, 16
      %v251 = vor.u32 %v249, %v247
      %v254 = vunpack.c.l.b16 %v185
      %v255 = vunpack.c.l.b16 %v186
      %v256 = vpack.c.b16 %v255, %v254
      %vm257 = vcmask 97280
      %v259 = vsel %vm257, %v224, 0
      %v262 = vsel %vm257, %v232, 0
      %v265 = vsel %vm257, %v240, 0
      %v268 = vsel %vm257, %v248, 0
      %v271 = vsel %vm257, %v251, 0
      %vm273 = vcmask 1045504
      %v275 = vsel %vm273, %v256, 0
      %277 = vmatprep.subr.bf16.mxu0 0
      %278 = vmatpush1.bf16.msra.mxu0 %v275
      %279 = vmatprep.subr.bf16.mxu0 0
      %280 = vmatpush1.bf16.msra.mxu0 0
      %281 = vmatprep.subr.bf16.mxu0 0
      %282 = vmatpush1.bf16.msra.mxu0 0
      %283 = vmatprep.subr.bf16.mxu0 0
      %284 = vmatpush1.bf16.msra.mxu0 0
      %285 = vmatprep.subr.bf16.mxu0 0
      %286 = vmatpush1.bf16.msra.mxu0 0
      %287 = vmatprep.subr.bf16.mxu0 0
      %288 = vmatpush1.bf16.msra.mxu0 0
      %289 = vmatprep.subr.bf16.mxu0 0
      %290 = vmatpush1.bf16.msra.mxu0 0
      %291 = vmatprep.subr.bf16.mxu0 0
      %292 = vmatpush1.bf16.msra.mxu0 0
      %293 = vmatprep.subr.bf16.mxu0 0
      %294 = vmatpush1.bf16.msra.mxu0 0
      %295 = vmatprep.subr.bf16.mxu0 0
      %296 = vmatpush1.bf16.msra.mxu0 0
      %297 = vmatprep.subr.bf16.mxu0 0
      %298 = vmatpush1.bf16.msra.mxu0 0
      %299 = vmatprep.subr.bf16.mxu0 0
      %300 = vmatpush1.bf16.msra.mxu0 0
      %301 = vmatprep.subr.bf16.mxu0 0
      %302 = vmatpush1.bf16.msra.mxu0 0
      %303 = vmatprep.subr.bf16.mxu0 0
      %304 = vmatpush1.bf16.msra.mxu0 0
      %305 = vmatprep.subr.bf16.mxu0 0
      %306 = vmatpush1.bf16.msra.mxu0 0
      %307 = vmatprep.subr.bf16.mxu0 0
      %308 = vmatpush1.bf16.msra.mxu0 0
      %309 = vmatprep.mubr.bf16.mxu0 0
      %310 = vmatmul.mubr.bf16.gmra.mrb[0].mxu0 %v259
      %v311 = vpop.f32.mrb[0].mxu0
      %v312 = vadd.f32 0.0, %v311
      %v313 = vpop.f32.mrb[0].mxu0
      %v314 = vpop.f32.mrb[0].mxu0
      %v315 = vadd.f32 0.0, %v314
      %v316 = vpop.f32.mrb[0].mxu0
      %317 = vmatprep.mubr.bf16.mxu0 0
      %318 = vmatmul.mubr.bf16.gmra.mrb[0].mxu0 %v262
      %v319 = vpop.f32.mrb[0].mxu0
      %v320 = vadd.f32 0.0, %v319
      %v321 = vpop.f32.mrb[0].mxu0
      %v322 = vpop.f32.mrb[0].mxu0
      %v323 = vadd.f32 0.0, %v322
      %v324 = vpop.f32.mrb[0].mxu0
      %325 = vmatprep.mubr.bf16.mxu0 0
      %326 = vmatmul.mubr.bf16.gmra.mrb[0].mxu0 %v265
      %v327 = vpop.f32.mrb[0].mxu0
      %v328 = vadd.f32 0.0, %v327
      %v329 = vpop.f32.mrb[0].mxu0
      %v330 = vpop.f32.mrb[0].mxu0
      %v331 = vadd.f32 0.0, %v330
      %v332 = vpop.f32.mrb[0].mxu0
      %333 = vmatprep.mubr.bf16.mxu0 0
      %334 = vmatmul.mubr.bf16.gmra.mrb[0].mxu0 %v268
      %v335 = vpop.f32.mrb[0].mxu0
      %v336 = vadd.f32 0.0, %v335
      %v337 = vpop.f32.mrb[0].mxu0
      %v338 = vpop.f32.mrb[0].mxu0
      %v339 = vadd.f32 0.0, %v338
      %v340 = vpop.f32.mrb[0].mxu0
      %341 = vmatprep.mubr.bf16.mxu0 0
      %342 = vmatmul.mubr.bf16.gmra.mrb[0].mxu0 %v271
      %v343 = vpop.f32.mrb[0].mxu0
      %v344 = vadd.f32 0.0, %v343
      %v345 = vpop.f32.mrb[0].mxu0
      %v346 = vpop.f32.mrb[0].mxu0
      %v347 = vpop.f32.mrb[0].mxu0
      %348 = vdwg.mxu0
      %v349 = vpack.c.b16 %v205, %v205
      %v352 = vunpack.c.l.b16 %v181
      %v353 = vunpack.c.l.b16 %v182
      %v354 = vpack.c.b16 %v353, %v352
      %v355 = vsel %vm257, %v207, 0
      %v357 = vsel %vm257, %v208, 0
      %v359 = vsel %vm257, %v209, 0
      %v361 = vsel %vm257, %v210, 0
      %v364 = vsel %vm257, %v349, 0
      %v367 = vsel %vm273, %v354, 0
      %369 = vmatprep.subr.bf16.mxu0 0
      %370 = vmatpush1.bf16.msra.mxu0 %v367
      %371 = vmatprep.subr.bf16.mxu0 0
      %372 = vmatpush1.bf16.msra.mxu0 0
      %373 = vmatprep.subr.bf16.mxu0 0
      %374 = vmatpush1.bf16.msra.mxu0 0
      %375 = vmatprep.subr.bf16.mxu0 0
      %376 = vmatpush1.bf16.msra.mxu0 0
      %377 = vmatprep.subr.bf16.mxu0 0
      %378 = vmatpush1.bf16.msra.mxu0 0
      %379 = vmatprep.subr.bf16.mxu0 0
      %380 = vmatpush1.bf16.msra.mxu0 0
      %381 = vmatprep.subr.bf16.mxu0 0
      %382 = vmatpush1.bf16.msra.mxu0 0
      %383 = vmatprep.subr.bf16.mxu0 0
      %384 = vmatpush1.bf16.msra.mxu0 0
      %385 = vmatprep.subr.bf16.mxu0 0
      %386 = vmatpush1.bf16.msra.mxu0 0
      %387 = vmatprep.subr.bf16.mxu0 0
      %388 = vmatpush1.bf16.msra.mxu0 0
      %389 = vmatprep.subr.bf16.mxu0 0
      %390 = vmatpush1.bf16.msra.mxu0 0
      %391 = vmatprep.subr.bf16.mxu0 0
      %392 = vmatpush1.bf16.msra.mxu0 0
      %393 = vmatprep.subr.bf16.mxu0 0
      %394 = vmatpush1.bf16.msra.mxu0 0
      %395 = vmatprep.subr.bf16.mxu0 0
      %396 = vmatpush1.bf16.msra.mxu0 0
      %397 = vmatprep.subr.bf16.mxu0 0
      %398 = vmatpush1.bf16.msra.mxu0 0
      %399 = vmatprep.subr.bf16.mxu0 0
      %400 = vmatpush1.bf16.msra.mxu0 0
      %401 = vmatprep.mubr.bf16.mxu0 0
      %402 = vmatmul.mubr.bf16.gmra.mrb[0].mxu0 %v355
      %v403 = vpop.f32.mrb[0].mxu0
      %v404 = vadd.f32 %v312, %v403
      %v405 = vpop.f32.mrb[0].mxu0
      %v406 = vpop.f32.mrb[0].mxu0
      %v407 = vadd.f32 %v315, %v406
      %v408 = vpop.f32.mrb[0].mxu0
      %409 = vmatprep.mubr.bf16.mxu0 0
      %410 = vmatmul.mubr.bf16.gmra.mrb[0].mxu0 %v357
      %v411 = vpop.f32.mrb[0].mxu0
      %v412 = vadd.f32 %v320, %v411
      %v413 = vpop.f32.mrb[0].mxu0
      %v414 = vpop.f32.mrb[0].mxu0
      %v415 = vadd.f32 %v323, %v414
      %v416 = vpop.f32.mrb[0].mxu0
      %417 = vmatprep.mubr.bf16.mxu0 0
      %418 = vmatmul.mubr.bf16.gmra.mrb[0].mxu0 %v359
      %v419 = vpop.f32.mrb[0].mxu0
      %v420 = vadd.f32 %v328, %v419
      %v421 = vpop.f32.mrb[0].mxu0
      %v422 = vpop.f32.mrb[0].mxu0
      %v423 = vadd.f32 %v331, %v422
      %v424 = vpop.f32.mrb[0].mxu0
      %425 = vmatprep.mubr.bf16.mxu0 0
      %426 = vmatmul.mubr.bf16.gmra.mrb[0].mxu0 %v361
      %v427 = vpop.f32.mrb[0].mxu0
      %v428 = vadd.f32 %v336, %v427
      %v429 = vpop.f32.mrb[0].mxu0
      %v430 = vpop.f32.mrb[0].mxu0
      %v431 = vadd.f32 %v339, %v430
      %v432 = vpop.f32.mrb[0].mxu0
      %433 = vmatprep.mubr.bf16.mxu0 0
      %434 = vmatmul.mubr.bf16.gmra.mrb[0].mxu0 %v364
      %v435 = vpop.f32.mrb[0].mxu0
      %v436 = vadd.f32 %v344, %v435
      %v437 = vpop.f32.mrb[0].mxu0
      %v438 = vpop.f32.mrb[0].mxu0
      %v439 = vpop.f32.mrb[0].mxu0
      %440 = vdwg.mxu0
      %v441 = vld [vmem:[%s165 + $0x4] sm:$0xf]
      %v442 = vld [vmem:[%s165 + $0x8] sm:$0xf]
      %v443 = vld [vmem:[%s165 + $0xc] sm:$0xf]
      %v444 = vld [vmem:[%s165 + $0x10] sm:$0xf]
      %v445 = vld [vmem:[%s165 + $0x14] sm:$0xf]
      %v446 = vld [vmem:[%s165 + $0x18] sm:$0xf]
      %v447 = vld [vmem:[%s165 + $0x1c] sm:$0xf]
      %v448 = vld [vmem:[%s165 + $0x20] sm:$0xf]
      %v449 = vld [vmem:[%s165 + $0x24] sm:$0xf]
      %v450 = vld [vmem:[%s165 + $0x28] sm:$0x1]
      %s451 = scalar_lea.vmem %s1, 16
      %v452 = vld [vmem:[%s451] sm:$0xf]
      %v453 = vld [vmem:[%s451 + $0x4] sm:$0x3]
      %v464 = vunpack.c.l.b16 %v441
      %v465 = vunpack.c.l.b16 %v442
      %v466 = vunpack.c.l.b16 %v443
      %v467 = vunpack.c.l.b16 %v444
      %v468 = vunpack.c.l.b16 %v445
      %v469 = vunpack.c.l.b16 %v446
      %v470 = vunpack.c.l.b16 %v447
      %v471 = vunpack.c.l.b16 %v448
      %v472 = vunpack.c.l.b16 %v449
      %v473 = vunpack.c.l.b16 %v450
      %v474 = vpack.c.b16 %v465, %v464
      %v475 = vpack.c.b16 %v467, %v466
      %v476 = vpack.c.b16 %v469, %v468
      %v477 = vpack.c.b16 %v471, %v470
      %v478 = vpack.c.b16 %v473, %v472
      %v480 = vshrl.u32 %v474, 16
      %v482 = vshll.u32 %v474, 16
      %v484 = vrot.slane %v482, 1
      %v485 = vor.u32 %v480, %v484
      %v487 = vshll.u32 %v475, 16
      %v489 = vrot.slane %v487, 1
      %v490 = vsel %vm212, %v485, %v489
      %v491 = vshrl.u32 %v475, 16
      %v493 = vor.u32 %v491, %v489
      %v495 = vshll.u32 %v476, 16
      %v497 = vrot.slane %v495, 1
      %v498 = vsel %vm212, %v493, %v497
      %v499 = vshrl.u32 %v476, 16
      %v501 = vor.u32 %v499, %v497
      %v503 = vshll.u32 %v477, 16
      %v505 = vrot.slane %v503, 1
      %v506 = vsel %vm212, %v501, %v505
      %v507 = vshrl.u32 %v477, 16
      %v509 = vor.u32 %v507, %v505
      %v511 = vshll.u32 %v478, 16
      %v513 = vrot.slane %v511, 1
      %v514 = vsel %vm212, %v509, %v513
      %v515 = vshrl.u32 %v478, 16
      %v517 = vor.u32 %v515, %v513
      %v520 = vunpack.c.l.b16 %v452
      %v521 = vunpack.c.l.b16 %v453
      %v522 = vpack.c.b16 %v521, %v520
      %v524 = vsel %vm257, %v490, 0
      %v527 = vsel %vm257, %v498, 0
      %v530 = vsel %vm257, %v506, 0
      %v533 = vsel %vm257, %v514, 0
      %v536 = vsel %vm257, %v517, 0
      %v539 = vsel %vm273, %v522, 0
      %541 = vmatprep.subr.bf16.mxu0 0
      %542 = vmatpush1.bf16.msra.mxu0 %v539
      %543 = vmatprep.subr.bf16.mxu0 0
      %544 = vmatpush1.bf16.msra.mxu0 0
      %545 = vmatprep.subr.bf16.mxu0 0
      %546 = vmatpush1.bf16.msra.mxu0 0
      %547 = vmatprep.subr.bf16.mxu0 0
      %548 = vmatpush1.bf16.msra.mxu0 0
      %549 = vmatprep.subr.bf16.mxu0 0
      %550 = vmatpush1.bf16.msra.mxu0 0
      %551 = vmatprep.subr.bf16.mxu0 0
      %552 = vmatpush1.bf16.msra.mxu0 0
      %553 = vmatprep.subr.bf16.mxu0 0
      %554 = vmatpush1.bf16.msra.mxu0 0
      %555 = vmatprep.subr.bf16.mxu0 0
      %556 = vmatpush1.bf16.msra.mxu0 0
      %557 = vmatprep.subr.bf16.mxu0 0
      %558 = vmatpush1.bf16.msra.mxu0 0
      %559 = vmatprep.subr.bf16.mxu0 0
      %560 = vmatpush1.bf16.msra.mxu0 0
      %561 = vmatprep.subr.bf16.mxu0 0
      %562 = vmatpush1.bf16.msra.mxu0 0
      %563 = vmatprep.subr.bf16.mxu0 0
      %564 = vmatpush1.bf16.msra.mxu0 0
      %565 = vmatprep.subr.bf16.mxu0 0
      %566 = vmatpush1.bf16.msra.mxu0 0
      %567 = vmatprep.subr.bf16.mxu0 0
      %568 = vmatpush1.bf16.msra.mxu0 0
      %569 = vmatprep.subr.bf16.mxu0 0
      %570 = vmatpush1.bf16.msra.mxu0 0
      %571 = vmatprep.subr.bf16.mxu0 0
      %572 = vmatpush1.bf16.msra.mxu0 0
      %573 = vmatprep.mubr.bf16.mxu0 0
      %574 = vmatmul.mubr.bf16.gmra.mrb[0].mxu0 %v524
      %v575 = vpop.f32.mrb[0].mxu0
      %v576 = vadd.f32 0.0, %v575
      %v577 = vpop.f32.mrb[0].mxu0
      %v578 = vpop.f32.mrb[0].mxu0
      %v579 = vadd.f32 0.0, %v578
      %v580 = vpop.f32.mrb[0].mxu0
      %581 = vmatprep.mubr.bf16.mxu0 0
      %582 = vmatmul.mubr.bf16.gmra.mrb[0].mxu0 %v527
      %v583 = vpop.f32.mrb[0].mxu0
      %v584 = vadd.f32 0.0, %v583
      %v585 = vpop.f32.mrb[0].mxu0
      %v586 = vpop.f32.mrb[0].mxu0
      %v587 = vadd.f32 0.0, %v586
      %v588 = vpop.f32.mrb[0].mxu0
      %589 = vmatprep.mubr.bf16.mxu0 0
      %590 = vmatmul.mubr.bf16.gmra.mrb[0].mxu0 %v530
      %v591 = vpop.f32.mrb[0].mxu0
      %v592 = vadd.f32 0.0, %v591
      %v593 = vpop.f32.mrb[0].mxu0
      %v594 = vpop.f32.mrb[0].mxu0
      %v595 = vadd.f32 0.0, %v594
      %v596 = vpop.f32.mrb[0].mxu0
      %597 = vmatprep.mubr.bf16.mxu0 0
      %598 = vmatmul.mubr.bf16.gmra.mrb[0].mxu0 %v533
      %v599 = vpop.f32.mrb[0].mxu0
      %v600 = vadd.f32 0.0, %v599
      %v601 = vpop.f32.mrb[0].mxu0
      %v602 = vpop.f32.mrb[0].mxu0
      %v603 = vadd.f32 0.0, %v602
      %v604 = vpop.f32.mrb[0].mxu0
      %605 = vmatprep.mubr.bf16.mxu0 0
      %606 = vmatmul.mubr.bf16.gmra.mrb[0].mxu0 %v536
      %v607 = vpop.f32.mrb[0].mxu0
      %v608 = vadd.f32 0.0, %v607
      %v609 = vpop.f32.mrb[0].mxu0
      %v610 = vpop.f32.mrb[0].mxu0
      %v611 = vpop.f32.mrb[0].mxu0
      %612 = vdwg.mxu0
      %v613 = vadd.f32 %v404, %v576
      %v614 = vadd.f32 %v407, %v579
      %v615 = vadd.f32 %v412, %v584
      %v616 = vadd.f32 %v415, %v587
      %v617 = vadd.f32 %v420, %v592
      %v618 = vadd.f32 %v423, %v595
      %v619 = vadd.f32 %v428, %v600
      %v620 = vadd.f32 %v431, %v603
      %v621 = vadd.f32 %v436, %v608
      %v622 = vld [vmem:[%s165 + $0x4] sm:$0xe]
      %s623 = scalar_lea.vmem %s1, 24
      %v624 = vld [vmem:[%s623] sm:$0xf]
      %v625 = vld [vmem:[%s623 + $0x4] sm:$0x3]
      %v627 = vunpack.c.l.b16 %v622
      %v628 = vpack.c.b16 %v465, %v627
      %vm629 = vcmask 1046528
      %v630 = vrot.slane %v628, 1
      %v631 = vrot.slane %v475, 1
      %v632 = vsel %vm629, %v630, %v631
      %v633 = vrot.slane %v476, 1
      %v634 = vsel %vm629, %v631, %v633
      %v635 = vrot.slane %v477, 1
      %v636 = vsel %vm629, %v633, %v635
      %v637 = vrot.slane %v478, 1
      %v638 = vsel %vm629, %v635, %v637
      %v641 = vunpack.c.l.b16 %v624
      %v642 = vunpack.c.l.b16 %v625
      %v643 = vpack.c.b16 %v642, %v641
      %v645 = vsel %vm257, %v632, 0
      %v648 = vsel %vm257, %v634, 0
      %v651 = vsel %vm257, %v636, 0
      %v654 = vsel %vm257, %v638, 0
      %v657 = vsel %vm257, %v637, 0
      %v660 = vsel %vm273, %v643, 0
      %662 = vmatprep.subr.bf16.mxu0 0
      %663 = vmatpush1.bf16.msra.mxu0 %v660
      %664 = vmatprep.subr.bf16.mxu0 0
      %665 = vmatpush1.bf16.msra.mxu0 0
      %666 = vmatprep.subr.bf16.mxu0 0
      %667 = vmatpush1.bf16.msra.mxu0 0
      %668 = vmatprep.subr.bf16.mxu0 0
      %669 = vmatpush1.bf16.msra.mxu0 0
      %670 = vmatprep.subr.bf16.mxu0 0
      %671 = vmatpush1.bf16.msra.mxu0 0
      %672 = vmatprep.subr.bf16.mxu0 0
      %673 = vmatpush1.bf16.msra.mxu0 0
      %674 = vmatprep.subr.bf16.mxu0 0
      %675 = vmatpush1.bf16.msra.mxu0 0
      %676 = vmatprep.subr.bf16.mxu0 0
      %677 = vmatpush1.bf16.msra.mxu0 0
      %678 = vmatprep.subr.bf16.mxu0 0
      %679 = vmatpush1.bf16.msra.mxu0 0
      %680 = vmatprep.subr.bf16.mxu0 0
      %681 = vmatpush1.bf16.msra.mxu0 0
      %682 = vmatprep.subr.bf16.mxu0 0
      %683 = vmatpush1.bf16.msra.mxu0 0
      %684 = vmatprep.subr.bf16.mxu0 0
      %685 = vmatpush1.bf16.msra.mxu0 0
      %686 = vmatprep.subr.bf16.mxu0 0
      %687 = vmatpush1.bf16.msra.mxu0 0
      %688 = vmatprep.subr.bf16.mxu0 0
      %689 = vmatpush1.bf16.msra.mxu0 0
      %690 = vmatprep.subr.bf16.mxu0 0
      %691 = vmatpush1.bf16.msra.mxu0 0
      %692 = vmatprep.subr.bf16.mxu0 0
      %693 = vmatpush1.bf16.msra.mxu0 0
      %694 = vmatprep.mubr.bf16.mxu0 0
      %695 = vmatmul.mubr.bf16.gmra.mrb[0].mxu0 %v645
      %v696 = vpop.f32.mrb[0].mxu0
      %v697 = vadd.f32 0.0, %v696
      %v698 = vpop.f32.mrb[0].mxu0
      %v699 = vpop.f32.mrb[0].mxu0
      %v700 = vadd.f32 0.0, %v699
      %v701 = vpop.f32.mrb[0].mxu0
      %702 = vmatprep.mubr.bf16.mxu0 0
      %703 = vmatmul.mubr.bf16.gmra.mrb[0].mxu0 %v648
      %v704 = vpop.f32.mrb[0].mxu0
      %v705 = vadd.f32 0.0, %v704
      %v706 = vpop.f32.mrb[0].mxu0
      %v707 = vpop.f32.mrb[0].mxu0
      %v708 = vadd.f32 0.0, %v707
      %v709 = vpop.f32.mrb[0].mxu0
      %710 = vmatprep.mubr.bf16.mxu0 0
      %711 = vmatmul.mubr.bf16.gmra.mrb[0].mxu0 %v651
      %v712 = vpop.f32.mrb[0].mxu0
      %v713 = vadd.f32 0.0, %v712
      %v714 = vpop.f32.mrb[0].mxu0
      %v715 = vpop.f32.mrb[0].mxu0
      %v716 = vadd.f32 0.0, %v715
      %v717 = vpop.f32.mrb[0].mxu0
      %718 = vmatprep.mubr.bf16.mxu0 0
      %719 = vmatmul.mubr.bf16.gmra.mrb[0].mxu0 %v654
      %v720 = vpop.f32.mrb[0].mxu0
      %v721 = vadd.f32 0.0, %v720
      %v722 = vpop.f32.mrb[0].mxu0
      %v723 = vpop.f32.mrb[0].mxu0
      %v724 = vadd.f32 0.0, %v723
      %v725 = vpop.f32.mrb[0].mxu0
      %726 = vmatprep.mubr.bf16.mxu0 0
      %727 = vmatmul.mubr.bf16.gmra.mrb[0].mxu0 %v657
      %v728 = vpop.f32.mrb[0].mxu0
      %v729 = vadd.f32 0.0, %v728
      %v730 = vpop.f32.mrb[0].mxu0
      %v731 = vpop.f32.mrb[0].mxu0
      %v732 = vpop.f32.mrb[0].mxu0
      %733 = vdwg.mxu0
      %v734 = vadd.f32 %v613, %v697
      %v735 = vadd.f32 %v614, %v700
      %v736 = vadd.f32 %v615, %v705
      %v737 = vadd.f32 %v616, %v708
      %v738 = vadd.f32 %v617, %v713
      %v739 = vadd.f32 %v618, %v716
      %v740 = vadd.f32 %v619, %v721
      %v741 = vadd.f32 %v620, %v724
      %v742 = vadd.f32 %v621, %v729
      %v743 = vld [vmem:[%s2] sm:$0x1]
      %v745 = vlaneseq
      %v746 = vshrl.u32 %v745, 7
      %v747 = vsub.s32 0, %v746
      %v748 = vrot.slane %v743, %v747
      %v750 = vadd.f32 %v734, %v748
      %v751 = vadd.f32 %v735, %v748
      %v752 = vadd.f32 %v736, %v748
      %v753 = vadd.f32 %v737, %v748
      %v754 = vadd.f32 %v738, %v748
      %v755 = vadd.f32 %v739, %v748
      %v756 = vadd.f32 %v740, %v748
      %v757 = vadd.f32 %v741, %v748
      %v758 = vadd.f32 %v742, %v748
      %v759 = vlaneseq
      %v760 = vand.u32 %v759, 127
      %vm761 = vcmp.lt.s32.totalorder %v760, 32
      %v762 = vmax.f32 %v750, 0.0
      %v763 = vmax.f32 %v751, 0.0
      %v764 = vmax.f32 %v752, 0.0
      %v765 = vmax.f32 %v753, 0.0
      %v766 = vmax.f32 %v754, 0.0
      %v767 = vmax.f32 %v755, 0.0
      %v768 = vmax.f32 %v756, 0.0
      %v769 = vmax.f32 %v757, 0.0
      %v770 = vmax.f32 %v758, 0.0
      %v771 = vsel %vm761, %v762, %v750
      %v772 = vsel %vm761, %v763, %v751
      %v773 = vsel %vm761, %v764, %v752
      %v774 = vsel %vm761, %v765, %v753
      %v775 = vsel %vm761, %v766, %v754
      %v776 = vsel %vm761, %v767, %v755
      %v777 = vsel %vm761, %v768, %v756
      %v778 = vsel %vm761, %v769, %v757
      %v779 = vsel %vm761, %v770, %v758
      %v780 = vpack.c.bf16 %v772, %v771
      %v781 = vpack.c.bf16 %v774, %v773
      %v782 = vpack.c.bf16 %v776, %v775
      %v783 = vpack.c.bf16 %v778, %v777
      %v784 = vpack.c.bf16 %v779, %v779
      %v790 = vunpack.c.l.b16 %v780
      %v791 = vunpack.c.h.b16 %v780
      %v792 = vunpack.c.l.b16 %v781
      %v793 = vunpack.c.h.b16 %v781
      %v794 = vunpack.c.l.b16 %v782
      %v795 = vunpack.c.h.b16 %v782
      %v796 = vunpack.c.l.b16 %v783
      %v797 = vunpack.c.h.b16 %v783
      %v798 = vunpack.c.l.b16 %v784
      %v799 = vpack.c.b16 %v790, %v790
      %v800 = vpack.c.b16 %v791, %v791
      %v801 = vpack.c.b16 %v792, %v792
      %v802 = vpack.c.b16 %v793, %v793
      %v803 = vpack.c.b16 %v794, %v794
      %v804 = vpack.c.b16 %v795, %v795
      %v805 = vpack.c.b16 %v796, %v796
      %v806 = vpack.c.b16 %v797, %v797
      %v807 = vpack.c.b16 %v798, %v798
      %vm817 = vcmask 519168
      %818 = vst.msk [vmem:[%s170] sm:$0xf] %vm817, %v799
      %819 = vst.msk [vmem:[%s170 + $0x4] sm:$0xf] %vm817, %v800
      %820 = vst.msk [vmem:[%s170 + $0x8] sm:$0xf] %vm817, %v801
      %821 = vst.msk [vmem:[%s170 + $0xc] sm:$0xf] %vm817, %v802
      %822 = vst.msk [vmem:[%s170 + $0x10] sm:$0xf] %vm817, %v803
      %823 = vst.msk [vmem:[%s170 + $0x14] sm:$0xf] %vm817, %v804
      %824 = vst.msk [vmem:[%s170 + $0x18] sm:$0xf] %vm817, %v805
      %825 = vst.msk [vmem:[%s170 + $0x1c] sm:$0xf] %vm817, %v806
      %826 = vst.msk [vmem:[%s170 + $0x20] sm:$0xf] %vm817, %v807
      %p827 = scmp.lt.s32.totalorder %s14, 1
      %s828 = scalar_select %p827, %s14, 1
      %s829 = smul.addr %s828, 9
      %s830 = smul.addr %s829, 4
      %s831 = scalar_lea.vmem %s3, %s830
      // Predicated region
      $region33: #{conv_block.3} parent=31 // pred_check
        %p832 = pneg %p100
      $region34: #{conv_block.3} parent=31 // pred_check_branch
        %834 = sbr.rel (%p832) target = $region36
      $region35: #{conv_block.3} parent=31 // pred_region
        _
      $region36: #{conv_block.3} parent=31 // pred_fallthru
        _
    $region32: #{conv_block.3} parent=5 // pred_fallthru
      _
    %p835 = scmp.le.s32.totalorder 2, %s9
    // Predicated region
    $region37: #{conv_block.3} parent=5 // pred_check
      %p836 = pneg %p835
    $region38: #{conv_block.3} parent=5 // pred_check_branch
      %838 = sbr.rel (%p836) target = $region40
    $region39: #{conv_block.3} parent=5 // pred_region
      %s839 = ssub.s32 %s9, 2
      // Predicated region
      $region41: #{conv_block.3} parent=39 // pred_check
        %p840 = pneg %p106
      $region42: #{conv_block.3} parent=39 // pred_check_branch
        %842 = sbr.rel (%p840) target = $region44
      $region43: #{conv_block.3} parent=39 // pred_region
        %p843 = scmp.lt.s32.totalorder %s15, 1
        %s844 = scalar_select %p843, %s15, 1
        %s845 = smul.addr %s844, 9
        %s846 = smul.addr %s845, 4
        %s847 = scalar_lea.vmem %s3, %s846
      $region44: #{conv_block.3} parent=39 // pred_fallthru
        _
    $region40: #{conv_block.3} parent=5 // pred_fallthru
      _
  $region6: #{conv_block.3} parent=0 // loop_footer
    %s13 = sadd.s32 1, %s9
  $region7: #{conv_block.3} parent=0 // loop_footer_branch
    %8 = sbr.rel target = $region3
  $region8: #{conv_block.3} parent=0 // loop_exit
    _

// kernel: conv_block.4
$region0: #{conv_block.4}
  #allocation0 [shape = 'u32[]', space=smem, size = 0x4, offset = 0x4, fixed_abs, tag = 'smem constant byte address 0x4 - core index']
  #allocation1 [shape = 'u32[144,128]{1,0:T(1,128)}', space=vmem, size = 0x12000, scoped, tag = 'internal scratch']
  %s0 = inlined_call_operand.vmem [shape: bf16[2,110,32], index: 0, kind: input, shape index: {}]
  %s1 = inlined_call_operand.vmem [shape: bf16[9,32,32], index: 1, kind: input, shape index: {}]
  %s2 = inlined_call_operand.vmem [shape: f32[1,32], index: 2, kind: input, shape index: {}]
  %s3 = inlined_call_operand.vmem [shape: bf16[2,80,32], index: 3, kind: output, shape index: {}]
  %s4 = sld [smem:[#allocation0]]
  $region45: #{conv_block.4} parent=0
    _
  %s6 = ssub.s32 1, %s4
  %s7 = scalar_select 0, %s6, %s4
  loop: start=0, step=1, limit=4
  $region2: #{conv_block.4} parent=0 // loop_pre_header
    _
  $region3: #{conv_block.4} parent=0 // loop_header
    %s9 = sphi 0, %s13
    %p10 = scmp.ge.s32.totalorder %s9, 4
    %s19 = sphi 0, %s21
    %s22 = sphi 0, %s19
    %s23 = sphi 0, %s22
    %s39 = sphi 0, %s23
    %s43 = sphi 0, %s43
    %s45 = sphi 0, %s43
    %s46 = sphi 0, %s45
    %s60 = sphi 0, %s46
    %s64 = sphi 0, %s64
    %s66 = sphi 0, %s64
    %s67 = sphi 0, %s66
    %s81 = sphi 0, %s67
    %s87 = sphi 0, %s89
    %s90 = sphi 0, %s87
    %s91 = sphi 0, %s90
    %s107 = sphi 0, %s91
  $region4: #{conv_block.4} parent=0 // loop_header_branch
    %12 = sbr.rel (%p10) target = $region8
  $region5: #{conv_block.4} parent=0 // loop_body
    %s14 = ssub.s32 %s9, 1
    %s15 = ssub.s32 %s9, 2
    %s16 = sadd.s32 %s9, 1
    %s17 = ssub.s32 %s9, %s16
    %p18 = scmp.eq.s32.totalorder %s17, 0
    %s20 = sadd.s32 %s19, 1
    %s21 = scalar_select %p18, %s19, %s20
    %p24 = pneg %p18
    %p25 = scmp.eq.s32.totalorder %s9, 1
    %p26 = por %p24, %p25
    %p27 = scmp.ne.s32.totalorder %s19, %s22
    %p28 = scmp.eq.s32.totalorder %s9, 0
    %p29 = por %p27, %p28
    %p30 = scmp.ne.s32.totalorder %s19, %s22
    %p31 = scmp.eq.s32.totalorder %s14, 1
    %p32 = por %p30, %p31
    %p33 = scmp.ne.s32.totalorder %s22, %s23
    %p34 = scmp.eq.s32.totalorder %s14, 0
    %p35 = por %p33, %p34
    %p36 = scmp.ne.s32.totalorder %s22, %s23
    %p37 = scmp.eq.s32.totalorder %s15, 1
    %p38 = por %p36, %p37
    %p40 = scmp.ne.s32.totalorder %s23, %s39
    %p41 = scmp.eq.s32.totalorder %s15, 0
    %p42 = por %p40, %p41
    %s44 = sadd.s32 %s43, 1
    %p47 = scmp.eq.s32.totalorder %s9, 1
    %p48 = scmp.ne.s32.totalorder %s43, %s45
    %p49 = scmp.eq.s32.totalorder %s9, 0
    %p50 = por %p48, %p49
    %p51 = scmp.ne.s32.totalorder %s43, %s45
    %p52 = scmp.eq.s32.totalorder %s14, 1
    %p53 = por %p51, %p52
    %p54 = scmp.ne.s32.totalorder %s45, %s46
    %p55 = scmp.eq.s32.totalorder %s14, 0
    %p56 = por %p54, %p55
    %p57 = scmp.ne.s32.totalorder %s45, %s46
    %p58 = scmp.eq.s32.totalorder %s15, 1
    %p59 = por %p57, %p58
    %p61 = scmp.ne.s32.totalorder %s46, %s60
    %p62 = scmp.eq.s32.totalorder %s15, 0
    %p63 = por %p61, %p62
    %s65 = sadd.s32 %s64, 1
    %p68 = scmp.eq.s32.totalorder %s9, 1
    %p69 = scmp.ne.s32.totalorder %s64, %s66
    %p70 = scmp.eq.s32.totalorder %s9, 0
    %p71 = por %p69, %p70
    %p72 = scmp.ne.s32.totalorder %s64, %s66
    %p73 = scmp.eq.s32.totalorder %s14, 1
    %p74 = por %p72, %p73
    %p75 = scmp.ne.s32.totalorder %s66, %s67
    %p76 = scmp.eq.s32.totalorder %s14, 0
    %p77 = por %p75, %p76
    %p78 = scmp.ne.s32.totalorder %s66, %s67
    %p79 = scmp.eq.s32.totalorder %s15, 1
    %p80 = por %p78, %p79
    %p82 = scmp.ne.s32.totalorder %s67, %s81
    %p83 = scmp.eq.s32.totalorder %s15, 0
    %p84 = por %p82, %p83
    %s85 = ssub.s32 %s9, %s16
    %p86 = scmp.eq.s32.totalorder %s85, 0
    %s88 = sadd.s32 %s87, 1
    %s89 = scalar_select %p86, %s87, %s88
    %p92 = pneg %p86
    %p93 = scmp.eq.s32.totalorder %s9, 1
    %p94 = por %p92, %p93
    %p95 = scmp.ne.s32.totalorder %s87, %s90
    %p96 = scmp.eq.s32.totalorder %s9, 0
    %p97 = por %p95, %p96
    %p98 = scmp.ne.s32.totalorder %s87, %s90
    %p99 = scmp.eq.s32.totalorder %s14, 1
    %p100 = por %p98, %p99
    %p101 = scmp.ne.s32.totalorder %s90, %s91
    %p102 = scmp.eq.s32.totalorder %s14, 0
    %p103 = por %p101, %p102
    %p104 = scmp.ne.s32.totalorder %s90, %s91
    %p105 = scmp.eq.s32.totalorder %s15, 1
    %p106 = por %p104, %p105
    %p108 = scmp.ne.s32.totalorder %s91, %s107
    %p109 = scmp.eq.s32.totalorder %s15, 0
    %p110 = por %p108, %p109
    %p111 = scmp.le.s32.totalorder 1, %s9
    %p112 = scmp.lt.s32.totalorder %s9, 3
    %p113 = pnand %p111, %p112
    %p114 = pneg %p113
    // Predicated region
    $region9: #{conv_block.4} parent=5 // pred_check
      _
    $region10: #{conv_block.4} parent=5 // pred_check_branch
      %116 = sbr.rel (%p113) target = $region12
    $region11: #{conv_block.4} parent=5 // pred_region
      %s117 = ssub.s32 %s9, 1
      // Predicated region
      $region13: #{conv_block.4} parent=11 // pred_check
        %p118 = pneg %p56
      $region14: #{conv_block.4} parent=11 // pred_check_branch
        %120 = sbr.rel (%p118) target = $region16
      $region15: #{conv_block.4} parent=11 // pred_region
        _
      $region16: #{conv_block.4} parent=11 // pred_fallthru
        _
      // Predicated region
      $region17: #{conv_block.4} parent=11 // pred_check
        %p121 = pneg %p77
      $region18: #{conv_block.4} parent=11 // pred_check_branch
        %123 = sbr.rel (%p121) target = $region20
      $region19: #{conv_block.4} parent=11 // pred_region
        _
      $region20: #{conv_block.4} parent=11 // pred_fallthru
        _
    $region12: #{conv_block.4} parent=5 // pred_fallthru
      _
    %p124 = scmp.lt.s32.totalorder %s9, 2
    // Predicated region
    $region21: #{conv_block.4} parent=5 // pred_check
      %p125 = pneg %p124
    $region22: #{conv_block.4} parent=5 // pred_check_branch
      %127 = sbr.rel (%p125) target = $region24
    $region23: #{conv_block.4} parent=5 // pred_region
      // Predicated region
      $region25: #{conv_block.4} parent=23 // pred_check
        %p128 = pneg %p29
      $region26: #{conv_block.4} parent=23 // pred_check_branch
        %130 = sbr.rel (%p128) target = $region28
      $region27: #{conv_block.4} parent=23 // pred_region
        %p131 = scmp.lt.s32.totalorder %s9, 1
        %s132 = scalar_select %p131, %s9, 1
        %s133 = smul.addr %s132, 14
        %s134 = smul.addr %s133, 4
        %s135 = scalar_lea.vmem %s0, %s134
      $region28: #{conv_block.4} parent=23 // pred_fallthru
        _
    $region24: #{conv_block.4} parent=5 // pred_fallthru
      _
    %p136 = scmp.le.s32.totalorder 1, %s9
    %p137 = scmp.lt.s32.totalorder %s9, 3
    %p138 = pnand %p136, %p137
    %p139 = pneg %p138
    // Predicated region
    $region29: #{conv_block.4} parent=5 // pred_check
      _
    $region30: #{conv_block.4} parent=5 // pred_check_branch
      %141 = sbr.rel (%p138) target = $region32
    $region31: #{conv_block.4} parent=5 // pred_region
      %s142 = ssub.s32 %s9, 1
      %p143 = scmp.lt.s32.totalorder %s14, 1
      %s144 = scalar_select %p143, %s14, 1
      %s145 = smul.addr %s144, 14
      %s146 = smul.addr %s145, 4
      %s147 = scalar_lea.vmem %s0, %s146
      %p148 = pneg %p35
      %p149 = pneg %p32
      %p150 = pneg %p56
      %p151 = pneg %p53
      %p152 = pneg %p77
      %p153 = pneg %p74
      %p154 = pneg %p103
      %p155 = pneg %p100
      %p156 = scmp.lt.s32.totalorder %s14, 1
      %s157 = scalar_select %p156, %s14, 1
      %s158 = smul.addr %s157, 10
      %s159 = smul.addr %s158, 4
      %s160 = scalar_lea.vmem %s3, %s159
      %p161 = scmp.lt.s32.totalorder %s14, 1
      %s162 = scalar_select %p161, %s14, 1
      %s163 = smul.addr %s162, 14
      %s164 = smul.addr %s163, 4
      %s165 = scalar_lea.vmem %s0, %s164
      %p166 = scmp.lt.s32.totalorder %s14, 1
      %s167 = scalar_select %p166, %s14, 1
      %s168 = smul.addr %s167, 10
      %s169 = smul.addr %s168, 4
      %s170 = scalar_lea.vmem %s3, %s169
      %v172 = vld [vmem:[%s165] sm:$0xf]
      %v173 = vld [vmem:[%s165 + $0x4] sm:$0xf]
      %v174 = vld [vmem:[%s165 + $0x8] sm:$0xf]
      %v175 = vld [vmem:[%s165 + $0xc] sm:$0xf]
      %v176 = vld [vmem:[%s165 + $0x10] sm:$0xf]
      %v177 = vld [vmem:[%s165 + $0x14] sm:$0xf]
      %v178 = vld [vmem:[%s165 + $0x18] sm:$0xf]
      %v179 = vld [vmem:[%s165 + $0x1c] sm:$0xf]
      %v180 = vld [vmem:[%s165 + $0x20] sm:$0xf]
      %v181 = vld [vmem:[%s165 + $0x24] sm:$0xf]
      %v182 = vld [vmem:[%s1] sm:$0xf]
      %v183 = vld [vmem:[%s1 + $0x4] sm:$0xf]
      %v184 = vld [vmem:[%s1 + $0x8] sm:$0xf]
      %v185 = vld [vmem:[%s1 + $0xc] sm:$0xf]
      %v186 = vld [vmem:[%s165 + $0x28] sm:$0x1]
      %s187 = scalar_lea.vmem %s1, 16
      %v188 = vld [vmem:[%s187] sm:$0xf]
      %v189 = vld [vmem:[%s187 + $0x4] sm:$0xf]
      %v190 = vld [vmem:[%s187 + $0x8] sm:$0xf]
      %v191 = vld [vmem:[%s187 + $0xc] sm:$0xf]
      %v203 = vunpack.c.l.b16 %v172
      %v204 = vunpack.c.l.b16 %v173
      %v205 = vunpack.c.l.b16 %v174
      %v206 = vunpack.c.l.b16 %v175
      %v207 = vunpack.c.l.b16 %v176
      %v208 = vunpack.c.l.b16 %v177
      %v209 = vunpack.c.l.b16 %v178
      %v210 = vunpack.c.l.b16 %v179
      %v211 = vunpack.c.l.b16 %v180
      %v212 = vunpack.c.l.b16 %v181
      %v213 = vunpack.c.l.b16 %v186
      %v214 = vpack.c.b16 %v204, %v203
      %v215 = vpack.c.b16 %v206, %v205
      %v216 = vpack.c.b16 %v208, %v207
      %v217 = vpack.c.b16 %v210, %v209
      %v218 = vpack.c.b16 %v212, %v211
      %v219 = vpack.c.b16 %v213, %v213
      %vm220 = vsmask.f32 7424
      %v222 = vshrl.u32 %v214, 16
      %v224 = vshll.u32 %v214, 16
      %v226 = vrot.slane %v224, 1
      %v227 = vor.u32 %v222, %v226
      %v229 = vshll.u32 %v215, 16
      %v231 = vrot.slane %v229, 1
      %v232 = vsel %vm220, %v227, %v231
      %v233 = vshrl.u32 %v215, 16
      %v235 = vor.u32 %v233, %v231
      %v237 = vshll.u32 %v216, 16
      %v239 = vrot.slane %v237, 1
      %v240 = vsel %vm220, %v235, %v239
      %v241 = vshrl.u32 %v216, 16
      %v243 = vor.u32 %v241, %v239
      %v245 = vshll.u32 %v217, 16
      %v247 = vrot.slane %v245, 1
      %v248 = vsel %vm220, %v243, %v247
      %v249 = vshrl.u32 %v217, 16
      %v251 = vor.u32 %v249, %v247
      %v253 = vshll.u32 %v218, 16
      %v255 = vrot.slane %v253, 1
      %v256 = vsel %vm220, %v251, %v255
      %v257 = vshrl.u32 %v218, 16
      %v259 = vor.u32 %v257, %v255
      %v261 = vshll.u32 %v219, 16
      %v263 = vrot.slane %v261, 1
      %v264 = vsel %vm220, %v259, %v263
      %v269 = vunpack.c.l.b16 %v188
      %v270 = vunpack.c.l.b16 %v189
      %v271 = vunpack.c.l.b16 %v190
      %v272 = vunpack.c.l.b16 %v191
      %v273 = vpack.c.b16 %v270, %v269
      %v274 = vpack.c.b16 %v272, %v271
      %vm277 = vcmask 261120
      %v279 = vsel %vm277, %v232, 0
      %v282 = vsel %vm277, %v240, 0
      %v285 = vsel %vm277, %v248, 0
      %v288 = vsel %vm277, %v256, 0
      %v291 = vsel %vm277, %v264, 0
      %293 = vmatprep.subr.bf16.mxu0 0
      %294 = vmatpush1.bf16.msra.mxu0 %v273
      %295 = vmatprep.subr.bf16.mxu0 0
      %296 = vmatpush1.bf16.msra.mxu0 %v274
      %297 = vmatprep.subr.bf16.mxu0 0
      %298 = vmatpush1.bf16.msra.mxu0 0
      %299 = vmatprep.subr.bf16.mxu0 0
      %300 = vmatpush1.bf16.msra.mxu0 0
      %301 = vmatprep.subr.bf16.mxu0 0
      %302 = vmatpush1.bf16.msra.mxu0 0
      %303 = vmatprep.subr.bf16.mxu0 0
      %304 = vmatpush1.bf16.msra.mxu0 0
      %305 = vmatprep.subr.bf16.mxu0 0
      %306 = vmatpush1.bf16.msra.mxu0 0
      %307 = vmatprep.subr.bf16.mxu0 0
      %308 = vmatpush1.bf16.msra.mxu0 0
      %309 = vmatprep.subr.bf16.mxu0 0
      %310 = vmatpush1.bf16.msra.mxu0 0
      %311 = vmatprep.subr.bf16.mxu0 0
      %312 = vmatpush1.bf16.msra.mxu0 0
      %313 = vmatprep.subr.bf16.mxu0 0
      %314 = vmatpush1.bf16.msra.mxu0 0
      %315 = vmatprep.subr.bf16.mxu0 0
      %316 = vmatpush1.bf16.msra.mxu0 0
      %317 = vmatprep.subr.bf16.mxu0 0
      %318 = vmatpush1.bf16.msra.mxu0 0
      %319 = vmatprep.subr.bf16.mxu0 0
      %320 = vmatpush1.bf16.msra.mxu0 0
      %321 = vmatprep.subr.bf16.mxu0 0
      %322 = vmatpush1.bf16.msra.mxu0 0
      %323 = vmatprep.subr.bf16.mxu0 0
      %324 = vmatpush1.bf16.msra.mxu0 0
      %325 = vmatprep.mubr.bf16.mxu0 0
      %326 = vmatmul.mubr.bf16.gmra.mrb[0].mxu0 %v279
      %v327 = vpop.f32.mrb[0].mxu0
      %v328 = vadd.f32 0.0, %v327
      %v329 = vpop.f32.mrb[0].mxu0
      %v330 = vpop.f32.mrb[0].mxu0
      %v331 = vadd.f32 0.0, %v330
      %v332 = vpop.f32.mrb[0].mxu0
      %333 = vmatprep.mubr.bf16.mxu0 0
      %334 = vmatmul.mubr.bf16.gmra.mrb[0].mxu0 %v282
      %v335 = vpop.f32.mrb[0].mxu0
      %v336 = vadd.f32 0.0, %v335
      %v337 = vpop.f32.mrb[0].mxu0
      %v338 = vpop.f32.mrb[0].mxu0
      %v339 = vadd.f32 0.0, %v338
      %v340 = vpop.f32.mrb[0].mxu0
      %341 = vmatprep.mubr.bf16.mxu0 0
      %342 = vmatmul.mubr.bf16.gmra.mrb[0].mxu0 %v285
      %v343 = vpop.f32.mrb[0].mxu0
      %v344 = vadd.f32 0.0, %v343
      %v345 = vpop.f32.mrb[0].mxu0
      %v346 = vpop.f32.mrb[0].mxu0
      %v347 = vadd.f32 0.0, %v346
      %v348 = vpop.f32.mrb[0].mxu0
      %349 = vmatprep.mubr.bf16.mxu0 0
      %350 = vmatmul.mubr.bf16.gmra.mrb[0].mxu0 %v288
      %v351 = vpop.f32.mrb[0].mxu0
      %v352 = vadd.f32 0.0, %v351
      %v353 = vpop.f32.mrb[0].mxu0
      %v354 = vpop.f32.mrb[0].mxu0
      %v355 = vadd.f32 0.0, %v354
      %v356 = vpop.f32.mrb[0].mxu0
      %357 = vmatprep.mubr.bf16.mxu0 0
      %358 = vmatmul.mubr.bf16.gmra.mrb[0].mxu0 %v291
      %v359 = vpop.f32.mrb[0].mxu0
      %v360 = vadd.f32 0.0, %v359
      %v361 = vpop.f32.mrb[0].mxu0
      %v362 = vpop.f32.mrb[0].mxu0
      %v363 = vadd.f32 0.0, %v362
      %v364 = vpop.f32.mrb[0].mxu0
      %365 = vdwg.mxu0
      %v370 = vunpack.c.l.b16 %v182
      %v371 = vunpack.c.l.b16 %v183
      %v372 = vunpack.c.l.b16 %v184
      %v373 = vunpack.c.l.b16 %v185
      %v374 = vpack.c.b16 %v371, %v370
      %v375 = vpack.c.b16 %v373, %v372
      %v378 = vsel %vm277, %v214, 0
      %v380 = vsel %vm277, %v215, 0
      %v382 = vsel %vm277, %v216, 0
      %v384 = vsel %vm277, %v217, 0
      %v386 = vsel %vm277, %v218, 0
      %388 = vmatprep.subr.bf16.mxu0 0
      %389 = vmatpush1.bf16.msra.mxu0 %v374
      %390 = vmatprep.subr.bf16.mxu0 0
      %391 = vmatpush1.bf16.msra.mxu0 %v375
      %392 = vmatprep.subr.bf16.mxu0 0
      %393 = vmatpush1.bf16.msra.mxu0 0
      %394 = vmatprep.subr.bf16.mxu0 0
      %395 = vmatpush1.bf16.msra.mxu0 0
      %396 = vmatprep.subr.bf16.mxu0 0
      %397 = vmatpush1.bf16.msra.mxu0 0
      %398 = vmatprep.subr.bf16.mxu0 0
      %399 = vmatpush1.bf16.msra.mxu0 0
      %400 = vmatprep.subr.bf16.mxu0 0
      %401 = vmatpush1.bf16.msra.mxu0 0
      %402 = vmatprep.subr.bf16.mxu0 0
      %403 = vmatpush1.bf16.msra.mxu0 0
      %404 = vmatprep.subr.bf16.mxu0 0
      %405 = vmatpush1.bf16.msra.mxu0 0
      %406 = vmatprep.subr.bf16.mxu0 0
      %407 = vmatpush1.bf16.msra.mxu0 0
      %408 = vmatprep.subr.bf16.mxu0 0
      %409 = vmatpush1.bf16.msra.mxu0 0
      %410 = vmatprep.subr.bf16.mxu0 0
      %411 = vmatpush1.bf16.msra.mxu0 0
      %412 = vmatprep.subr.bf16.mxu0 0
      %413 = vmatpush1.bf16.msra.mxu0 0
      %414 = vmatprep.subr.bf16.mxu0 0
      %415 = vmatpush1.bf16.msra.mxu0 0
      %416 = vmatprep.subr.bf16.mxu0 0
      %417 = vmatpush1.bf16.msra.mxu0 0
      %418 = vmatprep.subr.bf16.mxu0 0
      %419 = vmatpush1.bf16.msra.mxu0 0
      %420 = vmatprep.mubr.bf16.mxu0 0
      %421 = vmatmul.mubr.bf16.gmra.mrb[0].mxu0 %v378
      %v422 = vpop.f32.mrb[0].mxu0
      %v423 = vadd.f32 %v328, %v422
      %v424 = vpop.f32.mrb[0].mxu0
      %v425 = vpop.f32.mrb[0].mxu0
      %v426 = vadd.f32 %v331, %v425
      %v427 = vpop.f32.mrb[0].mxu0
      %428 = vmatprep.mubr.bf16.mxu0 0
      %429 = vmatmul.mubr.bf16.gmra.mrb[0].mxu0 %v380
      %v430 = vpop.f32.mrb[0].mxu0
      %v431 = vadd.f32 %v336, %v430
      %v432 = vpop.f32.mrb[0].mxu0
      %v433 = vpop.f32.mrb[0].mxu0
      %v434 = vadd.f32 %v339, %v433
      %v435 = vpop.f32.mrb[0].mxu0
      %436 = vmatprep.mubr.bf16.mxu0 0
      %437 = vmatmul.mubr.bf16.gmra.mrb[0].mxu0 %v382
      %v438 = vpop.f32.mrb[0].mxu0
      %v439 = vadd.f32 %v344, %v438
      %v440 = vpop.f32.mrb[0].mxu0
      %v441 = vpop.f32.mrb[0].mxu0
      %v442 = vadd.f32 %v347, %v441
      %v443 = vpop.f32.mrb[0].mxu0
      %444 = vmatprep.mubr.bf16.mxu0 0
      %445 = vmatmul.mubr.bf16.gmra.mrb[0].mxu0 %v384
      %v446 = vpop.f32.mrb[0].mxu0
      %v447 = vadd.f32 %v352, %v446
      %v448 = vpop.f32.mrb[0].mxu0
      %v449 = vpop.f32.mrb[0].mxu0
      %v450 = vadd.f32 %v355, %v449
      %v451 = vpop.f32.mrb[0].mxu0
      %452 = vmatprep.mubr.bf16.mxu0 0
      %453 = vmatmul.mubr.bf16.gmra.mrb[0].mxu0 %v386
      %v454 = vpop.f32.mrb[0].mxu0
      %v455 = vadd.f32 %v360, %v454
      %v456 = vpop.f32.mrb[0].mxu0
      %v457 = vpop.f32.mrb[0].mxu0
      %v458 = vadd.f32 %v363, %v457
      %v459 = vpop.f32.mrb[0].mxu0
      %460 = vdwg.mxu0
      %v461 = vld [vmem:[%s165] sm:$0xe]
      %s462 = scalar_lea.vmem %s1, 32
      %v463 = vld [vmem:[%s462] sm:$0xf]
      %v464 = vld [vmem:[%s462 + $0x4] sm:$0xf]
      %v465 = vld [vmem:[%s462 + $0x8] sm:$0xf]
      %v466 = vld [vmem:[%s462 + $0xc] sm:$0xf]
      %v468 = vunpack.c.l.b16 %v461
      %v469 = vpack.c.b16 %v204, %v468
      %vm470 = vcmask 1046528
      %v471 = vrot.slane %v469, 1
      %v472 = vrot.slane %v215, 1
      %v473 = vsel %vm470, %v471, %v472
      %v474 = vrot.slane %v216, 1
      %v475 = vsel %vm470, %v472, %v474
      %v476 = vrot.slane %v217, 1
      %v477 = vsel %vm470, %v474, %v476
      %v478 = vrot.slane %v218, 1
      %v479 = vsel %vm470, %v476, %v478
      %v480 = vrot.slane %v219, 1
      %v481 = vsel %vm470, %v478, %v480
      %v486 = vunpack.c.l.b16 %v463
      %v487 = vunpack.c.l.b16 %v464
      %v488 = vunpack.c.l.b16 %v465
      %v489 = vunpack.c.l.b16 %v466
      %v490 = vpack.c.b16 %v487, %v486
      %v491 = vpack.c.b16 %v489, %v488
      %v495 = vsel %vm277, %v473, 0
      %v498 = vsel %vm277, %v475, 0
      %v501 = vsel %vm277, %v477, 0
      %v504 = vsel %vm277, %v479, 0
      %v507 = vsel %vm277, %v481, 0
      %509 = vmatprep.subr.bf16.mxu0 0
      %510 = vmatpush1.bf16.msra.mxu0 %v490
      %511 = vmatprep.subr.bf16.mxu0 0
      %512 = vmatpush1.bf16.msra.mxu0 %v491
      %513 = vmatprep.subr.bf16.mxu0 0
      %514 = vmatpush1.bf16.msra.mxu0 0
      %515 = vmatprep.subr.bf16.mxu0 0
      %516 = vmatpush1.bf16.msra.mxu0 0
      %517 = vmatprep.subr.bf16.mxu0 0
      %518 = vmatpush1.bf16.msra.mxu0 0
      %519 = vmatprep.subr.bf16.mxu0 0
      %520 = vmatpush1.bf16.msra.mxu0 0
      %521 = vmatprep.subr.bf16.mxu0 0
      %522 = vmatpush1.bf16.msra.mxu0 0
      %523 = vmatprep.subr.bf16.mxu0 0
      %524 = vmatpush1.bf16.msra.mxu0 0
      %525 = vmatprep.subr.bf16.mxu0 0
      %526 = vmatpush1.bf16.msra.mxu0 0
      %527 = vmatprep.subr.bf16.mxu0 0
      %528 = vmatpush1.bf16.msra.mxu0 0
      %529 = vmatprep.subr.bf16.mxu0 0
      %530 = vmatpush1.bf16.msra.mxu0 0
      %531 = vmatprep.subr.bf16.mxu0 0
      %532 = vmatpush1.bf16.msra.mxu0 0
      %533 = vmatprep.subr.bf16.mxu0 0
      %534 = vmatpush1.bf16.msra.mxu0 0
      %535 = vmatprep.subr.bf16.mxu0 0
      %536 = vmatpush1.bf16.msra.mxu0 0
      %537 = vmatprep.subr.bf16.mxu0 0
      %538 = vmatpush1.bf16.msra.mxu0 0
      %539 = vmatprep.subr.bf16.mxu0 0
      %540 = vmatpush1.bf16.msra.mxu0 0
      %541 = vmatprep.mubr.bf16.mxu0 0
      %542 = vmatmul.mubr.bf16.gmra.mrb[0].mxu0 %v495
      %v543 = vpop.f32.mrb[0].mxu0
      %v544 = vadd.f32 0.0, %v543
      %v545 = vpop.f32.mrb[0].mxu0
      %v546 = vpop.f32.mrb[0].mxu0
      %v547 = vadd.f32 0.0, %v546
      %v548 = vpop.f32.mrb[0].mxu0
      %549 = vmatprep.mubr.bf16.mxu0 0
      %550 = vmatmul.mubr.bf16.gmra.mrb[0].mxu0 %v498
      %v551 = vpop.f32.mrb[0].mxu0
      %v552 = vadd.f32 0.0, %v551
      %v553 = vpop.f32.mrb[0].mxu0
      %v554 = vpop.f32.mrb[0].mxu0
      %v555 = vadd.f32 0.0, %v554
      %v556 = vpop.f32.mrb[0].mxu0
      %557 = vmatprep.mubr.bf16.mxu0 0
      %558 = vmatmul.mubr.bf16.gmra.mrb[0].mxu0 %v501
      %v559 = vpop.f32.mrb[0].mxu0
      %v560 = vadd.f32 0.0, %v559
      %v561 = vpop.f32.mrb[0].mxu0
      %v562 = vpop.f32.mrb[0].mxu0
      %v563 = vadd.f32 0.0, %v562
      %v564 = vpop.f32.mrb[0].mxu0
      %565 = vmatprep.mubr.bf16.mxu0 0
      %566 = vmatmul.mubr.bf16.gmra.mrb[0].mxu0 %v504
      %v567 = vpop.f32.mrb[0].mxu0
      %v568 = vadd.f32 0.0, %v567
      %v569 = vpop.f32.mrb[0].mxu0
      %v570 = vpop.f32.mrb[0].mxu0
      %v571 = vadd.f32 0.0, %v570
      %v572 = vpop.f32.mrb[0].mxu0
      %573 = vmatprep.mubr.bf16.mxu0 0
      %574 = vmatmul.mubr.bf16.gmra.mrb[0].mxu0 %v507
      %v575 = vpop.f32.mrb[0].mxu0
      %v576 = vadd.f32 0.0, %v575
      %v577 = vpop.f32.mrb[0].mxu0
      %v578 = vpop.f32.mrb[0].mxu0
      %v579 = vadd.f32 0.0, %v578
      %v580 = vpop.f32.mrb[0].mxu0
      %581 = vdwg.mxu0
      %v582 = vadd.f32 %v423, %v544
      %v583 = vadd.f32 %v426, %v547
      %v584 = vadd.f32 %v431, %v552
      %v585 = vadd.f32 %v434, %v555
      %v586 = vadd.f32 %v439, %v560
      %v587 = vadd.f32 %v442, %v563
      %v588 = vadd.f32 %v447, %v568
      %v589 = vadd.f32 %v450, %v571
      %v590 = vadd.f32 %v455, %v576
      %v591 = vadd.f32 %v458, %v579
      %v592 = vld [vmem:[%s165 + $0x4] sm:$0xe]
      %v593 = vld [vmem:[%s165 + $0x8] sm:$0xf]
      %v594 = vld [vmem:[%s165 + $0xc] sm:$0xf]
      %v595 = vld [vmem:[%s165 + $0x10] sm:$0xf]
      %v596 = vld [vmem:[%s165 + $0x14] sm:$0xf]
      %v597 = vld [vmem:[%s165 + $0x18] sm:$0xf]
      %v598 = vld [vmem:[%s165 + $0x1c] sm:$0xf]
      %v599 = vld [vmem:[%s165 + $0x20] sm:$0xf]
      %v600 = vld [vmem:[%s165 + $0x24] sm:$0xf]
      %v601 = vld [vmem:[%s165 + $0x28] sm:$0xf]
      %v602 = vld [vmem:[%s165 + $0x2c] sm:$0x1]
      %s603 = scalar_lea.vmem %s1, 48
      %v604 = vld [vmem:[%s603] sm:$0xf]
      %v605 = vld [vmem:[%s603 + $0x4] sm:$0xf]
      %v606 = vld [vmem:[%s603 + $0x8] sm:$0xf]
      %v607 = vld [vmem:[%s603 + $0xc] sm:$0xf]
      %v619 = vunpack.c.l.b16 %v592
      %v620 = vunpack.c.l.b16 %v593
      %v621 = vunpack.c.l.b16 %v594
      %v622 = vunpack.c.l.b16 %v595
      %v623 = vunpack.c.l.b16 %v596
      %v624 = vunpack.c.l.b16 %v597
      %v625 = vunpack.c.l.b16 %v598
      %v626 = vunpack.c.l.b16 %v599
      %v627 = vunpack.c.l.b16 %v600
      %v628 = vunpack.c.l.b16 %v601
      %v629 = vunpack.c.l.b16 %v602
      %v630 = vpack.c.b16 %v620, %v619
      %v631 = vpack.c.b16 %v622, %v621
      %v632 = vpack.c.b16 %v624, %v623
      %v633 = vpack.c.b16 %v626, %v625
      %v634 = vpack.c.b16 %v628, %v627
      %v635 = vpack.c.b16 %v629, %v629
      %v636 = vrot.slane %v630, 1
      %v637 = vrot.slane %v631, 1
      %v638 = vsel %vm470, %v636, %v637
      %v639 = vrot.slane %v632, 1
      %v640 = vsel %vm470, %v637, %v639
      %v641 = vrot.slane %v633, 1
      %v642 = vsel %vm470, %v639, %v641
      %v643 = vrot.slane %v634, 1
      %v644 = vsel %vm470, %v641, %v643
      %v645 = vrot.slane %v635, 1
      %v646 = vsel %vm470, %v643, %v645
      %v651 = vunpack.c.l.b16 %v604
      %v652 = vunpack.c.l.b16 %v605
      %v653 = vunpack.c.l.b16 %v606
      %v654 = vunpack.c.l.b16 %v607
      %v655 = vpack.c.b16 %v652, %v651
      %v656 = vpack.c.b16 %v654, %v653
      %v660 = vsel %vm277, %v638, 0
      %v663 = vsel %vm277, %v640, 0
      %v666 = vsel %vm277, %v642, 0
      %v669 = vsel %vm277, %v644, 0
      %v672 = vsel %vm277, %v646, 0
      %674 = vmatprep.subr.bf16.mxu0 0
      %675 = vmatpush1.bf16.msra.mxu0 %v655
      %676 = vmatprep.subr.bf16.mxu0 0
      %677 = vmatpush1.bf16.msra.mxu0 %v656
      %678 = vmatprep.subr.bf16.mxu0 0
      %679 = vmatpush1.bf16.msra.mxu0 0
      %680 = vmatprep.subr.bf16.mxu0 0
      %681 = vmatpush1.bf16.msra.mxu0 0
      %682 = vmatprep.subr.bf16.mxu0 0
      %683 = vmatpush1.bf16.msra.mxu0 0
      %684 = vmatprep.subr.bf16.mxu0 0
      %685 = vmatpush1.bf16.msra.mxu0 0
      %686 = vmatprep.subr.bf16.mxu0 0
      %687 = vmatpush1.bf16.msra.mxu0 0
      %688 = vmatprep.subr.bf16.mxu0 0
      %689 = vmatpush1.bf16.msra.mxu0 0
      %690 = vmatprep.subr.bf16.mxu0 0
      %691 = vmatpush1.bf16.msra.mxu0 0
      %692 = vmatprep.subr.bf16.mxu0 0
      %693 = vmatpush1.bf16.msra.mxu0 0
      %694 = vmatprep.subr.bf16.mxu0 0
      %695 = vmatpush1.bf16.msra.mxu0 0
      %696 = vmatprep.subr.bf16.mxu0 0
      %697 = vmatpush1.bf16.msra.mxu0 0
      %698 = vmatprep.subr.bf16.mxu0 0
      %699 = vmatpush1.bf16.msra.mxu0 0
      %700 = vmatprep.subr.bf16.mxu0 0
      %701 = vmatpush1.bf16.msra.mxu0 0
      %702 = vmatprep.subr.bf16.mxu0 0
      %703 = vmatpush1.bf16.msra.mxu0 0
      %704 = vmatprep.subr.bf16.mxu0 0
      %705 = vmatpush1.bf16.msra.mxu0 0
      %706 = vmatprep.mubr.bf16.mxu0 0
      %707 = vmatmul.mubr.bf16.gmra.mrb[0].mxu0 %v660
      %v708 = vpop.f32.mrb[0].mxu0
      %v709 = vadd.f32 0.0, %v708
      %v710 = vpop.f32.mrb[0].mxu0
      %v711 = vpop.f32.mrb[0].mxu0
      %v712 = vadd.f32 0.0, %v711
      %v713 = vpop.f32.mrb[0].mxu0
      %714 = vmatprep.mubr.bf16.mxu0 0
      %715 = vmatmul.mubr.bf16.gmra.mrb[0].mxu0 %v663
      %v716 = vpop.f32.mrb[0].mxu0
      %v717 = vadd.f32 0.0, %v716
      %v718 = vpop.f32.mrb[0].mxu0
      %v719 = vpop.f32.mrb[0].mxu0
      %v720 = vadd.f32 0.0, %v719
      %v721 = vpop.f32.mrb[0].mxu0
      %722 = vmatprep.mubr.bf16.mxu0 0
      %723 = vmatmul.mubr.bf16.gmra.mrb[0].mxu0 %v666
      %v724 = vpop.f32.mrb[0].mxu0
      %v725 = vadd.f32 0.0, %v724
      %v726 = vpop.f32.mrb[0].mxu0
      %v727 = vpop.f32.mrb[0].mxu0
      %v728 = vadd.f32 0.0, %v727
      %v729 = vpop.f32.mrb[0].mxu0
      %730 = vmatprep.mubr.bf16.mxu0 0
      %731 = vmatmul.mubr.bf16.gmra.mrb[0].mxu0 %v669
      %v732 = vpop.f32.mrb[0].mxu0
      %v733 = vadd.f32 0.0, %v732
      %v734 = vpop.f32.mrb[0].mxu0
      %v735 = vpop.f32.mrb[0].mxu0
      %v736 = vadd.f32 0.0, %v735
      %v737 = vpop.f32.mrb[0].mxu0
      %738 = vmatprep.mubr.bf16.mxu0 0
      %739 = vmatmul.mubr.bf16.gmra.mrb[0].mxu0 %v672
      %v740 = vpop.f32.mrb[0].mxu0
      %v741 = vadd.f32 0.0, %v740
      %v742 = vpop.f32.mrb[0].mxu0
      %v743 = vpop.f32.mrb[0].mxu0
      %v744 = vadd.f32 0.0, %v743
      %v745 = vpop.f32.mrb[0].mxu0
      %746 = vdwg.mxu0
      %v747 = vadd.f32 %v582, %v709
      %v748 = vadd.f32 %v583, %v712
      %v749 = vadd.f32 %v584, %v717
      %v750 = vadd.f32 %v585, %v720
      %v751 = vadd.f32 %v586, %v725
      %v752 = vadd.f32 %v587, %v728
      %v753 = vadd.f32 %v588, %v733
      %v754 = vadd.f32 %v589, %v736
      %v755 = vadd.f32 %v590, %v741
      %v756 = vadd.f32 %v591, %v744
      %v757 = vld [vmem:[%s165 + $0x2c] sm:$0x3]
      %s758 = scalar_lea.vmem %s1, 64
      %v759 = vld [vmem:[%s758] sm:$0xf]
      %v760 = vld [vmem:[%s758 + $0x4] sm:$0xf]
      %v761 = vld [vmem:[%s758 + $0x8] sm:$0xf]
      %v762 = vld [vmem:[%s758 + $0xc] sm:$0xf]
      %v764 = vunpack.c.l.b16 %v757
      %v765 = vpack.c.b16 %v764, %v764
      %vm766 = vsmask.f32 6400
      %v768 = vshrl.u32 %v630, 16
      %v770 = vrot.slane %v768, 1
      %v771 = vshll.u32 %v630, 16
      %v773 = vrot.slane %v771, 2
      %v774 = vor.u32 %v770, %v773
      %v776 = vshrl.u32 %v631, 16
      %v778 = vrot.slane %v776, 1
      %v779 = vshll.u32 %v631, 16
      %v781 = vrot.slane %v779, 2
      %v782 = vor.u32 %v778, %v781
      %v783 = vsel %vm766, %v774, %v782
      %v785 = vshrl.u32 %v632, 16
      %v787 = vrot.slane %v785, 1
      %v788 = vshll.u32 %v632, 16
      %v790 = vrot.slane %v788, 2
      %v791 = vor.u32 %v787, %v790
      %v792 = vsel %vm766, %v782, %v791
      %v794 = vshrl.u32 %v633, 16
      %v796 = vrot.slane %v794, 1
      %v797 = vshll.u32 %v633, 16
      %v799 = vrot.slane %v797, 2
      %v800 = vor.u32 %v796, %v799
      %v801 = vsel %vm766, %v791, %v800
      %v803 = vshrl.u32 %v634, 16
      %v805 = vrot.slane %v803, 1
      %v806 = vshll.u32 %v634, 16
      %v808 = vrot.slane %v806, 2
      %v809 = vor.u32 %v805, %v808
      %v810 = vsel %vm766, %v800, %v809
      %v812 = vshrl.u32 %v765, 16
      %v814 = vrot.slane %v812, 1
      %v815 = vshll.u32 %v765, 16
      %v817 = vrot.slane %v815, 2
      %v818 = vor.u32 %v814, %v817
      %v819 = vsel %vm766, %v809, %v818
      %v824 = vunpack.c.l.b16 %v759
      %v825 = vunpack.c.l.b16 %v760
      %v826 = vunpack.c.l.b16 %v761
      %v827 = vunpack.c.l.b16 %v762
      %v828 = vpack.c.b16 %v825, %v824
      %v829 = vpack.c.b16 %v827, %v826
      %v833 = vsel %vm277, %v783, 0
      %v836 = vsel %vm277, %v792, 0
      %v839 = vsel %vm277, %v801, 0
      %v842 = vsel %vm277, %v810, 0
      %v845 = vsel %vm277, %v819, 0
      %847 = vmatprep.subr.bf16.mxu0 0
      %848 = vmatpush1.bf16.msra.mxu0 %v828
      %849 = vmatprep.subr.bf16.mxu0 0
      %850 = vmatpush1.bf16.msra.mxu0 %v829
      %851 = vmatprep.subr.bf16.mxu0 0
      %852 = vmatpush1.bf16.msra.mxu0 0
      %853 = vmatprep.subr.bf16.mxu0 0
      %854 = vmatpush1.bf16.msra.mxu0 0
      %855 = vmatprep.subr.bf16.mxu0 0
      %856 = vmatpush1.bf16.msra.mxu0 0
      %857 = vmatprep.subr.bf16.mxu0 0
      %858 = vmatpush1.bf16.msra.mxu0 0
      %859 = vmatprep.subr.bf16.mxu0 0
      %860 = vmatpush1.bf16.msra.mxu0 0
      %861 = vmatprep.subr.bf16.mxu0 0
      %862 = vmatpush1.bf16.msra.mxu0 0
      %863 = vmatprep.subr.bf16.mxu0 0
      %864 = vmatpush1.bf16.msra.mxu0 0
      %865 = vmatprep.subr.bf16.mxu0 0
      %866 = vmatpush1.bf16.msra.mxu0 0
      %867 = vmatprep.subr.bf16.mxu0 0
      %868 = vmatpush1.bf16.msra.mxu0 0
      %869 = vmatprep.subr.bf16.mxu0 0
      %870 = vmatpush1.bf16.msra.mxu0 0
      %871 = vmatprep.subr.bf16.mxu0 0
      %872 = vmatpush1.bf16.msra.mxu0 0
      %873 = vmatprep.subr.bf16.mxu0 0
      %874 = vmatpush1.bf16.msra.mxu0 0
      %875 = vmatprep.subr.bf16.mxu0 0
      %876 = vmatpush1.bf16.msra.mxu0 0
      %877 = vmatprep.subr.bf16.mxu0 0
      %878 = vmatpush1.bf16.msra.mxu0 0
      %879 = vmatprep.mubr.bf16.mxu0 0
      %880 = vmatmul.mubr.bf16.gmra.mrb[0].mxu0 %v833
      %v881 = vpop.f32.mrb[0].mxu0
      %v882 = vadd.f32 0.0, %v881
      %v883 = vpop.f32.mrb[0].mxu0
      %v884 = vpop.f32.mrb[0].mxu0
      %v885 = vadd.f32 0.0, %v884
      %v886 = vpop.f32.mrb[0].mxu0
      %887 = vmatprep.mubr.bf16.mxu0 0
      %888 = vmatmul.mubr.bf16.gmra.mrb[0].mxu0 %v836
      %v889 = vpop.f32.mrb[0].mxu0
      %v890 = vadd.f32 0.0, %v889
      %v891 = vpop.f32.mrb[0].mxu0
      %v892 = vpop.f32.mrb[0].mxu0
      %v893 = vadd.f32 0.0, %v892
      %v894 = vpop.f32.mrb[0].mxu0
      %895 = vmatprep.mubr.bf16.mxu0 0
      %896 = vmatmul.mubr.bf16.gmra.mrb[0].mxu0 %v839
      %v897 = vpop.f32.mrb[0].mxu0
      %v898 = vadd.f32 0.0, %v897
      %v899 = vpop.f32.mrb[0].mxu0
      %v900 = vpop.f32.mrb[0].mxu0
      %v901 = vadd.f32 0.0, %v900
      %v902 = vpop.f32.mrb[0].mxu0
      %903 = vmatprep.mubr.bf16.mxu0 0
      %904 = vmatmul.mubr.bf16.gmra.mrb[0].mxu0 %v842
      %v905 = vpop.f32.mrb[0].mxu0
      %v906 = vadd.f32 0.0, %v905
      %v907 = vpop.f32.mrb[0].mxu0
      %v908 = vpop.f32.mrb[0].mxu0
      %v909 = vadd.f32 0.0, %v908
      %v910 = vpop.f32.mrb[0].mxu0
      %911 = vmatprep.mubr.bf16.mxu0 0
      %912 = vmatmul.mubr.bf16.gmra.mrb[0].mxu0 %v845
      %v913 = vpop.f32.mrb[0].mxu0
      %v914 = vadd.f32 0.0, %v913
      %v915 = vpop.f32.mrb[0].mxu0
      %v916 = vpop.f32.mrb[0].mxu0
      %v917 = vadd.f32 0.0, %v916
      %v918 = vpop.f32.mrb[0].mxu0
      %919 = vdwg.mxu0
      %v920 = vadd.f32 %v747, %v882
      %v921 = vadd.f32 %v748, %v885
      %v922 = vadd.f32 %v749, %v890
      %v923 = vadd.f32 %v750, %v893
      %v924 = vadd.f32 %v751, %v898
      %v925 = vadd.f32 %v752, %v901
      %v926 = vadd.f32 %v753, %v906
      %v927 = vadd.f32 %v754, %v909
      %v928 = vadd.f32 %v755, %v914
      %v929 = vadd.f32 %v756, %v917
      %v930 = vld [vmem:[%s165 + $0x4] sm:$0xc]
      %s931 = scalar_lea.vmem %s1, 80
      %v932 = vld [vmem:[%s931] sm:$0xf]
      %v933 = vld [vmem:[%s931 + $0x4] sm:$0xf]
      %v934 = vld [vmem:[%s931 + $0x8] sm:$0xf]
      %v935 = vld [vmem:[%s931 + $0xc] sm:$0xf]
      %v937 = vunpack.c.l.b16 %v930
      %v938 = vpack.c.b16 %v620, %v937
      %vm939 = vcmask 1045504
      %v940 = vrot.slane %v938, 2
      %v941 = vrot.slane %v631, 2
      %v942 = vsel %vm939, %v940, %v941
      %v943 = vrot.slane %v632, 2
      %v944 = vsel %vm939, %v941, %v943
      %v945 = vrot.slane %v633, 2
      %v946 = vsel %vm939, %v943, %v945
      %v947 = vrot.slane %v634, 2
      %v948 = vsel %vm939, %v945, %v947
      %v949 = vrot.slane %v765, 2
      %v950 = vsel %vm939, %v947, %v949
      %v955 = vunpack.c.l.b16 %v932
      %v956 = vunpack.c.l.b16 %v933
      %v957 = vunpack.c.l.b16 %v934
      %v958 = vunpack.c.l.b16 %v935
      %v959 = vpack.c.b16 %v956, %v955
      %v960 = vpack.c.b16 %v958, %v957
      %v964 = vsel %vm277, %v942, 0
      %v967 = vsel %vm277, %v944, 0
      %v970 = vsel %vm277, %v946, 0
      %v973 = vsel %vm277, %v948, 0
      %v976 = vsel %vm277, %v950, 0
      %978 = vmatprep.subr.bf16.mxu0 0
      %979 = vmatpush1.bf16.msra.mxu0 %v959
      %980 = vmatprep.subr.bf16.mxu0 0
      %981 = vmatpush1.bf16.msra.mxu0 %v960
      %982 = vmatprep.subr.bf16.mxu0 0
      %983 = vmatpush1.bf16.msra.mxu0 0
      %984 = vmatprep.subr.bf16.mxu0 0
      %985 = vmatpush1.bf16.msra.mxu0 0
      %986 = vmatprep.subr.bf16.mxu0 0
      %987 = vmatpush1.bf16.msra.mxu0 0
      %988 = vmatprep.subr.bf16.mxu0 0
      %989 = vmatpush1.bf16.msra.mxu0 0
      %990 = vmatprep.subr.bf16.mxu0 0
      %991 = vmatpush1.bf16.msra.mxu0 0
      %992 = vmatprep.subr.bf16.mxu0 0
      %993 = vmatpush1.bf16.msra.mxu0 0
      %994 = vmatprep.subr.bf16.mxu0 0
      %995 = vmatpush1.bf16.msra.mxu0 0
      %996 = vmatprep.subr.bf16.mxu0 0
      %997 = vmatpush1.bf16.msra.mxu0 0
      %998 = vmatprep.subr.bf16.mxu0 0
      %999 = vmatpush1.bf16.msra.mxu0 0
      %1000 = vmatprep.subr.bf16.mxu0 0
      %1001 = vmatpush1.bf16.msra.mxu0 0
      %1002 = vmatprep.subr.bf16.mxu0 0
      %1003 = vmatpush1.bf16.msra.mxu0 0
      %1004 = vmatprep.subr.bf16.mxu0 0
      %1005 = vmatpush1.bf16.msra.mxu0 0
      %1006 = vmatprep.subr.bf16.mxu0 0
      %1007 = vmatpush1.bf16.msra.mxu0 0
      %1008 = vmatprep.subr.bf16.mxu0 0
      %1009 = vmatpush1.bf16.msra.mxu0 0
      %1010 = vmatprep.mubr.bf16.mxu0 0
      %1011 = vmatmul.mubr.bf16.gmra.mrb[0].mxu0 %v964
      %v1012 = vpop.f32.mrb[0].mxu0
      %v1013 = vadd.f32 0.0, %v1012
      %v1014 = vpop.f32.mrb[0].mxu0
      %v1015 = vpop.f32.mrb[0].mxu0
      %v1016 = vadd.f32 0.0, %v1015
      %v1017 = vpop.f32.mrb[0].mxu0
      %1018 = vmatprep.mubr.bf16.mxu0 0
      %1019 = vmatmul.mubr.bf16.gmra.mrb[0].mxu0 %v967
      %v1020 = vpop.f32.mrb[0].mxu0
      %v1021 = vadd.f32 0.0, %v1020
      %v1022 = vpop.f32.mrb[0].mxu0
      %v1023 = vpop.f32.mrb[0].mxu0
      %v1024 = vadd.f32 0.0, %v1023
      %v1025 = vpop.f32.mrb[0].mxu0
      %1026 = vmatprep.mubr.bf16.mxu0 0
      %1027 = vmatmul.mubr.bf16.gmra.mrb[0].mxu0 %v970
      %v1028 = vpop.f32.mrb[0].mxu0
      %v1029 = vadd.f32 0.0, %v1028
      %v1030 = vpop.f32.mrb[0].mxu0
      %v1031 = vpop.f32.mrb[0].mxu0
      %v1032 = vadd.f32 0.0, %v1031
      %v1033 = vpop.f32.mrb[0].mxu0
      %1034 = vmatprep.mubr.bf16.mxu0 0
      %1035 = vmatmul.mubr.bf16.gmra.mrb[0].mxu0 %v973
      %v1036 = vpop.f32.mrb[0].mxu0
      %v1037 = vadd.f32 0.0, %v1036
      %v1038 = vpop.f32.mrb[0].mxu0
      %v1039 = vpop.f32.mrb[0].mxu0
      %v1040 = vadd.f32 0.0, %v1039
      %v1041 = vpop.f32.mrb[0].mxu0
      %1042 = vmatprep.mubr.bf16.mxu0 0
      %1043 = vmatmul.mubr.bf16.gmra.mrb[0].mxu0 %v976
      %v1044 = vpop.f32.mrb[0].mxu0
      %v1045 = vadd.f32 0.0, %v1044
      %v1046 = vpop.f32.mrb[0].mxu0
      %v1047 = vpop.f32.mrb[0].mxu0
      %v1048 = vadd.f32 0.0, %v1047
      %v1049 = vpop.f32.mrb[0].mxu0
      %1050 = vdwg.mxu0
      %v1051 = vadd.f32 %v920, %v1013
      %v1052 = vadd.f32 %v921, %v1016
      %v1053 = vadd.f32 %v922, %v1021
      %v1054 = vadd.f32 %v923, %v1024
      %v1055 = vadd.f32 %v924, %v1029
      %v1056 = vadd.f32 %v925, %v1032
      %v1057 = vadd.f32 %v926, %v1037
      %v1058 = vadd.f32 %v927, %v1040
      %v1059 = vadd.f32 %v928, %v1045
      %v1060 = vadd.f32 %v929, %v1048
      %v1061 = vld [vmem:[%s165 + $0x8] sm:$0xc]
      %v1062 = vld [vmem:[%s165 + $0xc] sm:$0xf]
      %v1063 = vld [vmem:[%s165 + $0x10] sm:$0xf]
      %v1064 = vld [vmem:[%s165 + $0x14] sm:$0xf]
      %v1065 = vld [vmem:[%s165 + $0x18] sm:$0xf]
      %v1066 = vld [vmem:[%s165 + $0x1c] sm:$0xf]
      %v1067 = vld [vmem:[%s165 + $0x20] sm:$0xf]
      %v1068 = vld [vmem:[%s165 + $0x24] sm:$0xf]
      %v1069 = vld [vmem:[%s165 + $0x28] sm:$0xf]
      %v1070 = vld [vmem:[%s165 + $0x2c] sm:$0xf]
      %v1071 = vld [vmem:[%s165 + $0x30] sm:$0x3]
      %s1072 = scalar_lea.vmem %s1, 96
      %v1073 = vld [vmem:[%s1072] sm:$0xf]
      %v1074 = vld [vmem:[%s1072 + $0x4] sm:$0xf]
      %v1075 = vld [vmem:[%s1072 + $0x8] sm:$0xf]
      %v1076 = vld [vmem:[%s1072 + $0xc] sm:$0xf]
      %v1088 = vunpack.c.l.b16 %v1061
      %v1089 = vunpack.c.l.b16 %v1062
      %v1090 = vunpack.c.l.b16 %v1063
      %v1091 = vunpack.c.l.b16 %v1064
      %v1092 = vunpack.c.l.b16 %v1065
      %v1093 = vunpack.c.l.b16 %v1066
      %v1094 = vunpack.c.l.b16 %v1067
      %v1095 = vunpack.c.l.b16 %v1068
      %v1096 = vunpack.c.l.b16 %v1069
      %v1097 = vunpack.c.l.b16 %v1070
      %v1098 = vunpack.c.l.b16 %v1071
      %v1099 = vpack.c.b16 %v1089, %v1088
      %v1100 = vpack.c.b16 %v1091, %v1090
      %v1101 = vpack.c.b16 %v1093, %v1092
      %v1102 = vpack.c.b16 %v1095, %v1094
      %v1103 = vpack.c.b16 %v1097, %v1096
      %v1104 = vpack.c.b16 %v1098, %v1098
      %v1105 = vrot.slane %v1099, 2
      %v1106 = vrot.slane %v1100, 2
      %v1107 = vsel %vm939, %v1105, %v1106
      %v1108 = vrot.slane %v1101, 2
      %v1109 = vsel %vm939, %v1106, %v1108
      %v1110 = vrot.slane %v1102, 2
      %v1111 = vsel %vm939, %v1108, %v1110
      %v1112 = vrot.slane %v1103, 2
      %v1113 = vsel %vm939, %v1110, %v1112
      %v1114 = vrot.slane %v1104, 2
      %v1115 = vsel %vm939, %v1112, %v1114
      %v1120 = vunpack.c.l.b16 %v1073
      %v1121 = vunpack.c.l.b16 %v1074
      %v1122 = vunpack.c.l.b16 %v1075
      %v1123 = vunpack.c.l.b16 %v1076
      %v1124 = vpack.c.b16 %v1121, %v1120
      %v1125 = vpack.c.b16 %v1123, %v1122
      %v1129 = vsel %vm277, %v1107, 0
      %v1132 = vsel %vm277, %v1109, 0
      %v1135 = vsel %vm277, %v1111, 0
      %v1138 = vsel %vm277, %v1113, 0
      %v1141 = vsel %vm277, %v1115, 0
      %1143 = vmatprep.subr.bf16.mxu0 0
      %1144 = vmatpush1.bf16.msra.mxu0 %v1124
      %1145 = vmatprep.subr.bf16.mxu0 0
      %1146 = vmatpush1.bf16.msra.mxu0 %v1125
      %1147 = vmatprep.subr.bf16.mxu0 0
      %1148 = vmatpush1.bf16.msra.mxu0 0
      %1149 = vmatprep.subr.bf16.mxu0 0
      %1150 = vmatpush1.bf16.msra.mxu0 0
      %1151 = vmatprep.subr.bf16.mxu0 0
      %1152 = vmatpush1.bf16.msra.mxu0 0
      %1153 = vmatprep.subr.bf16.mxu0 0
      %1154 = vmatpush1.bf16.msra.mxu0 0
      %1155 = vmatprep.subr.bf16.mxu0 0
      %1156 = vmatpush1.bf16.msra.mxu0 0
      %1157 = vmatprep.subr.bf16.mxu0 0
      %1158 = vmatpush1.bf16.msra.mxu0 0
      %1159 = vmatprep.subr.bf16.mxu0 0
      %1160 = vmatpush1.bf16.msra.mxu0 0
      %1161 = vmatprep.subr.bf16.mxu0 0
      %1162 = vmatpush1.bf16.msra.mxu0 0
      %1163 = vmatprep.subr.bf16.mxu0 0
      %1164 = vmatpush1.bf16.msra.mxu0 0
      %1165 = vmatprep.subr.bf16.mxu0 0
      %1166 = vmatpush1.bf16.msra.mxu0 0
      %1167 = vmatprep.subr.bf16.mxu0 0
      %1168 = vmatpush1.bf16.msra.mxu0 0
      %1169 = vmatprep.subr.bf16.mxu0 0
      %1170 = vmatpush1.bf16.msra.mxu0 0
      %1171 = vmatprep.subr.bf16.mxu0 0
      %1172 = vmatpush1.bf16.msra.mxu0 0
      %1173 = vmatprep.subr.bf16.mxu0 0
      %1174 = vmatpush1.bf16.msra.mxu0 0
      %1175 = vmatprep.mubr.bf16.mxu0 0
      %1176 = vmatmul.mubr.bf16.gmra.mrb[0].mxu0 %v1129
      %v1177 = vpop.f32.mrb[0].mxu0
      %v1178 = vadd.f32 0.0, %v1177
      %v1179 = vpop.f32.mrb[0].mxu0
      %v1180 = vpop.f32.mrb[0].mxu0
      %v1181 = vadd.f32 0.0, %v1180
      %v1182 = vpop.f32.mrb[0].mxu0
      %1183 = vmatprep.mubr.bf16.mxu0 0
      %1184 = vmatmul.mubr.bf16.gmra.mrb[0].mxu0 %v1132
      %v1185 = vpop.f32.mrb[0].mxu0
      %v1186 = vadd.f32 0.0, %v1185
      %v1187 = vpop.f32.mrb[0].mxu0
      %v1188 = vpop.f32.mrb[0].mxu0
      %v1189 = vadd.f32 0.0, %v1188
      %v1190 = vpop.f32.mrb[0].mxu0
      %1191 = vmatprep.mubr.bf16.mxu0 0
      %1192 = vmatmul.mubr.bf16.gmra.mrb[0].mxu0 %v1135
      %v1193 = vpop.f32.mrb[0].mxu0
      %v1194 = vadd.f32 0.0, %v1193
      %v1195 = vpop.f32.mrb[0].mxu0
      %v1196 = vpop.f32.mrb[0].mxu0
      %v1197 = vadd.f32 0.0, %v1196
      %v1198 = vpop.f32.mrb[0].mxu0
      %1199 = vmatprep.mubr.bf16.mxu0 0
      %1200 = vmatmul.mubr.bf16.gmra.mrb[0].mxu0 %v1138
      %v1201 = vpop.f32.mrb[0].mxu0
      %v1202 = vadd.f32 0.0, %v1201
      %v1203 = vpop.f32.mrb[0].mxu0
      %v1204 = vpop.f32.mrb[0].mxu0
      %v1205 = vadd.f32 0.0, %v1204
      %v1206 = vpop.f32.mrb[0].mxu0
      %1207 = vmatprep.mubr.bf16.mxu0 0
      %1208 = vmatmul.mubr.bf16.gmra.mrb[0].mxu0 %v1141
      %v1209 = vpop.f32.mrb[0].mxu0
      %v1210 = vadd.f32 0.0, %v1209
      %v1211 = vpop.f32.mrb[0].mxu0
      %v1212 = vpop.f32.mrb[0].mxu0
      %v1213 = vadd.f32 0.0, %v1212
      %v1214 = vpop.f32.mrb[0].mxu0
      %1215 = vdwg.mxu0
      %v1216 = vadd.f32 %v1051, %v1178
      %v1217 = vadd.f32 %v1052, %v1181
      %v1218 = vadd.f32 %v1053, %v1186
      %v1219 = vadd.f32 %v1054, %v1189
      %v1220 = vadd.f32 %v1055, %v1194
      %v1221 = vadd.f32 %v1056, %v1197
      %v1222 = vadd.f32 %v1057, %v1202
      %v1223 = vadd.f32 %v1058, %v1205
      %v1224 = vadd.f32 %v1059, %v1210
      %v1225 = vadd.f32 %v1060, %v1213
      %v1226 = vld [vmem:[%s165 + $0x30] sm:$0x7]
      %s1227 = scalar_lea.vmem %s1, 112
      %v1228 = vld [vmem:[%s1227] sm:$0xf]
      %v1229 = vld [vmem:[%s1227 + $0x4] sm:$0xf]
      %v1230 = vld [vmem:[%s1227 + $0x8] sm:$0xf]
      %v1231 = vld [vmem:[%s1227 + $0xc] sm:$0xf]
      %v1233 = vunpack.c.l.b16 %v1226
      %v1234 = vpack.c.b16 %v1233, %v1233
      %vm1235 = vsmask.f32 5376
      %v1237 = vshrl.u32 %v1099, 16
      %v1239 = vrot.slane %v1237, 2
      %v1240 = vshll.u32 %v1099, 16
      %v1242 = vrot.slane %v1240, 3
      %v1243 = vor.u32 %v1239, %v1242
      %v1245 = vshrl.u32 %v1100, 16
      %v1247 = vrot.slane %v1245, 2
      %v1248 = vshll.u32 %v1100, 16
      %v1250 = vrot.slane %v1248, 3
      %v1251 = vor.u32 %v1247, %v1250
      %v1252 = vsel %vm1235, %v1243, %v1251
      %v1254 = vshrl.u32 %v1101, 16
      %v1256 = vrot.slane %v1254, 2
      %v1257 = vshll.u32 %v1101, 16
      %v1259 = vrot.slane %v1257, 3
      %v1260 = vor.u32 %v1256, %v1259
      %v1261 = vsel %vm1235, %v1251, %v1260
      %v1263 = vshrl.u32 %v1102, 16
      %v1265 = vrot.slane %v1263, 2
      %v1266 = vshll.u32 %v1102, 16
      %v1268 = vrot.slane %v1266, 3
      %v1269 = vor.u32 %v1265, %v1268
      %v1270 = vsel %vm1235, %v1260, %v1269
      %v1272 = vshrl.u32 %v1103, 16
      %v1274 = vrot.slane %v1272, 2
      %v1275 = vshll.u32 %v1103, 16
      %v1277 = vrot.slane %v1275, 3
      %v1278 = vor.u32 %v1274, %v1277
      %v1279 = vsel %vm1235, %v1269, %v1278
      %v1281 = vshrl.u32 %v1234, 16
      %v1283 = vrot.slane %v1281, 2
      %v1284 = vshll.u32 %v1234, 16
      %v1286 = vrot.slane %v1284, 3
      %v1287 = vor.u32 %v1283, %v1286
      %v1288 = vsel %vm1235, %v1278, %v1287
      %v1293 = vunpack.c.l.b16 %v1228
      %v1294 = vunpack.c.l.b16 %v1229
      %v1295 = vunpack.c.l.b16 %v1230
      %v1296 = vunpack.c.l.b16 %v1231
      %v1297 = vpack.c.b16 %v1294, %v1293
      %v1298 = vpack.c.b16 %v1296, %v1295
      %v1302 = vsel %vm277, %v1252, 0
      %v1305 = vsel %vm277, %v1261, 0
      %v1308 = vsel %vm277, %v1270, 0
      %v1311 = vsel %vm277, %v1279, 0
      %v1314 = vsel %vm277, %v1288, 0
      %1316 = vmatprep.subr.bf16.mxu0 0
      %1317 = vmatpush1.bf16.msra.mxu0 %v1297
      %1318 = vmatprep.subr.bf16.mxu0 0
      %1319 = vmatpush1.bf16.msra.mxu0 %v1298
      %1320 = vmatprep.subr.bf16.mxu0 0
      %1321 = vmatpush1.bf16.msra.mxu0 0
      %1322 = vmatprep.subr.bf16.mxu0 0
      %1323 = vmatpush1.bf16.msra.mxu0 0
      %1324 = vmatprep.subr.bf16.mxu0 0
      %1325 = vmatpush1.bf16.msra.mxu0 0
      %1326 = vmatprep.subr.bf16.mxu0 0
      %1327 = vmatpush1.bf16.msra.mxu0 0
      %1328 = vmatprep.subr.bf16.mxu0 0
      %1329 = vmatpush1.bf16.msra.mxu0 0
      %1330 = vmatprep.subr.bf16.mxu0 0
      %1331 = vmatpush1.bf16.msra.mxu0 0
      %1332 = vmatprep.subr.bf16.mxu0 0
      %1333 = vmatpush1.bf16.msra.mxu0 0
      %1334 = vmatprep.subr.bf16.mxu0 0
      %1335 = vmatpush1.bf16.msra.mxu0 0
      %1336 = vmatprep.subr.bf16.mxu0 0
      %1337 = vmatpush1.bf16.msra.mxu0 0
      %1338 = vmatprep.subr.bf16.mxu0 0
      %1339 = vmatpush1.bf16.msra.mxu0 0
      %1340 = vmatprep.subr.bf16.mxu0 0
      %1341 = vmatpush1.bf16.msra.mxu0 0
      %1342 = vmatprep.subr.bf16.mxu0 0
      %1343 = vmatpush1.bf16.msra.mxu0 0
      %1344 = vmatprep.subr.bf16.mxu0 0
      %1345 = vmatpush1.bf16.msra.mxu0 0
      %1346 = vmatprep.subr.bf16.mxu0 0
      %1347 = vmatpush1.bf16.msra.mxu0 0
      %1348 = vmatprep.mubr.bf16.mxu0 0
      %1349 = vmatmul.mubr.bf16.gmra.mrb[0].mxu0 %v1302
      %v1350 = vpop.f32.mrb[0].mxu0
      %v1351 = vadd.f32 0.0, %v1350
      %v1352 = vpop.f32.mrb[0].mxu0
      %v1353 = vpop.f32.mrb[0].mxu0
      %v1354 = vadd.f32 0.0, %v1353
      %v1355 = vpop.f32.mrb[0].mxu0
      %1356 = vmatprep.mubr.bf16.mxu0 0
      %1357 = vmatmul.mubr.bf16.gmra.mrb[0].mxu0 %v1305
      %v1358 = vpop.f32.mrb[0].mxu0
      %v1359 = vadd.f32 0.0, %v1358
      %v1360 = vpop.f32.mrb[0].mxu0
      %v1361 = vpop.f32.mrb[0].mxu0
      %v1362 = vadd.f32 0.0, %v1361
      %v1363 = vpop.f32.mrb[0].mxu0
      %1364 = vmatprep.mubr.bf16.mxu0 0
      %1365 = vmatmul.mubr.bf16.gmra.mrb[0].mxu0 %v1308
      %v1366 = vpop.f32.mrb[0].mxu0
      %v1367 = vadd.f32 0.0, %v1366
      %v1368 = vpop.f32.mrb[0].mxu0
      %v1369 = vpop.f32.mrb[0].mxu0
      %v1370 = vadd.f32 0.0, %v1369
      %v1371 = vpop.f32.mrb[0].mxu0
      %1372 = vmatprep.mubr.bf16.mxu0 0
      %1373 = vmatmul.mubr.bf16.gmra.mrb[0].mxu0 %v1311
      %v1374 = vpop.f32.mrb[0].mxu0
      %v1375 = vadd.f32 0.0, %v1374
      %v1376 = vpop.f32.mrb[0].mxu0
      %v1377 = vpop.f32.mrb[0].mxu0
      %v1378 = vadd.f32 0.0, %v1377
      %v1379 = vpop.f32.mrb[0].mxu0
      %1380 = vmatprep.mubr.bf16.mxu0 0
      %1381 = vmatmul.mubr.bf16.gmra.mrb[0].mxu0 %v1314
      %v1382 = vpop.f32.mrb[0].mxu0
      %v1383 = vadd.f32 0.0, %v1382
      %v1384 = vpop.f32.mrb[0].mxu0
      %v1385 = vpop.f32.mrb[0].mxu0
      %v1386 = vadd.f32 0.0, %v1385
      %v1387 = vpop.f32.mrb[0].mxu0
      %1388 = vdwg.mxu0
      %v1389 = vadd.f32 %v1216, %v1351
      %v1390 = vadd.f32 %v1217, %v1354
      %v1391 = vadd.f32 %v1218, %v1359
      %v1392 = vadd.f32 %v1219, %v1362
      %v1393 = vadd.f32 %v1220, %v1367
      %v1394 = vadd.f32 %v1221, %v1370
      %v1395 = vadd.f32 %v1222, %v1375
      %v1396 = vadd.f32 %v1223, %v1378
      %v1397 = vadd.f32 %v1224, %v1383
      %v1398 = vadd.f32 %v1225, %v1386
      %v1399 = vld [vmem:[%s165 + $0x8] sm:$0x8]
      %s1400 = scalar_lea.vmem %s1, 128
      %v1401 = vld [vmem:[%s1400] sm:$0xf]
      %v1402 = vld [vmem:[%s1400 + $0x4] sm:$0xf]
      %v1403 = vld [vmem:[%s1400 + $0x8] sm:$0xf]
      %v1404 = vld [vmem:[%s1400 + $0xc] sm:$0xf]
      %v1406 = vunpack.c.l.b16 %v1399
      %v1407 = vpack.c.b16 %v1089, %v1406
      %vm1408 = vcmask 1044480
      %v1409 = vrot.slane %v1407, 3
      %v1410 = vrot.slane %v1100, 3
      %v1411 = vsel %vm1408, %v1409, %v1410
      %v1412 = vrot.slane %v1101, 3
      %v1413 = vsel %vm1408, %v1410, %v1412
      %v1414 = vrot.slane %v1102, 3
      %v1415 = vsel %vm1408, %v1412, %v1414
      %v1416 = vrot.slane %v1103, 3
      %v1417 = vsel %vm1408, %v1414, %v1416
      %v1418 = vrot.slane %v1234, 3
      %v1419 = vsel %vm1408, %v1416, %v1418
      %v1424 = vunpack.c.l.b16 %v1401
      %v1425 = vunpack.c.l.b16 %v1402
      %v1426 = vunpack.c.l.b16 %v1403
      %v1427 = vunpack.c.l.b16 %v1404
      %v1428 = vpack.c.b16 %v1425, %v1424
      %v1429 = vpack.c.b16 %v1427, %v1426
      %v1433 = vsel %vm277, %v1411, 0
      %v1436 = vsel %vm277, %v1413, 0
      %v1439 = vsel %vm277, %v1415, 0
      %v1442 = vsel %vm277, %v1417, 0
      %v1445 = vsel %vm277, %v1419, 0
      %1447 = vmatprep.subr.bf16.mxu0 0
      %1448 = vmatpush1.bf16.msra.mxu0 %v1428
      %1449 = vmatprep.subr.bf16.mxu0 0
      %1450 = vmatpush1.bf16.msra.mxu0 %v1429
      %1451 = vmatprep.subr.bf16.mxu0 0
      %1452 = vmatpush1.bf16.msra.mxu0 0
      %1453 = vmatprep.subr.bf16.mxu0 0
      %1454 = vmatpush1.bf16.msra.mxu0 0
      %1455 = vmatprep.subr.bf16.mxu0 0
      %1456 = vmatpush1.bf16.msra.mxu0 0
      %1457 = vmatprep.subr.bf16.mxu0 0
      %1458 = vmatpush1.bf16.msra.mxu0 0
      %1459 = vmatprep.subr.bf16.mxu0 0
      %1460 = vmatpush1.bf16.msra.mxu0 0
      %1461 = vmatprep.subr.bf16.mxu0 0
      %1462 = vmatpush1.bf16.msra.mxu0 0
      %1463 = vmatprep.subr.bf16.mxu0 0
      %1464 = vmatpush1.bf16.msra.mxu0 0
      %1465 = vmatprep.subr.bf16.mxu0 0
      %1466 = vmatpush1.bf16.msra.mxu0 0
      %1467 = vmatprep.subr.bf16.mxu0 0
      %1468 = vmatpush1.bf16.msra.mxu0 0
      %1469 = vmatprep.subr.bf16.mxu0 0
      %1470 = vmatpush1.bf16.msra.mxu0 0
      %1471 = vmatprep.subr.bf16.mxu0 0
      %1472 = vmatpush1.bf16.msra.mxu0 0
      %1473 = vmatprep.subr.bf16.mxu0 0
      %1474 = vmatpush1.bf16.msra.mxu0 0
      %1475 = vmatprep.subr.bf16.mxu0 0
      %1476 = vmatpush1.bf16.msra.mxu0 0
      %1477 = vmatprep.subr.bf16.mxu0 0
      %1478 = vmatpush1.bf16.msra.mxu0 0
      %1479 = vmatprep.mubr.bf16.mxu0 0
      %1480 = vmatmul.mubr.bf16.gmra.mrb[0].mxu0 %v1433
      %v1481 = vpop.f32.mrb[0].mxu0
      %v1482 = vadd.f32 0.0, %v1481
      %v1483 = vpop.f32.mrb[0].mxu0
      %v1484 = vpop.f32.mrb[0].mxu0
      %v1485 = vadd.f32 0.0, %v1484
      %v1486 = vpop.f32.mrb[0].mxu0
      %1487 = vmatprep.mubr.bf16.mxu0 0
      %1488 = vmatmul.mubr.bf16.gmra.mrb[0].mxu0 %v1436
      %v1489 = vpop.f32.mrb[0].mxu0
      %v1490 = vadd.f32 0.0, %v1489
      %v1491 = vpop.f32.mrb[0].mxu0
      %v1492 = vpop.f32.mrb[0].mxu0
      %v1493 = vadd.f32 0.0, %v1492
      %v1494 = vpop.f32.mrb[0].mxu0
      %1495 = vmatprep.mubr.bf16.mxu0 0
      %1496 = vmatmul.mubr.bf16.gmra.mrb[0].mxu0 %v1439
      %v1497 = vpop.f32.mrb[0].mxu0
      %v1498 = vadd.f32 0.0, %v1497
      %v1499 = vpop.f32.mrb[0].mxu0
      %v1500 = vpop.f32.mrb[0].mxu0
      %v1501 = vadd.f32 0.0, %v1500
      %v1502 = vpop.f32.mrb[0].mxu0
      %1503 = vmatprep.mubr.bf16.mxu0 0
      %1504 = vmatmul.mubr.bf16.gmra.mrb[0].mxu0 %v1442
      %v1505 = vpop.f32.mrb[0].mxu0
      %v1506 = vadd.f32 0.0, %v1505
      %v1507 = vpop.f32.mrb[0].mxu0
      %v1508 = vpop.f32.mrb[0].mxu0
      %v1509 = vadd.f32 0.0, %v1508
      %v1510 = vpop.f32.mrb[0].mxu0
      %1511 = vmatprep.mubr.bf16.mxu0 0
      %1512 = vmatmul.mubr.bf16.gmra.mrb[0].mxu0 %v1445
      %v1513 = vpop.f32.mrb[0].mxu0
      %v1514 = vadd.f32 0.0, %v1513
      %v1515 = vpop.f32.mrb[0].mxu0
      %v1516 = vpop.f32.mrb[0].mxu0
      %v1517 = vadd.f32 0.0, %v1516
      %v1518 = vpop.f32.mrb[0].mxu0
      %1519 = vdwg.mxu0
      %v1520 = vadd.f32 %v1389, %v1482
      %v1521 = vadd.f32 %v1390, %v1485
      %v1522 = vadd.f32 %v1391, %v1490
      %v1523 = vadd.f32 %v1392, %v1493
      %v1524 = vadd.f32 %v1393, %v1498
      %v1525 = vadd.f32 %v1394, %v1501
      %v1526 = vadd.f32 %v1395, %v1506
      %v1527 = vadd.f32 %v1396, %v1509
      %v1528 = vadd.f32 %v1397, %v1514
      %v1529 = vadd.f32 %v1398, %v1517
      %v1530 = vld [vmem:[%s2] sm:$0x1]
      %v1532 = vlaneseq
      %v1533 = vshrl.u32 %v1532, 7
      %v1534 = vsub.s32 0, %v1533
      %v1535 = vrot.slane %v1530, %v1534
      %v1537 = vadd.f32 %v1520, %v1535
      %v1538 = vadd.f32 %v1521, %v1535
      %v1539 = vadd.f32 %v1522, %v1535
      %v1540 = vadd.f32 %v1523, %v1535
      %v1541 = vadd.f32 %v1524, %v1535
      %v1542 = vadd.f32 %v1525, %v1535
      %v1543 = vadd.f32 %v1526, %v1535
      %v1544 = vadd.f32 %v1527, %v1535
      %v1545 = vadd.f32 %v1528, %v1535
      %v1546 = vadd.f32 %v1529, %v1535
      %v1547 = vmax.f32 %v1537, 0.0
      %v1548 = vmax.f32 %v1538, 0.0
      %v1549 = vmax.f32 %v1539, 0.0
      %v1550 = vmax.f32 %v1540, 0.0
      %v1551 = vmax.f32 %v1541, 0.0
      %v1552 = vmax.f32 %v1542, 0.0
      %v1553 = vmax.f32 %v1543, 0.0
      %v1554 = vmax.f32 %v1544, 0.0
      %v1555 = vmax.f32 %v1545, 0.0
      %v1556 = vmax.f32 %v1546, 0.0
      %v1557 = vpack.c.bf16 %v1548, %v1547
      %v1558 = vpack.c.bf16 %v1550, %v1549
      %v1559 = vpack.c.bf16 %v1552, %v1551
      %v1560 = vpack.c.bf16 %v1554, %v1553
      %v1561 = vpack.c.bf16 %v1556, %v1555
      %v1567 = vunpack.c.l.b16 %v1557
      %v1568 = vunpack.c.h.b16 %v1557
      %v1569 = vunpack.c.l.b16 %v1558
      %v1570 = vunpack.c.h.b16 %v1558
      %v1571 = vunpack.c.l.b16 %v1559
      %v1572 = vunpack.c.h.b16 %v1559
      %v1573 = vunpack.c.l.b16 %v1560
      %v1574 = vunpack.c.h.b16 %v1560
      %v1575 = vunpack.c.l.b16 %v1561
      %v1576 = vunpack.c.h.b16 %v1561
      %v1577 = vpack.c.b16 %v1567, %v1567
      %v1578 = vpack.c.b16 %v1568, %v1568
      %v1579 = vpack.c.b16 %v1569, %v1569
      %v1580 = vpack.c.b16 %v1570, %v1570
      %v1581 = vpack.c.b16 %v1571, %v1571
      %v1582 = vpack.c.b16 %v1572, %v1572
      %v1583 = vpack.c.b16 %v1573, %v1573
      %v1584 = vpack.c.b16 %v1574, %v1574
      %v1585 = vpack.c.b16 %v1575, %v1575
      %v1586 = vpack.c.b16 %v1576, %v1576
      %vm1597 = vcmask 257024
      %1598 = vst.msk [vmem:[%s170] sm:$0xf] %vm1597, %v1577
      %1599 = vst.msk [vmem:[%s170 + $0x4] sm:$0xf] %vm1597, %v1578
      %1600 = vst.msk [vmem:[%s170 + $0x8] sm:$0xf] %vm1597, %v1579
      %1601 = vst.msk [vmem:[%s170 + $0xc] sm:$0xf] %vm1597, %v1580
      %1602 = vst.msk [vmem:[%s170 + $0x10] sm:$0xf] %vm1597, %v1581
      %1603 = vst.msk [vmem:[%s170 + $0x14] sm:$0xf] %vm1597, %v1582
      %1604 = vst.msk [vmem:[%s170 + $0x18] sm:$0xf] %vm1597, %v1583
      %1605 = vst.msk [vmem:[%s170 + $0x1c] sm:$0xf] %vm1597, %v1584
      %1606 = vst.msk [vmem:[%s170 + $0x20] sm:$0xf] %vm1597, %v1585
      %1607 = vst.msk [vmem:[%s170 + $0x24] sm:$0xf] %vm1597, %v1586
      %p1608 = scmp.lt.s32.totalorder %s14, 1
      %s1609 = scalar_select %p1608, %s14, 1
      %s1610 = smul.addr %s1609, 10
      %s1611 = smul.addr %s1610, 4
      %s1612 = scalar_lea.vmem %s3, %s1611
      // Predicated region
      $region33: #{conv_block.4} parent=31 // pred_check
        %p1613 = pneg %p100
      $region34: #{conv_block.4} parent=31 // pred_check_branch
        %1615 = sbr.rel (%p1613) target = $region36
      $region35: #{conv_block.4} parent=31 // pred_region
        _
      $region36: #{conv_block.4} parent=31 // pred_fallthru
        _
    $region32: #{conv_block.4} parent=5 // pred_fallthru
      _
    %p1616 = scmp.le.s32.totalorder 2, %s9
    // Predicated region
    $region37: #{conv_block.4} parent=5 // pred_check
      %p1617 = pneg %p1616
    $region38: #{conv_block.4} parent=5 // pred_check_branch
      %1619 = sbr.rel (%p1617) target = $region40
    $region39: #{conv_block.4} parent=5 // pred_region
      %s1620 = ssub.s32 %s9, 2
      // Predicated region
      $region41: #{conv_block.4} parent=39 // pred_check
        %p1621 = pneg %p106
      $region42: #{conv_block.4} parent=39 // pred_check_branch
        %1623 = sbr.rel (%p1621) target = $region44
      $region43: #{conv_block.4} parent=39 // pred_region
        %p1624 = scmp.lt.s32.totalorder %s15, 1
        %s1625 = scalar_select %p1624, %s15, 1
        %s1626 = smul.addr %s1625, 10
        %s1627 = smul.addr %s1626, 4
        %s1628 = scalar_lea.vmem %s3, %s1627
      $region44: #{conv_block.4} parent=39 // pred_fallthru
        _
    $region40: #{conv_block.4} parent=5 // pred_fallthru
      _
  $region6: #{conv_block.4} parent=0 // loop_footer
    %s13 = sadd.s32 1, %s9
  $region7: #{conv_block.4} parent=0 // loop_footer_branch
    %8 = sbr.rel target = $region3
  $region8: #{conv_block.4} parent=0 // loop_exit
    _

// kernel: conv_block.5
$region0: #{conv_block.5}
  #allocation0 [shape = 'u32[]', space=smem, size = 0x4, offset = 0x4, fixed_abs, tag = 'smem constant byte address 0x4 - core index']
  #allocation1 [shape = 'u32[144,128]{1,0:T(1,128)}', space=vmem, size = 0x12000, scoped, tag = 'internal scratch']
  %s0 = inlined_call_operand.vmem [shape: bf16[2,110,32], index: 0, kind: input, shape index: {}]
  %s1 = inlined_call_operand.vmem [shape: bf16[9,32,32], index: 1, kind: input, shape index: {}]
  %s2 = inlined_call_operand.vmem [shape: f32[1,32], index: 2, kind: input, shape index: {}]
  %s3 = inlined_call_operand.vmem [shape: bf16[2,80,32], index: 3, kind: input, shape index: {}]
  %s4 = inlined_call_operand.vmem [shape: bf16[2,80,32], index: 4, kind: output, shape index: {}]
  %s5 = sld [smem:[#allocation0]]
  $region49: #{conv_block.5} parent=0
    _
  %s7 = ssub.s32 1, %s5
  %s8 = scalar_select 0, %s7, %s5
  loop: start=0, step=1, limit=4
  $region2: #{conv_block.5} parent=0 // loop_pre_header
    _
  $region3: #{conv_block.5} parent=0 // loop_header
    %s10 = sphi 0, %s14
    %p11 = scmp.ge.s32.totalorder %s10, 4
    %s20 = sphi 0, %s22
    %s23 = sphi 0, %s20
    %s24 = sphi 0, %s23
    %s40 = sphi 0, %s24
    %s44 = sphi 0, %s44
    %s46 = sphi 0, %s44
    %s47 = sphi 0, %s46
    %s61 = sphi 0, %s47
    %s65 = sphi 0, %s65
    %s67 = sphi 0, %s65
    %s68 = sphi 0, %s67
    %s82 = sphi 0, %s68
    %s88 = sphi 0, %s90
    %s91 = sphi 0, %s88
    %s92 = sphi 0, %s91
    %s108 = sphi 0, %s92
    %s114 = sphi 0, %s116
    %s117 = sphi 0, %s114
    %s118 = sphi 0, %s117
    %s134 = sphi 0, %s118
  $region4: #{conv_block.5} parent=0 // loop_header_branch
    %13 = sbr.rel (%p11) target = $region8
  $region5: #{conv_block.5} parent=0 // loop_body
    %s15 = ssub.s32 %s10, 1
    %s16 = ssub.s32 %s10, 2
    %s17 = sadd.s32 %s10, 1
    %s18 = ssub.s32 %s10, %s17
    %p19 = scmp.eq.s32.totalorder %s18, 0
    %s21 = sadd.s32 %s20, 1
    %s22 = scalar_select %p19, %s20, %s21
    %p25 = pneg %p19
    %p26 = scmp.eq.s32.totalorder %s10, 1
    %p27 = por %p25, %p26
    %p28 = scmp.ne.s32.totalorder %s20, %s23
    %p29 = scmp.eq.s32.totalorder %s10, 0
    %p30 = por %p28, %p29
    %p31 = scmp.ne.s32.totalorder %s20, %s23
    %p32 = scmp.eq.s32.totalorder %s15, 1
    %p33 = por %p31, %p32
    %p34 = scmp.ne.s32.totalorder %s23, %s24
    %p35 = scmp.eq.s32.totalorder %s15, 0
    %p36 = por %p34, %p35
    %p37 = scmp.ne.s32.totalorder %s23, %s24
    %p38 = scmp.eq.s32.totalorder %s16, 1
    %p39 = por %p37, %p38
    %p41 = scmp.ne.s32.totalorder %s24, %s40
    %p42 = scmp.eq.s32.totalorder %s16, 0
    %p43 = por %p41, %p42
    %s45 = sadd.s32 %s44, 1
    %p48 = scmp.eq.s32.totalorder %s10, 1
    %p49 = scmp.ne.s32.totalorder %s44, %s46
    %p50 = scmp.eq.s32.totalorder %s10, 0
    %p51 = por %p49, %p50
    %p52 = scmp.ne.s32.totalorder %s44, %s46
    %p53 = scmp.eq.s32.totalorder %s15, 1
    %p54 = por %p52, %p53
    %p55 = scmp.ne.s32.totalorder %s46, %s47
    %p56 = scmp.eq.s32.totalorder %s15, 0
    %p57 = por %p55, %p56
    %p58 = scmp.ne.s32.totalorder %s46, %s47
    %p59 = scmp.eq.s32.totalorder %s16, 1
    %p60 = por %p58, %p59
    %p62 = scmp.ne.s32.totalorder %s47, %s61
    %p63 = scmp.eq.s32.totalorder %s16, 0
    %p64 = por %p62, %p63
    %s66 = sadd.s32 %s65, 1
    %p69 = scmp.eq.s32.totalorder %s10, 1
    %p70 = scmp.ne.s32.totalorder %s65, %s67
    %p71 = scmp.eq.s32.totalorder %s10, 0
    %p72 = por %p70, %p71
    %p73 = scmp.ne.s32.totalorder %s65, %s67
    %p74 = scmp.eq.s32.totalorder %s15, 1
    %p75 = por %p73, %p74
    %p76 = scmp.ne.s32.totalorder %s67, %s68
    %p77 = scmp.eq.s32.totalorder %s15, 0
    %p78 = por %p76, %p77
    %p79 = scmp.ne.s32.totalorder %s67, %s68
    %p80 = scmp.eq.s32.totalorder %s16, 1
    %p81 = por %p79, %p80
    %p83 = scmp.ne.s32.totalorder %s68, %s82
    %p84 = scmp.eq.s32.totalorder %s16, 0
    %p85 = por %p83, %p84
    %s86 = ssub.s32 %s10, %s17
    %p87 = scmp.eq.s32.totalorder %s86, 0
    %s89 = sadd.s32 %s88, 1
    %s90 = scalar_select %p87, %s88, %s89
    %p93 = pneg %p87
    %p94 = scmp.eq.s32.totalorder %s10, 1
    %p95 = por %p93, %p94
    %p96 = scmp.ne.s32.totalorder %s88, %s91
    %p97 = scmp.eq.s32.totalorder %s10, 0
    %p98 = por %p96, %p97
    %p99 = scmp.ne.s32.totalorder %s88, %s91
    %p100 = scmp.eq.s32.totalorder %s15, 1
    %p101 = por %p99, %p100
    %p102 = scmp.ne.s32.totalorder %s91, %s92
    %p103 = scmp.eq.s32.totalorder %s15, 0
    %p104 = por %p102, %p103
    %p105 = scmp.ne.s32.totalorder %s91, %s92
    %p106 = scmp.eq.s32.totalorder %s16, 1
    %p107 = por %p105, %p106
    %p109 = scmp.ne.s32.totalorder %s92, %s108
    %p110 = scmp.eq.s32.totalorder %s16, 0
    %p111 = por %p109, %p110
    %s112 = ssub.s32 %s10, %s17
    %p113 = scmp.eq.s32.totalorder %s112, 0
    %s115 = sadd.s32 %s114, 1
    %s116 = scalar_select %p113, %s114, %s115
    %p119 = pneg %p113
    %p120 = scmp.eq.s32.totalorder %s10, 1
    %p121 = por %p119, %p120
    %p122 = scmp.ne.s32.totalorder %s114, %s117
    %p123 = scmp.eq.s32.totalorder %s10, 0
    %p124 = por %p122, %p123
    %p125 = scmp.ne.s32.totalorder %s114, %s117
    %p126 = scmp.eq.s32.totalorder %s15, 1
    %p127 = por %p125, %p126
    %p128 = scmp.ne.s32.totalorder %s117, %s118
    %p129 = scmp.eq.s32.totalorder %s15, 0
    %p130 = por %p128, %p129
    %p131 = scmp.ne.s32.totalorder %s117, %s118
    %p132 = scmp.eq.s32.totalorder %s16, 1
    %p133 = por %p131, %p132
    %p135 = scmp.ne.s32.totalorder %s118, %s134
    %p136 = scmp.eq.s32.totalorder %s16, 0
    %p137 = por %p135, %p136
    %p138 = scmp.le.s32.totalorder 1, %s10
    %p139 = scmp.lt.s32.totalorder %s10, 3
    %p140 = pnand %p138, %p139
    %p141 = pneg %p140
    // Predicated region
    $region9: #{conv_block.5} parent=5 // pred_check
      _
    $region10: #{conv_block.5} parent=5 // pred_check_branch
      %143 = sbr.rel (%p140) target = $region12
    $region11: #{conv_block.5} parent=5 // pred_region
      %s144 = ssub.s32 %s10, 1
      // Predicated region
      $region13: #{conv_block.5} parent=11 // pred_check
        %p145 = pneg %p57
      $region14: #{conv_block.5} parent=11 // pred_check_branch
        %147 = sbr.rel (%p145) target = $region16
      $region15: #{conv_block.5} parent=11 // pred_region
        _
      $region16: #{conv_block.5} parent=11 // pred_fallthru
        _
      // Predicated region
      $region17: #{conv_block.5} parent=11 // pred_check
        %p148 = pneg %p78
      $region18: #{conv_block.5} parent=11 // pred_check_branch
        %150 = sbr.rel (%p148) target = $region20
      $region19: #{conv_block.5} parent=11 // pred_region
        _
      $region20: #{conv_block.5} parent=11 // pred_fallthru
        _
    $region12: #{conv_block.5} parent=5 // pred_fallthru
      _
    %p151 = scmp.lt.s32.totalorder %s10, 2
    // Predicated region
    $region21: #{conv_block.5} parent=5 // pred_check
      %p152 = pneg %p151
    $region22: #{conv_block.5} parent=5 // pred_check_branch
      %154 = sbr.rel (%p152) target = $region24
    $region23: #{conv_block.5} parent=5 // pred_region
      // Predicated region
      $region25: #{conv_block.5} parent=23 // pred_check
        %p155 = pneg %p30
      $region26: #{conv_block.5} parent=23 // pred_check_branch
        %157 = sbr.rel (%p155) target = $region28
      $region27: #{conv_block.5} parent=23 // pred_region
        %p158 = scmp.lt.s32.totalorder %s10, 1
        %s159 = scalar_select %p158, %s10, 1
        %s160 = smul.addr %s159, 14
        %s161 = smul.addr %s160, 4
        %s162 = scalar_lea.vmem %s0, %s161
      $region28: #{conv_block.5} parent=23 // pred_fallthru
        _
      // Predicated region
      $region29: #{conv_block.5} parent=23 // pred_check
        %p163 = pneg %p98
      $region30: #{conv_block.5} parent=23 // pred_check_branch
        %165 = sbr.rel (%p163) target = $region32
      $region31: #{conv_block.5} parent=23 // pred_region
        %p166 = scmp.lt.s32.totalorder %s10, 1
        %s167 = scalar_select %p166, %s10, 1
        %s168 = smul.addr %s167, 10
        %s169 = smul.addr %s168, 4
        %s170 = scalar_lea.vmem %s3, %s169
      $region32: #{conv_block.5} parent=23 // pred_fallthru
        _
    $region24: #{conv_block.5} parent=5 // pred_fallthru
      _
    %p171 = scmp.le.s32.totalorder 1, %s10
    %p172 = scmp.lt.s32.totalorder %s10, 3
    %p173 = pnand %p171, %p172
    %p174 = pneg %p173
    // Predicated region
    $region33: #{conv_block.5} parent=5 // pred_check
      _
    $region34: #{conv_block.5} parent=5 // pred_check_branch
      %176 = sbr.rel (%p173) target = $region36
    $region35: #{conv_block.5} parent=5 // pred_region
      %s177 = ssub.s32 %s10, 1
      %p178 = scmp.lt.s32.totalorder %s15, 1
      %s179 = scalar_select %p178, %s15, 1
      %s180 = smul.addr %s179, 14
      %s181 = smul.addr %s180, 4
      %s182 = scalar_lea.vmem %s0, %s181
      %p183 = pneg %p36
      %p184 = pneg %p33
      %p185 = pneg %p57
      %p186 = pneg %p54
      %p187 = pneg %p78
      %p188 = pneg %p75
      %p189 = scmp.lt.s32.totalorder %s15, 1
      %s190 = scalar_select %p189, %s15, 1
      %s191 = smul.addr %s190, 10
      %s192 = smul.addr %s191, 4
      %s193 = scalar_lea.vmem %s3, %s192
      %p194 = pneg %p104
      %p195 = pneg %p101
      %p196 = pneg %p130
      %p197 = pneg %p127
      %p198 = scmp.lt.s32.totalorder %s15, 1
      %s199 = scalar_select %p198, %s15, 1
      %s200 = smul.addr %s199, 10
      %s201 = smul.addr %s200, 4
      %s202 = scalar_lea.vmem %s4, %s201
      %p203 = scmp.lt.s32.totalorder %s15, 1
      %s204 = scalar_select %p203, %s15, 1
      %s205 = smul.addr %s204, 14
      %s206 = smul.addr %s205, 4
      %s207 = scalar_lea.vmem %s0, %s206
      %p208 = scmp.lt.s32.totalorder %s15, 1
      %s209 = scalar_select %p208, %s15, 1
      %s210 = smul.addr %s209, 10
      %s211 = smul.addr %s210, 4
      %s212 = scalar_lea.vmem %s3, %s211
      %p213 = scmp.lt.s32.totalorder %s15, 1
      %s214 = scalar_select %p213, %s15, 1
      %s215 = smul.addr %s214, 10
      %s216 = smul.addr %s215, 4
      %s217 = scalar_lea.vmem %s4, %s216
      %v219 = vld [vmem:[%s207] sm:$0xf]
      %v220 = vld [vmem:[%s207 + $0x4] sm:$0xf]
      %v221 = vld [vmem:[%s207 + $0x8] sm:$0xf]
      %v222 = vld [vmem:[%s207 + $0xc] sm:$0xf]
      %v223 = vld [vmem:[%s207 + $0x10] sm:$0xf]
      %v224 = vld [vmem:[%s207 + $0x14] sm:$0xf]
      %v225 = vld [vmem:[%s207 + $0x18] sm:$0xf]
      %v226 = vld [vmem:[%s207 + $0x1c] sm:$0xf]
      %v227 = vld [vmem:[%s207 + $0x20] sm:$0xf]
      %v228 = vld [vmem:[%s207 + $0x24] sm:$0xf]
      %v229 = vld [vmem:[%s1] sm:$0xf]
      %v230 = vld [vmem:[%s1 + $0x4] sm:$0xf]
      %v231 = vld [vmem:[%s1 + $0x8] sm:$0xf]
      %v232 = vld [vmem:[%s1 + $0xc] sm:$0xf]
      %v233 = vld [vmem:[%s207 + $0x28] sm:$0x1]
      %s234 = scalar_lea.vmem %s1, 16
      %v235 = vld [vmem:[%s234] sm:$0xf]
      %v236 = vld [vmem:[%s234 + $0x4] sm:$0xf]
      %v237 = vld [vmem:[%s234 + $0x8] sm:$0xf]
      %v238 = vld [vmem:[%s234 + $0xc] sm:$0xf]
      %v250 = vunpack.c.l.b16 %v219
      %v251 = vunpack.c.l.b16 %v220
      %v252 = vunpack.c.l.b16 %v221
      %v253 = vunpack.c.l.b16 %v222
      %v254 = vunpack.c.l.b16 %v223
      %v255 = vunpack.c.l.b16 %v224
      %v256 = vunpack.c.l.b16 %v225
      %v257 = vunpack.c.l.b16 %v226
      %v258 = vunpack.c.l.b16 %v227
      %v259 = vunpack.c.l.b16 %v228
      %v260 = vunpack.c.l.b16 %v233
      %v261 = vpack.c.b16 %v251, %v250
      %v262 = vpack.c.b16 %v253, %v252
      %v263 = vpack.c.b16 %v255, %v254
      %v264 = vpack.c.b16 %v257, %v256
      %v265 = vpack.c.b16 %v259, %v258
      %v266 = vpack.c.b16 %v260, %v260
      %vm267 = vsmask.f32 7424
      %v269 = vshrl.u32 %v261, 16
      %v271 = vshll.u32 %v261, 16
      %v273 = vrot.slane %v271, 1
      %v274 = vor.u32 %v269, %v273
      %v276 = vshll.u32 %v262, 16
      %v278 = vrot.slane %v276, 1
      %v279 = vsel %vm267, %v274, %v278
      %v280 = vshrl.u32 %v262, 16
      %v282 = vor.u32 %v280, %v278
      %v284 = vshll.u32 %v263, 16
      %v286 = vrot.slane %v284, 1
      %v287 = vsel %vm267, %v282, %v286
      %v288 = vshrl.u32 %v263, 16
      %v290 = vor.u32 %v288, %v286
      %v292 = vshll.u32 %v264, 16
      %v294 = vrot.slane %v292, 1
      %v295 = vsel %vm267, %v290, %v294
      %v296 = vshrl.u32 %v264, 16
      %v298 = vor.u32 %v296, %v294
      %v300 = vshll.u32 %v265, 16
      %v302 = vrot.slane %v300, 1
      %v303 = vsel %vm267, %v298, %v302
      %v304 = vshrl.u32 %v265, 16
      %v306 = vor.u32 %v304, %v302
      %v308 = vshll.u32 %v266, 16
      %v310 = vrot.slane %v308, 1
      %v311 = vsel %vm267, %v306, %v310
      %v316 = vunpack.c.l.b16 %v235
      %v317 = vunpack.c.l.b16 %v236
      %v318 = vunpack.c.l.b16 %v237
      %v319 = vunpack.c.l.b16 %v238
      %v320 = vpack.c.b16 %v317, %v316
      %v321 = vpack.c.b16 %v319, %v318
      %vm324 = vcmask 261120
      %v326 = vsel %vm324, %v279, 0
      %v329 = vsel %vm324, %v287, 0
      %v332 = vsel %vm324, %v295, 0
      %v335 = vsel %vm324, %v303, 0
      %v338 = vsel %vm324, %v311, 0
      %340 = vmatprep.subr.bf16.mxu0 0
      %341 = vmatpush1.bf16.msra.mxu0 %v320
      %342 = vmatprep.subr.bf16.mxu0 0
      %343 = vmatpush1.bf16.msra.mxu0 %v321
      %344 = vmatprep.subr.bf16.mxu0 0
      %345 = vmatpush1.bf16.msra.mxu0 0
      %346 = vmatprep.subr.bf16.mxu0 0
      %347 = vmatpush1.bf16.msra.mxu0 0
      %348 = vmatprep.subr.bf16.mxu0 0
      %349 = vmatpush1.bf16.msra.mxu0 0
      %350 = vmatprep.subr.bf16.mxu0 0
      %351 = vmatpush1.bf16.msra.mxu0 0
      %352 = vmatprep.subr.bf16.mxu0 0
      %353 = vmatpush1.bf16.msra.mxu0 0
      %354 = vmatprep.subr.bf16.mxu0 0
      %355 = vmatpush1.bf16.msra.mxu0 0
      %356 = vmatprep.subr.bf16.mxu0 0
      %357 = vmatpush1.bf16.msra.mxu0 0
      %358 = vmatprep.subr.bf16.mxu0 0
      %359 = vmatpush1.bf16.msra.mxu0 0
      %360 = vmatprep.subr.bf16.mxu0 0
      %361 = vmatpush1.bf16.msra.mxu0 0
      %362 = vmatprep.subr.bf16.mxu0 0
      %363 = vmatpush1.bf16.msra.mxu0 0
      %364 = vmatprep.subr.bf16.mxu0 0
      %365 = vmatpush1.bf16.msra.mxu0 0
      %366 = vmatprep.subr.bf16.mxu0 0
      %367 = vmatpush1.bf16.msra.mxu0 0
      %368 = vmatprep.subr.bf16.mxu0 0
      %369 = vmatpush1.bf16.msra.mxu0 0
      %370 = vmatprep.subr.bf16.mxu0 0
      %371 = vmatpush1.bf16.msra.mxu0 0
      %372 = vmatprep.mubr.bf16.mxu0 0
      %373 = vmatmul.mubr.bf16.gmra.mrb[0].mxu0 %v326
      %v374 = vpop.f32.mrb[0].mxu0
      %v375 = vadd.f32 0.0, %v374
      %v376 = vpop.f32.mrb[0].mxu0
      %v377 = vpop.f32.mrb[0].mxu0
      %v378 = vadd.f32 0.0, %v377
      %v379 = vpop.f32.mrb[0].mxu0
      %380 = vmatprep.mubr.bf16.mxu0 0
      %381 = vmatmul.mubr.bf16.gmra.mrb[0].mxu0 %v329
      %v382 = vpop.f32.mrb[0].mxu0
      %v383 = vadd.f32 0.0, %v382
      %v384 = vpop.f32.mrb[0].mxu0
      %v385 = vpop.f32.mrb[0].mxu0
      %v386 = vadd.f32 0.0, %v385
      %v387 = vpop.f32.mrb[0].mxu0
      %388 = vmatprep.mubr.bf16.mxu0 0
      %389 = vmatmul.mubr.bf16.gmra.mrb[0].mxu0 %v332
      %v390 = vpop.f32.mrb[0].mxu0
      %v391 = vadd.f32 0.0, %v390
      %v392 = vpop.f32.mrb[0].mxu0
      %v393 = vpop.f32.mrb[0].mxu0
      %v394 = vadd.f32 0.0, %v393
      %v395 = vpop.f32.mrb[0].mxu0
      %396 = vmatprep.mubr.bf16.mxu0 0
      %397 = vmatmul.mubr.bf16.gmra.mrb[0].mxu0 %v335
      %v398 = vpop.f32.mrb[0].mxu0
      %v399 = vadd.f32 0.0, %v398
      %v400 = vpop.f32.mrb[0].mxu0
      %v401 = vpop.f32.mrb[0].mxu0
      %v402 = vadd.f32 0.0, %v401
      %v403 = vpop.f32.mrb[0].mxu0
      %404 = vmatprep.mubr.bf16.mxu0 0
      %405 = vmatmul.mubr.bf16.gmra.mrb[0].mxu0 %v338
      %v406 = vpop.f32.mrb[0].mxu0
      %v407 = vadd.f32 0.0, %v406
      %v408 = vpop.f32.mrb[0].mxu0
      %v409 = vpop.f32.mrb[0].mxu0
      %v410 = vadd.f32 0.0, %v409
      %v411 = vpop.f32.mrb[0].mxu0
      %412 = vdwg.mxu0
      %v417 = vunpack.c.l.b16 %v229
      %v418 = vunpack.c.l.b16 %v230
      %v419 = vunpack.c.l.b16 %v231
      %v420 = vunpack.c.l.b16 %v232
      %v421 = vpack.c.b16 %v418, %v417
      %v422 = vpack.c.b16 %v420, %v419
      %v425 = vsel %vm324, %v261, 0
      %v427 = vsel %vm324, %v262, 0
      %v429 = vsel %vm324, %v263, 0
      %v431 = vsel %vm324, %v264, 0
      %v433 = vsel %vm324, %v265, 0
      %435 = vmatprep.subr.bf16.mxu0 0
      %436 = vmatpush1.bf16.msra.mxu0 %v421
      %437 = vmatprep.subr.bf16.mxu0 0
      %438 = vmatpush1.bf16.msra.mxu0 %v422
      %439 = vmatprep.subr.bf16.mxu0 0
      %440 = vmatpush1.bf16.msra.mxu0 0
      %441 = vmatprep.subr.bf16.mxu0 0
      %442 = vmatpush1.bf16.msra.mxu0 0
      %443 = vmatprep.subr.bf16.mxu0 0
      %444 = vmatpush1.bf16.msra.mxu0 0
      %445 = vmatprep.subr.bf16.mxu0 0
      %446 = vmatpush1.bf16.msra.mxu0 0
      %447 = vmatprep.subr.bf16.mxu0 0
      %448 = vmatpush1.bf16.msra.mxu0 0
      %449 = vmatprep.subr.bf16.mxu0 0
      %450 = vmatpush1.bf16.msra.mxu0 0
      %451 = vmatprep.subr.bf16.mxu0 0
      %452 = vmatpush1.bf16.msra.mxu0 0
      %453 = vmatprep.subr.bf16.mxu0 0
      %454 = vmatpush1.bf16.msra.mxu0 0
      %455 = vmatprep.subr.bf16.mxu0 0
      %456 = vmatpush1.bf16.msra.mxu0 0
      %457 = vmatprep.subr.bf16.mxu0 0
      %458 = vmatpush1.bf16.msra.mxu0 0
      %459 = vmatprep.subr.bf16.mxu0 0
      %460 = vmatpush1.bf16.msra.mxu0 0
      %461 = vmatprep.subr.bf16.mxu0 0
      %462 = vmatpush1.bf16.msra.mxu0 0
      %463 = vmatprep.subr.bf16.mxu0 0
      %464 = vmatpush1.bf16.msra.mxu0 0
      %465 = vmatprep.subr.bf16.mxu0 0
      %466 = vmatpush1.bf16.msra.mxu0 0
      %467 = vmatprep.mubr.bf16.mxu0 0
      %468 = vmatmul.mubr.bf16.gmra.mrb[0].mxu0 %v425
      %v469 = vpop.f32.mrb[0].mxu0
      %v470 = vadd.f32 %v375, %v469
      %v471 = vpop.f32.mrb[0].mxu0
      %v472 = vpop.f32.mrb[0].mxu0
      %v473 = vadd.f32 %v378, %v472
      %v474 = vpop.f32.mrb[0].mxu0
      %475 = vmatprep.mubr.bf16.mxu0 0
      %476 = vmatmul.mubr.bf16.gmra.mrb[0].mxu0 %v427
      %v477 = vpop.f32.mrb[0].mxu0
      %v478 = vadd.f32 %v383, %v477
      %v479 = vpop.f32.mrb[0].mxu0
      %v480 = vpop.f32.mrb[0].mxu0
      %v481 = vadd.f32 %v386, %v480
      %v482 = vpop.f32.mrb[0].mxu0
      %483 = vmatprep.mubr.bf16.mxu0 0
      %484 = vmatmul.mubr.bf16.gmra.mrb[0].mxu0 %v429
      %v485 = vpop.f32.mrb[0].mxu0
      %v486 = vadd.f32 %v391, %v485
      %v487 = vpop.f32.mrb[0].mxu0
      %v488 = vpop.f32.mrb[0].mxu0
      %v489 = vadd.f32 %v394, %v488
      %v490 = vpop.f32.mrb[0].mxu0
      %491 = vmatprep.mubr.bf16.mxu0 0
      %492 = vmatmul.mubr.bf16.gmra.mrb[0].mxu0 %v431
      %v493 = vpop.f32.mrb[0].mxu0
      %v494 = vadd.f32 %v399, %v493
      %v495 = vpop.f32.mrb[0].mxu0
      %v496 = vpop.f32.mrb[0].mxu0
      %v497 = vadd.f32 %v402, %v496
      %v498 = vpop.f32.mrb[0].mxu0
      %499 = vmatprep.mubr.bf16.mxu0 0
      %500 = vmatmul.mubr.bf16.gmra.mrb[0].mxu0 %v433
      %v501 = vpop.f32.mrb[0].mxu0
      %v502 = vadd.f32 %v407, %v501
      %v503 = vpop.f32.mrb[0].mxu0
      %v504 = vpop.f32.mrb[0].mxu0
      %v505 = vadd.f32 %v410, %v504
      %v506 = vpop.f32.mrb[0].mxu0
      %507 = vdwg.mxu0
      %v508 = vld [vmem:[%s207] sm:$0xe]
      %s509 = scalar_lea.vmem %s1, 32
      %v510 = vld [vmem:[%s509] sm:$0xf]
      %v511 = vld [vmem:[%s509 + $0x4] sm:$0xf]
      %v512 = vld [vmem:[%s509 + $0x8] sm:$0xf]
      %v513 = vld [vmem:[%s509 + $0xc] sm:$0xf]
      %v515 = vunpack.c.l.b16 %v508
      %v516 = vpack.c.b16 %v251, %v515
      %vm517 = vcmask 1046528
      %v518 = vrot.slane %v516, 1
      %v519 = vrot.slane %v262, 1
      %v520 = vsel %vm517, %v518, %v519
      %v521 = vrot.slane %v263, 1
      %v522 = vsel %vm517, %v519, %v521
      %v523 = vrot.slane %v264, 1
      %v524 = vsel %vm517, %v521, %v523
      %v525 = vrot.slane %v265, 1
      %v526 = vsel %vm517, %v523, %v525
      %v527 = vrot.slane %v266, 1
      %v528 = vsel %vm517, %v525, %v527
      %v533 = vunpack.c.l.b16 %v510
      %v534 = vunpack.c.l.b16 %v511
      %v535 = vunpack.c.l.b16 %v512
      %v536 = vunpack.c.l.b16 %v513
      %v537 = vpack.c.b16 %v534, %v533
      %v538 = vpack.c.b16 %v536, %v535
      %v542 = vsel %vm324, %v520, 0
      %v545 = vsel %vm324, %v522, 0
      %v548 = vsel %vm324, %v524, 0
      %v551 = vsel %vm324, %v526, 0
      %v554 = vsel %vm324, %v528, 0
      %556 = vmatprep.subr.bf16.mxu0 0
      %557 = vmatpush1.bf16.msra.mxu0 %v537
      %558 = vmatprep.subr.bf16.mxu0 0
      %559 = vmatpush1.bf16.msra.mxu0 %v538
      %560 = vmatprep.subr.bf16.mxu0 0
      %561 = vmatpush1.bf16.msra.mxu0 0
      %562 = vmatprep.subr.bf16.mxu0 0
      %563 = vmatpush1.bf16.msra.mxu0 0
      %564 = vmatprep.subr.bf16.mxu0 0
      %565 = vmatpush1.bf16.msra.mxu0 0
      %566 = vmatprep.subr.bf16.mxu0 0
      %567 = vmatpush1.bf16.msra.mxu0 0
      %568 = vmatprep.subr.bf16.mxu0 0
      %569 = vmatpush1.bf16.msra.mxu0 0
      %570 = vmatprep.subr.bf16.mxu0 0
      %571 = vmatpush1.bf16.msra.mxu0 0
      %572 = vmatprep.subr.bf16.mxu0 0
      %573 = vmatpush1.bf16.msra.mxu0 0
      %574 = vmatprep.subr.bf16.mxu0 0
      %575 = vmatpush1.bf16.msra.mxu0 0
      %576 = vmatprep.subr.bf16.mxu0 0
      %577 = vmatpush1.bf16.msra.mxu0 0
      %578 = vmatprep.subr.bf16.mxu0 0
      %579 = vmatpush1.bf16.msra.mxu0 0
      %580 = vmatprep.subr.bf16.mxu0 0
      %581 = vmatpush1.bf16.msra.mxu0 0
      %582 = vmatprep.subr.bf16.mxu0 0
      %583 = vmatpush1.bf16.msra.mxu0 0
      %584 = vmatprep.subr.bf16.mxu0 0
      %585 = vmatpush1.bf16.msra.mxu0 0
      %586 = vmatprep.subr.bf16.mxu0 0
      %587 = vmatpush1.bf16.msra.mxu0 0
      %588 = vmatprep.mubr.bf16.mxu0 0
      %589 = vmatmul.mubr.bf16.gmra.mrb[0].mxu0 %v542
      %v590 = vpop.f32.mrb[0].mxu0
      %v591 = vadd.f32 0.0, %v590
      %v592 = vpop.f32.mrb[0].mxu0
      %v593 = vpop.f32.mrb[0].mxu0
      %v594 = vadd.f32 0.0, %v593
      %v595 = vpop.f32.mrb[0].mxu0
      %596 = vmatprep.mubr.bf16.mxu0 0
      %597 = vmatmul.mubr.bf16.gmra.mrb[0].mxu0 %v545
      %v598 = vpop.f32.mrb[0].mxu0
      %v599 = vadd.f32 0.0, %v598
      %v600 = vpop.f32.mrb[0].mxu0
      %v601 = vpop.f32.mrb[0].mxu0
      %v602 = vadd.f32 0.0, %v601
      %v603 = vpop.f32.mrb[0].mxu0
      %604 = vmatprep.mubr.bf16.mxu0 0
      %605 = vmatmul.mubr.bf16.gmra.mrb[0].mxu0 %v548
      %v606 = vpop.f32.mrb[0].mxu0
      %v607 = vadd.f32 0.0, %v606
      %v608 = vpop.f32.mrb[0].mxu0
      %v609 = vpop.f32.mrb[0].mxu0
      %v610 = vadd.f32 0.0, %v609
      %v611 = vpop.f32.mrb[0].mxu0
      %612 = vmatprep.mubr.bf16.mxu0 0
      %613 = vmatmul.mubr.bf16.gmra.mrb[0].mxu0 %v551
      %v614 = vpop.f32.mrb[0].mxu0
      %v615 = vadd.f32 0.0, %v614
      %v616 = vpop.f32.mrb[0].mxu0
      %v617 = vpop.f32.mrb[0].mxu0
      %v618 = vadd.f32 0.0, %v617
      %v619 = vpop.f32.mrb[0].mxu0
      %620 = vmatprep.mubr.bf16.mxu0 0
      %621 = vmatmul.mubr.bf16.gmra.mrb[0].mxu0 %v554
      %v622 = vpop.f32.mrb[0].mxu0
      %v623 = vadd.f32 0.0, %v622
      %v624 = vpop.f32.mrb[0].mxu0
      %v625 = vpop.f32.mrb[0].mxu0
      %v626 = vadd.f32 0.0, %v625
      %v627 = vpop.f32.mrb[0].mxu0
      %628 = vdwg.mxu0
      %v629 = vadd.f32 %v470, %v591
      %v630 = vadd.f32 %v473, %v594
      %v631 = vadd.f32 %v478, %v599
      %v632 = vadd.f32 %v481, %v602
      %v633 = vadd.f32 %v486, %v607
      %v634 = vadd.f32 %v489, %v610
      %v635 = vadd.f32 %v494, %v615
      %v636 = vadd.f32 %v497, %v618
      %v637 = vadd.f32 %v502, %v623
      %v638 = vadd.f32 %v505, %v626
      %v639 = vld [vmem:[%s207 + $0x4] sm:$0xe]
      %v640 = vld [vmem:[%s207 + $0x8] sm:$0xf]
      %v641 = vld [vmem:[%s207 + $0xc] sm:$0xf]
      %v642 = vld [vmem:[%s207 + $0x10] sm:$0xf]
      %v643 = vld [vmem:[%s207 + $0x14] sm:$0xf]
      %v644 = vld [vmem:[%s207 + $0x18] sm:$0xf]
      %v645 = vld [vmem:[%s207 + $0x1c] sm:$0xf]
      %v646 = vld [vmem:[%s207 + $0x20] sm:$0xf]
      %v647 = vld [vmem:[%s207 + $0x24] sm:$0xf]
      %v648 = vld [vmem:[%s207 + $0x28] sm:$0xf]
      %v649 = vld [vmem:[%s207 + $0x2c] sm:$0x1]
      %s650 = scalar_lea.vmem %s1, 48
      %v651 = vld [vmem:[%s650] sm:$0xf]
      %v652 = vld [vmem:[%s650 + $0x4] sm:$0xf]
      %v653 = vld [vmem:[%s650 + $0x8] sm:$0xf]
      %v654 = vld [vmem:[%s650 + $0xc] sm:$0xf]
      %v666 = vunpack.c.l.b16 %v639
      %v667 = vunpack.c.l.b16 %v640
      %v668 = vunpack.c.l.b16 %v641
      %v669 = vunpack.c.l.b16 %v642
      %v670 = vunpack.c.l.b16 %v643
      %v671 = vunpack.c.l.b16 %v644
      %v672 = vunpack.c.l.b16 %v645
      %v673 = vunpack.c.l.b16 %v646
      %v674 = vunpack.c.l.b16 %v647
      %v675 = vunpack.c.l.b16 %v648
      %v676 = vunpack.c.l.b16 %v649
      %v677 = vpack.c.b16 %v667, %v666
      %v678 = vpack.c.b16 %v669, %v668
      %v679 = vpack.c.b16 %v671, %v670
      %v680 = vpack.c.b16 %v673, %v672
      %v681 = vpack.c.b16 %v675, %v674
      %v682 = vpack.c.b16 %v676, %v676
      %v683 = vrot.slane %v677, 1
      %v684 = vrot.slane %v678, 1
      %v685 = vsel %vm517, %v683, %v684
      %v686 = vrot.slane %v679, 1
      %v687 = vsel %vm517, %v684, %v686
      %v688 = vrot.slane %v680, 1
      %v689 = vsel %vm517, %v686, %v688
      %v690 = vrot.slane %v681, 1
      %v691 = vsel %vm517, %v688, %v690
      %v692 = vrot.slane %v682, 1
      %v693 = vsel %vm517, %v690, %v692
      %v698 = vunpack.c.l.b16 %v651
      %v699 = vunpack.c.l.b16 %v652
      %v700 = vunpack.c.l.b16 %v653
      %v701 = vunpack.c.l.b16 %v654
      %v702 = vpack.c.b16 %v699, %v698
      %v703 = vpack.c.b16 %v701, %v700
      %v707 = vsel %vm324, %v685, 0
      %v710 = vsel %vm324, %v687, 0
      %v713 = vsel %vm324, %v689, 0
      %v716 = vsel %vm324, %v691, 0
      %v719 = vsel %vm324, %v693, 0
      %721 = vmatprep.subr.bf16.mxu0 0
      %722 = vmatpush1.bf16.msra.mxu0 %v702
      %723 = vmatprep.subr.bf16.mxu0 0
      %724 = vmatpush1.bf16.msra.mxu0 %v703
      %725 = vmatprep.subr.bf16.mxu0 0
      %726 = vmatpush1.bf16.msra.mxu0 0
      %727 = vmatprep.subr.bf16.mxu0 0
      %728 = vmatpush1.bf16.msra.mxu0 0
      %729 = vmatprep.subr.bf16.mxu0 0
      %730 = vmatpush1.bf16.msra.mxu0 0
      %731 = vmatprep.subr.bf16.mxu0 0
      %732 = vmatpush1.bf16.msra.mxu0 0
      %733 = vmatprep.subr.bf16.mxu0 0
      %734 = vmatpush1.bf16.msra.mxu0 0
      %735 = vmatprep.subr.bf16.mxu0 0
      %736 = vmatpush1.bf16.msra.mxu0 0
      %737 = vmatprep.subr.bf16.mxu0 0
      %738 = vmatpush1.bf16.msra.mxu0 0
      %739 = vmatprep.subr.bf16.mxu0 0
      %740 = vmatpush1.bf16.msra.mxu0 0
      %741 = vmatprep.subr.bf16.mxu0 0
      %742 = vmatpush1.bf16.msra.mxu0 0
      %743 = vmatprep.subr.bf16.mxu0 0
      %744 = vmatpush1.bf16.msra.mxu0 0
      %745 = vmatprep.subr.bf16.mxu0 0
      %746 = vmatpush1.bf16.msra.mxu0 0
      %747 = vmatprep.subr.bf16.mxu0 0
      %748 = vmatpush1.bf16.msra.mxu0 0
      %749 = vmatprep.subr.bf16.mxu0 0
      %750 = vmatpush1.bf16.msra.mxu0 0
      %751 = vmatprep.subr.bf16.mxu0 0
      %752 = vmatpush1.bf16.msra.mxu0 0
      %753 = vmatprep.mubr.bf16.mxu0 0
      %754 = vmatmul.mubr.bf16.gmra.mrb[0].mxu0 %v707
      %v755 = vpop.f32.mrb[0].mxu0
      %v756 = vadd.f32 0.0, %v755
      %v757 = vpop.f32.mrb[0].mxu0
      %v758 = vpop.f32.mrb[0].mxu0
      %v759 = vadd.f32 0.0, %v758
      %v760 = vpop.f32.mrb[0].mxu0
      %761 = vmatprep.mubr.bf16.mxu0 0
      %762 = vmatmul.mubr.bf16.gmra.mrb[0].mxu0 %v710
      %v763 = vpop.f32.mrb[0].mxu0
      %v764 = vadd.f32 0.0, %v763
      %v765 = vpop.f32.mrb[0].mxu0
      %v766 = vpop.f32.mrb[0].mxu0
      %v767 = vadd.f32 0.0, %v766
      %v768 = vpop.f32.mrb[0].mxu0
      %769 = vmatprep.mubr.bf16.mxu0 0
      %770 = vmatmul.mubr.bf16.gmra.mrb[0].mxu0 %v713
      %v771 = vpop.f32.mrb[0].mxu0
      %v772 = vadd.f32 0.0, %v771
      %v773 = vpop.f32.mrb[0].mxu0
      %v774 = vpop.f32.mrb[0].mxu0
      %v775 = vadd.f32 0.0, %v774
      %v776 = vpop.f32.mrb[0].mxu0
      %777 = vmatprep.mubr.bf16.mxu0 0
      %778 = vmatmul.mubr.bf16.gmra.mrb[0].mxu0 %v716
      %v779 = vpop.f32.mrb[0].mxu0
      %v780 = vadd.f32 0.0, %v779
      %v781 = vpop.f32.mrb[0].mxu0
      %v782 = vpop.f32.mrb[0].mxu0
      %v783 = vadd.f32 0.0, %v782
      %v784 = vpop.f32.mrb[0].mxu0
      %785 = vmatprep.mubr.bf16.mxu0 0
      %786 = vmatmul.mubr.bf16.gmra.mrb[0].mxu0 %v719
      %v787 = vpop.f32.mrb[0].mxu0
      %v788 = vadd.f32 0.0, %v787
      %v789 = vpop.f32.mrb[0].mxu0
      %v790 = vpop.f32.mrb[0].mxu0
      %v791 = vadd.f32 0.0, %v790
      %v792 = vpop.f32.mrb[0].mxu0
      %793 = vdwg.mxu0
      %v794 = vadd.f32 %v629, %v756
      %v795 = vadd.f32 %v630, %v759
      %v796 = vadd.f32 %v631, %v764
      %v797 = vadd.f32 %v632, %v767
      %v798 = vadd.f32 %v633, %v772
      %v799 = vadd.f32 %v634, %v775
      %v800 = vadd.f32 %v635, %v780
      %v801 = vadd.f32 %v636, %v783
      %v802 = vadd.f32 %v637, %v788
      %v803 = vadd.f32 %v638, %v791
      %v804 = vld [vmem:[%s207 + $0x2c] sm:$0x3]
      %s805 = scalar_lea.vmem %s1, 64
      %v806 = vld [vmem:[%s805] sm:$0xf]
      %v807 = vld [vmem:[%s805 + $0x4] sm:$0xf]
      %v808 = vld [vmem:[%s805 + $0x8] sm:$0xf]
      %v809 = vld [vmem:[%s805 + $0xc] sm:$0xf]
      %v811 = vunpack.c.l.b16 %v804
      %v812 = vpack.c.b16 %v811, %v811
      %vm813 = vsmask.f32 6400
      %v815 = vshrl.u32 %v677, 16
      %v817 = vrot.slane %v815, 1
      %v818 = vshll.u32 %v677, 16
      %v820 = vrot.slane %v818, 2
      %v821 = vor.u32 %v817, %v820
      %v823 = vshrl.u32 %v678, 16
      %v825 = vrot.slane %v823, 1
      %v826 = vshll.u32 %v678, 16
      %v828 = vrot.slane %v826, 2
      %v829 = vor.u32 %v825, %v828
      %v830 = vsel %vm813, %v821, %v829
      %v832 = vshrl.u32 %v679, 16
      %v834 = vrot.slane %v832, 1
      %v835 = vshll.u32 %v679, 16
      %v837 = vrot.slane %v835, 2
      %v838 = vor.u32 %v834, %v837
      %v839 = vsel %vm813, %v829, %v838
      %v841 = vshrl.u32 %v680, 16
      %v843 = vrot.slane %v841, 1
      %v844 = vshll.u32 %v680, 16
      %v846 = vrot.slane %v844, 2
      %v847 = vor.u32 %v843, %v846
      %v848 = vsel %vm813, %v838, %v847
      %v850 = vshrl.u32 %v681, 16
      %v852 = vrot.slane %v850, 1
      %v853 = vshll.u32 %v681, 16
      %v855 = vrot.slane %v853, 2
      %v856 = vor.u32 %v852, %v855
      %v857 = vsel %vm813, %v847, %v856
      %v859 = vshrl.u32 %v812, 16
      %v861 = vrot.slane %v859, 1
      %v862 = vshll.u32 %v812, 16
      %v864 = vrot.slane %v862, 2
      %v865 = vor.u32 %v861, %v864
      %v866 = vsel %vm813, %v856, %v865
      %v871 = vunpack.c.l.b16 %v806
      %v872 = vunpack.c.l.b16 %v807
      %v873 = vunpack.c.l.b16 %v808
      %v874 = vunpack.c.l.b16 %v809
      %v875 = vpack.c.b16 %v872, %v871
      %v876 = vpack.c.b16 %v874, %v873
      %v880 = vsel %vm324, %v830, 0
      %v883 = vsel %vm324, %v839, 0
      %v886 = vsel %vm324, %v848, 0
      %v889 = vsel %vm324, %v857, 0
      %v892 = vsel %vm324, %v866, 0
      %894 = vmatprep.subr.bf16.mxu0 0
      %895 = vmatpush1.bf16.msra.mxu0 %v875
      %896 = vmatprep.subr.bf16.mxu0 0
      %897 = vmatpush1.bf16.msra.mxu0 %v876
      %898 = vmatprep.subr.bf16.mxu0 0
      %899 = vmatpush1.bf16.msra.mxu0 0
      %900 = vmatprep.subr.bf16.mxu0 0
      %901 = vmatpush1.bf16.msra.mxu0 0
      %902 = vmatprep.subr.bf16.mxu0 0
      %903 = vmatpush1.bf16.msra.mxu0 0
      %904 = vmatprep.subr.bf16.mxu0 0
      %905 = vmatpush1.bf16.msra.mxu0 0
      %906 = vmatprep.subr.bf16.mxu0 0
      %907 = vmatpush1.bf16.msra.mxu0 0
      %908 = vmatprep.subr.bf16.mxu0 0
      %909 = vmatpush1.bf16.msra.mxu0 0
      %910 = vmatprep.subr.bf16.mxu0 0
      %911 = vmatpush1.bf16.msra.mxu0 0
      %912 = vmatprep.subr.bf16.mxu0 0
      %913 = vmatpush1.bf16.msra.mxu0 0
      %914 = vmatprep.subr.bf16.mxu0 0
      %915 = vmatpush1.bf16.msra.mxu0 0
      %916 = vmatprep.subr.bf16.mxu0 0
      %917 = vmatpush1.bf16.msra.mxu0 0
      %918 = vmatprep.subr.bf16.mxu0 0
      %919 = vmatpush1.bf16.msra.mxu0 0
      %920 = vmatprep.subr.bf16.mxu0 0
      %921 = vmatpush1.bf16.msra.mxu0 0
      %922 = vmatprep.subr.bf16.mxu0 0
      %923 = vmatpush1.bf16.msra.mxu0 0
      %924 = vmatprep.subr.bf16.mxu0 0
      %925 = vmatpush1.bf16.msra.mxu0 0
      %926 = vmatprep.mubr.bf16.mxu0 0
      %927 = vmatmul.mubr.bf16.gmra.mrb[0].mxu0 %v880
      %v928 = vpop.f32.mrb[0].mxu0
      %v929 = vadd.f32 0.0, %v928
      %v930 = vpop.f32.mrb[0].mxu0
      %v931 = vpop.f32.mrb[0].mxu0
      %v932 = vadd.f32 0.0, %v931
      %v933 = vpop.f32.mrb[0].mxu0
      %934 = vmatprep.mubr.bf16.mxu0 0
      %935 = vmatmul.mubr.bf16.gmra.mrb[0].mxu0 %v883
      %v936 = vpop.f32.mrb[0].mxu0
      %v937 = vadd.f32 0.0, %v936
      %v938 = vpop.f32.mrb[0].mxu0
      %v939 = vpop.f32.mrb[0].mxu0
      %v940 = vadd.f32 0.0, %v939
      %v941 = vpop.f32.mrb[0].mxu0
      %942 = vmatprep.mubr.bf16.mxu0 0
      %943 = vmatmul.mubr.bf16.gmra.mrb[0].mxu0 %v886
      %v944 = vpop.f32.mrb[0].mxu0
      %v945 = vadd.f32 0.0, %v944
      %v946 = vpop.f32.mrb[0].mxu0
      %v947 = vpop.f32.mrb[0].mxu0
      %v948 = vadd.f32 0.0, %v947
      %v949 = vpop.f32.mrb[0].mxu0
      %950 = vmatprep.mubr.bf16.mxu0 0
      %951 = vmatmul.mubr.bf16.gmra.mrb[0].mxu0 %v889
      %v952 = vpop.f32.mrb[0].mxu0
      %v953 = vadd.f32 0.0, %v952
      %v954 = vpop.f32.mrb[0].mxu0
      %v955 = vpop.f32.mrb[0].mxu0
      %v956 = vadd.f32 0.0, %v955
      %v957 = vpop.f32.mrb[0].mxu0
      %958 = vmatprep.mubr.bf16.mxu0 0
      %959 = vmatmul.mubr.bf16.gmra.mrb[0].mxu0 %v892
      %v960 = vpop.f32.mrb[0].mxu0
      %v961 = vadd.f32 0.0, %v960
      %v962 = vpop.f32.mrb[0].mxu0
      %v963 = vpop.f32.mrb[0].mxu0
      %v964 = vadd.f32 0.0, %v963
      %v965 = vpop.f32.mrb[0].mxu0
      %966 = vdwg.mxu0
      %v967 = vadd.f32 %v794, %v929
      %v968 = vadd.f32 %v795, %v932
      %v969 = vadd.f32 %v796, %v937
      %v970 = vadd.f32 %v797, %v940
      %v971 = vadd.f32 %v798, %v945
      %v972 = vadd.f32 %v799, %v948
      %v973 = vadd.f32 %v800, %v953
      %v974 = vadd.f32 %v801, %v956
      %v975 = vadd.f32 %v802, %v961
      %v976 = vadd.f32 %v803, %v964
      %v977 = vld [vmem:[%s207 + $0x4] sm:$0xc]
      %s978 = scalar_lea.vmem %s1, 80
      %v979 = vld [vmem:[%s978] sm:$0xf]
      %v980 = vld [vmem:[%s978 + $0x4] sm:$0xf]
      %v981 = vld [vmem:[%s978 + $0x8] sm:$0xf]
      %v982 = vld [vmem:[%s978 + $0xc] sm:$0xf]
      %v984 = vunpack.c.l.b16 %v977
      %v985 = vpack.c.b16 %v667, %v984
      %vm986 = vcmask 1045504
      %v987 = vrot.slane %v985, 2
      %v988 = vrot.slane %v678, 2
      %v989 = vsel %vm986, %v987, %v988
      %v990 = vrot.slane %v679, 2
      %v991 = vsel %vm986, %v988, %v990
      %v992 = vrot.slane %v680, 2
      %v993 = vsel %vm986, %v990, %v992
      %v994 = vrot.slane %v681, 2
      %v995 = vsel %vm986, %v992, %v994
      %v996 = vrot.slane %v812, 2
      %v997 = vsel %vm986, %v994, %v996
      %v1002 = vunpack.c.l.b16 %v979
      %v1003 = vunpack.c.l.b16 %v980
      %v1004 = vunpack.c.l.b16 %v981
      %v1005 = vunpack.c.l.b16 %v982
      %v1006 = vpack.c.b16 %v1003, %v1002
      %v1007 = vpack.c.b16 %v1005, %v1004
      %v1011 = vsel %vm324, %v989, 0
      %v1014 = vsel %vm324, %v991, 0
      %v1017 = vsel %vm324, %v993, 0
      %v1020 = vsel %vm324, %v995, 0
      %v1023 = vsel %vm324, %v997, 0
      %1025 = vmatprep.subr.bf16.mxu0 0
      %1026 = vmatpush1.bf16.msra.mxu0 %v1006
      %1027 = vmatprep.subr.bf16.mxu0 0
      %1028 = vmatpush1.bf16.msra.mxu0 %v1007
      %1029 = vmatprep.subr.bf16.mxu0 0
      %1030 = vmatpush1.bf16.msra.mxu0 0
      %1031 = vmatprep.subr.bf16.mxu0 0
      %1032 = vmatpush1.bf16.msra.mxu0 0
      %1033 = vmatprep.subr.bf16.mxu0 0
      %1034 = vmatpush1.bf16.msra.mxu0 0
      %1035 = vmatprep.subr.bf16.mxu0 0
      %1036 = vmatpush1.bf16.msra.mxu0 0
      %1037 = vmatprep.subr.bf16.mxu0 0
      %1038 = vmatpush1.bf16.msra.mxu0 0
      %1039 = vmatprep.subr.bf16.mxu0 0
      %1040 = vmatpush1.bf16.msra.mxu0 0
      %1041 = vmatprep.subr.bf16.mxu0 0
      %1042 = vmatpush1.bf16.msra.mxu0 0
      %1043 = vmatprep.subr.bf16.mxu0 0
      %1044 = vmatpush1.bf16.msra.mxu0 0
      %1045 = vmatprep.subr.bf16.mxu0 0
      %1046 = vmatpush1.bf16.msra.mxu0 0
      %1047 = vmatprep.subr.bf16.mxu0 0
      %1048 = vmatpush1.bf16.msra.mxu0 0
      %1049 = vmatprep.subr.bf16.mxu0 0
      %1050 = vmatpush1.bf16.msra.mxu0 0
      %1051 = vmatprep.subr.bf16.mxu0 0
      %1052 = vmatpush1.bf16.msra.mxu0 0
      %1053 = vmatprep.subr.bf16.mxu0 0
      %1054 = vmatpush1.bf16.msra.mxu0 0
      %1055 = vmatprep.subr.bf16.mxu0 0
      %1056 = vmatpush1.bf16.msra.mxu0 0
      %1057 = vmatprep.mubr.bf16.mxu0 0
      %1058 = vmatmul.mubr.bf16.gmra.mrb[0].mxu0 %v1011
      %v1059 = vpop.f32.mrb[0].mxu0
      %v1060 = vadd.f32 0.0, %v1059
      %v1061 = vpop.f32.mrb[0].mxu0
      %v1062 = vpop.f32.mrb[0].mxu0
      %v1063 = vadd.f32 0.0, %v1062
      %v1064 = vpop.f32.mrb[0].mxu0
      %1065 = vmatprep.mubr.bf16.mxu0 0
      %1066 = vmatmul.mubr.bf16.gmra.mrb[0].mxu0 %v1014
      %v1067 = vpop.f32.mrb[0].mxu0
      %v1068 = vadd.f32 0.0, %v1067
      %v1069 = vpop.f32.mrb[0].mxu0
      %v1070 = vpop.f32.mrb[0].mxu0
      %v1071 = vadd.f32 0.0, %v1070
      %v1072 = vpop.f32.mrb[0].mxu0
      %1073 = vmatprep.mubr.bf16.mxu0 0
      %1074 = vmatmul.mubr.bf16.gmra.mrb[0].mxu0 %v1017
      %v1075 = vpop.f32.mrb[0].mxu0
      %v1076 = vadd.f32 0.0, %v1075
      %v1077 = vpop.f32.mrb[0].mxu0
      %v1078 = vpop.f32.mrb[0].mxu0
      %v1079 = vadd.f32 0.0, %v1078
      %v1080 = vpop.f32.mrb[0].mxu0
      %1081 = vmatprep.mubr.bf16.mxu0 0
      %1082 = vmatmul.mubr.bf16.gmra.mrb[0].mxu0 %v1020
      %v1083 = vpop.f32.mrb[0].mxu0
      %v1084 = vadd.f32 0.0, %v1083
      %v1085 = vpop.f32.mrb[0].mxu0
      %v1086 = vpop.f32.mrb[0].mxu0
      %v1087 = vadd.f32 0.0, %v1086
      %v1088 = vpop.f32.mrb[0].mxu0
      %1089 = vmatprep.mubr.bf16.mxu0 0
      %1090 = vmatmul.mubr.bf16.gmra.mrb[0].mxu0 %v1023
      %v1091 = vpop.f32.mrb[0].mxu0
      %v1092 = vadd.f32 0.0, %v1091
      %v1093 = vpop.f32.mrb[0].mxu0
      %v1094 = vpop.f32.mrb[0].mxu0
      %v1095 = vadd.f32 0.0, %v1094
      %v1096 = vpop.f32.mrb[0].mxu0
      %1097 = vdwg.mxu0
      %v1098 = vadd.f32 %v967, %v1060
      %v1099 = vadd.f32 %v968, %v1063
      %v1100 = vadd.f32 %v969, %v1068
      %v1101 = vadd.f32 %v970, %v1071
      %v1102 = vadd.f32 %v971, %v1076
      %v1103 = vadd.f32 %v972, %v1079
      %v1104 = vadd.f32 %v973, %v1084
      %v1105 = vadd.f32 %v974, %v1087
      %v1106 = vadd.f32 %v975, %v1092
      %v1107 = vadd.f32 %v976, %v1095
      %v1108 = vld [vmem:[%s207 + $0x8] sm:$0xc]
      %v1109 = vld [vmem:[%s207 + $0xc] sm:$0xf]
      %v1110 = vld [vmem:[%s207 + $0x10] sm:$0xf]
      %v1111 = vld [vmem:[%s207 + $0x14] sm:$0xf]
      %v1112 = vld [vmem:[%s207 + $0x18] sm:$0xf]
      %v1113 = vld [vmem:[%s207 + $0x1c] sm:$0xf]
      %v1114 = vld [vmem:[%s207 + $0x20] sm:$0xf]
      %v1115 = vld [vmem:[%s207 + $0x24] sm:$0xf]
      %v1116 = vld [vmem:[%s207 + $0x28] sm:$0xf]
      %v1117 = vld [vmem:[%s207 + $0x2c] sm:$0xf]
      %v1118 = vld [vmem:[%s207 + $0x30] sm:$0x3]
      %s1119 = scalar_lea.vmem %s1, 96
      %v1120 = vld [vmem:[%s1119] sm:$0xf]
      %v1121 = vld [vmem:[%s1119 + $0x4] sm:$0xf]
      %v1122 = vld [vmem:[%s1119 + $0x8] sm:$0xf]
      %v1123 = vld [vmem:[%s1119 + $0xc] sm:$0xf]
      %v1135 = vunpack.c.l.b16 %v1108
      %v1136 = vunpack.c.l.b16 %v1109
      %v1137 = vunpack.c.l.b16 %v1110
      %v1138 = vunpack.c.l.b16 %v1111
      %v1139 = vunpack.c.l.b16 %v1112
      %v1140 = vunpack.c.l.b16 %v1113
      %v1141 = vunpack.c.l.b16 %v1114
      %v1142 = vunpack.c.l.b16 %v1115
      %v1143 = vunpack.c.l.b16 %v1116
      %v1144 = vunpack.c.l.b16 %v1117
      %v1145 = vunpack.c.l.b16 %v1118
      %v1146 = vpack.c.b16 %v1136, %v1135
      %v1147 = vpack.c.b16 %v1138, %v1137
      %v1148 = vpack.c.b16 %v1140, %v1139
      %v1149 = vpack.c.b16 %v1142, %v1141
      %v1150 = vpack.c.b16 %v1144, %v1143
      %v1151 = vpack.c.b16 %v1145, %v1145
      %v1152 = vrot.slane %v1146, 2
      %v1153 = vrot.slane %v1147, 2
      %v1154 = vsel %vm986, %v1152, %v1153
      %v1155 = vrot.slane %v1148, 2
      %v1156 = vsel %vm986, %v1153, %v1155
      %v1157 = vrot.slane %v1149, 2
      %v1158 = vsel %vm986, %v1155, %v1157
      %v1159 = vrot.slane %v1150, 2
      %v1160 = vsel %vm986, %v1157, %v1159
      %v1161 = vrot.slane %v1151, 2
      %v1162 = vsel %vm986, %v1159, %v1161
      %v1167 = vunpack.c.l.b16 %v1120
      %v1168 = vunpack.c.l.b16 %v1121
      %v1169 = vunpack.c.l.b16 %v1122
      %v1170 = vunpack.c.l.b16 %v1123
      %v1171 = vpack.c.b16 %v1168, %v1167
      %v1172 = vpack.c.b16 %v1170, %v1169
      %v1176 = vsel %vm324, %v1154, 0
      %v1179 = vsel %vm324, %v1156, 0
      %v1182 = vsel %vm324, %v1158, 0
      %v1185 = vsel %vm324, %v1160, 0
      %v1188 = vsel %vm324, %v1162, 0
      %1190 = vmatprep.subr.bf16.mxu0 0
      %1191 = vmatpush1.bf16.msra.mxu0 %v1171
      %1192 = vmatprep.subr.bf16.mxu0 0
      %1193 = vmatpush1.bf16.msra.mxu0 %v1172
      %1194 = vmatprep.subr.bf16.mxu0 0
      %1195 = vmatpush1.bf16.msra.mxu0 0
      %1196 = vmatprep.subr.bf16.mxu0 0
      %1197 = vmatpush1.bf16.msra.mxu0 0
      %1198 = vmatprep.subr.bf16.mxu0 0
      %1199 = vmatpush1.bf16.msra.mxu0 0
      %1200 = vmatprep.subr.bf16.mxu0 0
      %1201 = vmatpush1.bf16.msra.mxu0 0
      %1202 = vmatprep.subr.bf16.mxu0 0
      %1203 = vmatpush1.bf16.msra.mxu0 0
      %1204 = vmatprep.subr.bf16.mxu0 0
      %1205 = vmatpush1.bf16.msra.mxu0 0
      %1206 = vmatprep.subr.bf16.mxu0 0
      %1207 = vmatpush1.bf16.msra.mxu0 0
      %1208 = vmatprep.subr.bf16.mxu0 0
      %1209 = vmatpush1.bf16.msra.mxu0 0
      %1210 = vmatprep.subr.bf16.mxu0 0
      %1211 = vmatpush1.bf16.msra.mxu0 0
      %1212 = vmatprep.subr.bf16.mxu0 0
      %1213 = vmatpush1.bf16.msra.mxu0 0
      %1214 = vmatprep.subr.bf16.mxu0 0
      %1215 = vmatpush1.bf16.msra.mxu0 0
      %1216 = vmatprep.subr.bf16.mxu0 0
      %1217 = vmatpush1.bf16.msra.mxu0 0
      %1218 = vmatprep.subr.bf16.mxu0 0
      %1219 = vmatpush1.bf16.msra.mxu0 0
      %1220 = vmatprep.subr.bf16.mxu0 0
      %1221 = vmatpush1.bf16.msra.mxu0 0
      %1222 = vmatprep.mubr.bf16.mxu0 0
      %1223 = vmatmul.mubr.bf16.gmra.mrb[0].mxu0 %v1176
      %v1224 = vpop.f32.mrb[0].mxu0
      %v1225 = vadd.f32 0.0, %v1224
      %v1226 = vpop.f32.mrb[0].mxu0
      %v1227 = vpop.f32.mrb[0].mxu0
      %v1228 = vadd.f32 0.0, %v1227
      %v1229 = vpop.f32.mrb[0].mxu0
      %1230 = vmatprep.mubr.bf16.mxu0 0
      %1231 = vmatmul.mubr.bf16.gmra.mrb[0].mxu0 %v1179
      %v1232 = vpop.f32.mrb[0].mxu0
      %v1233 = vadd.f32 0.0, %v1232
      %v1234 = vpop.f32.mrb[0].mxu0
      %v1235 = vpop.f32.mrb[0].mxu0
      %v1236 = vadd.f32 0.0, %v1235
      %v1237 = vpop.f32.mrb[0].mxu0
      %1238 = vmatprep.mubr.bf16.mxu0 0
      %1239 = vmatmul.mubr.bf16.gmra.mrb[0].mxu0 %v1182
      %v1240 = vpop.f32.mrb[0].mxu0
      %v1241 = vadd.f32 0.0, %v1240
      %v1242 = vpop.f32.mrb[0].mxu0
      %v1243 = vpop.f32.mrb[0].mxu0
      %v1244 = vadd.f32 0.0, %v1243
      %v1245 = vpop.f32.mrb[0].mxu0
      %1246 = vmatprep.mubr.bf16.mxu0 0
      %1247 = vmatmul.mubr.bf16.gmra.mrb[0].mxu0 %v1185
      %v1248 = vpop.f32.mrb[0].mxu0
      %v1249 = vadd.f32 0.0, %v1248
      %v1250 = vpop.f32.mrb[0].mxu0
      %v1251 = vpop.f32.mrb[0].mxu0
      %v1252 = vadd.f32 0.0, %v1251
      %v1253 = vpop.f32.mrb[0].mxu0
      %1254 = vmatprep.mubr.bf16.mxu0 0
      %1255 = vmatmul.mubr.bf16.gmra.mrb[0].mxu0 %v1188
      %v1256 = vpop.f32.mrb[0].mxu0
      %v1257 = vadd.f32 0.0, %v1256
      %v1258 = vpop.f32.mrb[0].mxu0
      %v1259 = vpop.f32.mrb[0].mxu0
      %v1260 = vadd.f32 0.0, %v1259
      %v1261 = vpop.f32.mrb[0].mxu0
      %1262 = vdwg.mxu0
      %v1263 = vadd.f32 %v1098, %v1225
      %v1264 = vadd.f32 %v1099, %v1228
      %v1265 = vadd.f32 %v1100, %v1233
      %v1266 = vadd.f32 %v1101, %v1236
      %v1267 = vadd.f32 %v1102, %v1241
      %v1268 = vadd.f32 %v1103, %v1244
      %v1269 = vadd.f32 %v1104, %v1249
      %v1270 = vadd.f32 %v1105, %v1252
      %v1271 = vadd.f32 %v1106, %v1257
      %v1272 = vadd.f32 %v1107, %v1260
      %v1273 = vld [vmem:[%s207 + $0x30] sm:$0x7]
      %s1274 = scalar_lea.vmem %s1, 112
      %v1275 = vld [vmem:[%s1274] sm:$0xf]
      %v1276 = vld [vmem:[%s1274 + $0x4] sm:$0xf]
      %v1277 = vld [vmem:[%s1274 + $0x8] sm:$0xf]
      %v1278 = vld [vmem:[%s1274 + $0xc] sm:$0xf]
      %v1280 = vunpack.c.l.b16 %v1273
      %v1281 = vpack.c.b16 %v1280, %v1280
      %vm1282 = vsmask.f32 5376
      %v1284 = vshrl.u32 %v1146, 16
      %v1286 = vrot.slane %v1284, 2
      %v1287 = vshll.u32 %v1146, 16
      %v1289 = vrot.slane %v1287, 3
      %v1290 = vor.u32 %v1286, %v1289
      %v1292 = vshrl.u32 %v1147, 16
      %v1294 = vrot.slane %v1292, 2
      %v1295 = vshll.u32 %v1147, 16
      %v1297 = vrot.slane %v1295, 3
      %v1298 = vor.u32 %v1294, %v1297
      %v1299 = vsel %vm1282, %v1290, %v1298
      %v1301 = vshrl.u32 %v1148, 16
      %v1303 = vrot.slane %v1301, 2
      %v1304 = vshll.u32 %v1148, 16
      %v1306 = vrot.slane %v1304, 3
      %v1307 = vor.u32 %v1303, %v1306
      %v1308 = vsel %vm1282, %v1298, %v1307
      %v1310 = vshrl.u32 %v1149, 16
      %v1312 = vrot.slane %v1310, 2
      %v1313 = vshll.u32 %v1149, 16
      %v1315 = vrot.slane %v1313, 3
      %v1316 = vor.u32 %v1312, %v1315
      %v1317 = vsel %vm1282, %v1307, %v1316
      %v1319 = vshrl.u32 %v1150, 16
      %v1321 = vrot.slane %v1319, 2
      %v1322 = vshll.u32 %v1150, 16
      %v1324 = vrot.slane %v1322, 3
      %v1325 = vor.u32 %v1321, %v1324
      %v1326 = vsel %vm1282, %v1316, %v1325
      %v1328 = vshrl.u32 %v1281, 16
      %v1330 = vrot.slane %v1328, 2
      %v1331 = vshll.u32 %v1281, 16
      %v1333 = vrot.slane %v1331, 3
      %v1334 = vor.u32 %v1330, %v1333
      %v1335 = vsel %vm1282, %v1325, %v1334
      %v1340 = vunpack.c.l.b16 %v1275
      %v1341 = vunpack.c.l.b16 %v1276
      %v1342 = vunpack.c.l.b16 %v1277
      %v1343 = vunpack.c.l.b16 %v1278
      %v1344 = vpack.c.b16 %v1341, %v1340
      %v1345 = vpack.c.b16 %v1343, %v1342
      %v1349 = vsel %vm324, %v1299, 0
      %v1352 = vsel %vm324, %v1308, 0
      %v1355 = vsel %vm324, %v1317, 0
      %v1358 = vsel %vm324, %v1326, 0
      %v1361 = vsel %vm324, %v1335, 0
      %1363 = vmatprep.subr.bf16.mxu0 0
      %1364 = vmatpush1.bf16.msra.mxu0 %v1344
      %1365 = vmatprep.subr.bf16.mxu0 0
      %1366 = vmatpush1.bf16.msra.mxu0 %v1345
      %1367 = vmatprep.subr.bf16.mxu0 0
      %1368 = vmatpush1.bf16.msra.mxu0 0
      %1369 = vmatprep.subr.bf16.mxu0 0
      %1370 = vmatpush1.bf16.msra.mxu0 0
      %1371 = vmatprep.subr.bf16.mxu0 0
      %1372 = vmatpush1.bf16.msra.mxu0 0
      %1373 = vmatprep.subr.bf16.mxu0 0
      %1374 = vmatpush1.bf16.msra.mxu0 0
      %1375 = vmatprep.subr.bf16.mxu0 0
      %1376 = vmatpush1.bf16.msra.mxu0 0
      %1377 = vmatprep.subr.bf16.mxu0 0
      %1378 = vmatpush1.bf16.msra.mxu0 0
      %1379 = vmatprep.subr.bf16.mxu0 0
      %1380 = vmatpush1.bf16.msra.mxu0 0
      %1381 = vmatprep.subr.bf16.mxu0 0
      %1382 = vmatpush1.bf16.msra.mxu0 0
      %1383 = vmatprep.subr.bf16.mxu0 0
      %1384 = vmatpush1.bf16.msra.mxu0 0
      %1385 = vmatprep.subr.bf16.mxu0 0
      %1386 = vmatpush1.bf16.msra.mxu0 0
      %1387 = vmatprep.subr.bf16.mxu0 0
      %1388 = vmatpush1.bf16.msra.mxu0 0
      %1389 = vmatprep.subr.bf16.mxu0 0
      %1390 = vmatpush1.bf16.msra.mxu0 0
      %1391 = vmatprep.subr.bf16.mxu0 0
      %1392 = vmatpush1.bf16.msra.mxu0 0
      %1393 = vmatprep.subr.bf16.mxu0 0
      %1394 = vmatpush1.bf16.msra.mxu0 0
      %1395 = vmatprep.mubr.bf16.mxu0 0
      %1396 = vmatmul.mubr.bf16.gmra.mrb[0].mxu0 %v1349
      %v1397 = vpop.f32.mrb[0].mxu0
      %v1398 = vadd.f32 0.0, %v1397
      %v1399 = vpop.f32.mrb[0].mxu0
      %v1400 = vpop.f32.mrb[0].mxu0
      %v1401 = vadd.f32 0.0, %v1400
      %v1402 = vpop.f32.mrb[0].mxu0
      %1403 = vmatprep.mubr.bf16.mxu0 0
      %1404 = vmatmul.mubr.bf16.gmra.mrb[0].mxu0 %v1352
      %v1405 = vpop.f32.mrb[0].mxu0
      %v1406 = vadd.f32 0.0, %v1405
      %v1407 = vpop.f32.mrb[0].mxu0
      %v1408 = vpop.f32.mrb[0].mxu0
      %v1409 = vadd.f32 0.0, %v1408
      %v1410 = vpop.f32.mrb[0].mxu0
      %1411 = vmatprep.mubr.bf16.mxu0 0
      %1412 = vmatmul.mubr.bf16.gmra.mrb[0].mxu0 %v1355
      %v1413 = vpop.f32.mrb[0].mxu0
      %v1414 = vadd.f32 0.0, %v1413
      %v1415 = vpop.f32.mrb[0].mxu0
      %v1416 = vpop.f32.mrb[0].mxu0
      %v1417 = vadd.f32 0.0, %v1416
      %v1418 = vpop.f32.mrb[0].mxu0
      %1419 = vmatprep.mubr.bf16.mxu0 0
      %1420 = vmatmul.mubr.bf16.gmra.mrb[0].mxu0 %v1358
      %v1421 = vpop.f32.mrb[0].mxu0
      %v1422 = vadd.f32 0.0, %v1421
      %v1423 = vpop.f32.mrb[0].mxu0
      %v1424 = vpop.f32.mrb[0].mxu0
      %v1425 = vadd.f32 0.0, %v1424
      %v1426 = vpop.f32.mrb[0].mxu0
      %1427 = vmatprep.mubr.bf16.mxu0 0
      %1428 = vmatmul.mubr.bf16.gmra.mrb[0].mxu0 %v1361
      %v1429 = vpop.f32.mrb[0].mxu0
      %v1430 = vadd.f32 0.0, %v1429
      %v1431 = vpop.f32.mrb[0].mxu0
      %v1432 = vpop.f32.mrb[0].mxu0
      %v1433 = vadd.f32 0.0, %v1432
      %v1434 = vpop.f32.mrb[0].mxu0
      %1435 = vdwg.mxu0
      %v1436 = vadd.f32 %v1263, %v1398
      %v1437 = vadd.f32 %v1264, %v1401
      %v1438 = vadd.f32 %v1265, %v1406
      %v1439 = vadd.f32 %v1266, %v1409
      %v1440 = vadd.f32 %v1267, %v1414
      %v1441 = vadd.f32 %v1268, %v1417
      %v1442 = vadd.f32 %v1269, %v1422
      %v1443 = vadd.f32 %v1270, %v1425
      %v1444 = vadd.f32 %v1271, %v1430
      %v1445 = vadd.f32 %v1272, %v1433
      %v1446 = vld [vmem:[%s207 + $0x8] sm:$0x8]
      %s1447 = scalar_lea.vmem %s1, 128
      %v1448 = vld [vmem:[%s1447] sm:$0xf]
      %v1449 = vld [vmem:[%s1447 + $0x4] sm:$0xf]
      %v1450 = vld [vmem:[%s1447 + $0x8] sm:$0xf]
      %v1451 = vld [vmem:[%s1447 + $0xc] sm:$0xf]
      %v1453 = vunpack.c.l.b16 %v1446
      %v1454 = vpack.c.b16 %v1136, %v1453
      %vm1455 = vcmask 1044480
      %v1456 = vrot.slane %v1454, 3
      %v1457 = vrot.slane %v1147, 3
      %v1458 = vsel %vm1455, %v1456, %v1457
      %v1459 = vrot.slane %v1148, 3
      %v1460 = vsel %vm1455, %v1457, %v1459
      %v1461 = vrot.slane %v1149, 3
      %v1462 = vsel %vm1455, %v1459, %v1461
      %v1463 = vrot.slane %v1150, 3
      %v1464 = vsel %vm1455, %v1461, %v1463
      %v1465 = vrot.slane %v1281, 3
      %v1466 = vsel %vm1455, %v1463, %v1465
      %v1471 = vunpack.c.l.b16 %v1448
      %v1472 = vunpack.c.l.b16 %v1449
      %v1473 = vunpack.c.l.b16 %v1450
      %v1474 = vunpack.c.l.b16 %v1451
      %v1475 = vpack.c.b16 %v1472, %v1471
      %v1476 = vpack.c.b16 %v1474, %v1473
      %v1480 = vsel %vm324, %v1458, 0
      %v1483 = vsel %vm324, %v1460, 0
      %v1486 = vsel %vm324, %v1462, 0
      %v1489 = vsel %vm324, %v1464, 0
      %v1492 = vsel %vm324, %v1466, 0
      %1494 = vmatprep.subr.bf16.mxu0 0
      %1495 = vmatpush1.bf16.msra.mxu0 %v1475
      %1496 = vmatprep.subr.bf16.mxu0 0
      %1497 = vmatpush1.bf16.msra.mxu0 %v1476
      %1498 = vmatprep.subr.bf16.mxu0 0
      %1499 = vmatpush1.bf16.msra.mxu0 0
      %1500 = vmatprep.subr.bf16.mxu0 0
      %1501 = vmatpush1.bf16.msra.mxu0 0
      %1502 = vmatprep.subr.bf16.mxu0 0
      %1503 = vmatpush1.bf16.msra.mxu0 0
      %1504 = vmatprep.subr.bf16.mxu0 0
      %1505 = vmatpush1.bf16.msra.mxu0 0
      %1506 = vmatprep.subr.bf16.mxu0 0
      %1507 = vmatpush1.bf16.msra.mxu0 0
      %1508 = vmatprep.subr.bf16.mxu0 0
      %1509 = vmatpush1.bf16.msra.mxu0 0
      %1510 = vmatprep.subr.bf16.mxu0 0
      %1511 = vmatpush1.bf16.msra.mxu0 0
      %1512 = vmatprep.subr.bf16.mxu0 0
      %1513 = vmatpush1.bf16.msra.mxu0 0
      %1514 = vmatprep.subr.bf16.mxu0 0
      %1515 = vmatpush1.bf16.msra.mxu0 0
      %1516 = vmatprep.subr.bf16.mxu0 0
      %1517 = vmatpush1.bf16.msra.mxu0 0
      %1518 = vmatprep.subr.bf16.mxu0 0
      %1519 = vmatpush1.bf16.msra.mxu0 0
      %1520 = vmatprep.subr.bf16.mxu0 0
      %1521 = vmatpush1.bf16.msra.mxu0 0
      %1522 = vmatprep.subr.bf16.mxu0 0
      %1523 = vmatpush1.bf16.msra.mxu0 0
      %1524 = vmatprep.subr.bf16.mxu0 0
      %1525 = vmatpush1.bf16.msra.mxu0 0
      %1526 = vmatprep.mubr.bf16.mxu0 0
      %1527 = vmatmul.mubr.bf16.gmra.mrb[0].mxu0 %v1480
      %v1528 = vpop.f32.mrb[0].mxu0
      %v1529 = vadd.f32 0.0, %v1528
      %v1530 = vpop.f32.mrb[0].mxu0
      %v1531 = vpop.f32.mrb[0].mxu0
      %v1532 = vadd.f32 0.0, %v1531
      %v1533 = vpop.f32.mrb[0].mxu0
      %1534 = vmatprep.mubr.bf16.mxu0 0
      %1535 = vmatmul.mubr.bf16.gmra.mrb[0].mxu0 %v1483
      %v1536 = vpop.f32.mrb[0].mxu0
      %v1537 = vadd.f32 0.0, %v1536
      %v1538 = vpop.f32.mrb[0].mxu0
      %v1539 = vpop.f32.mrb[0].mxu0
      %v1540 = vadd.f32 0.0, %v1539
      %v1541 = vpop.f32.mrb[0].mxu0
      %1542 = vmatprep.mubr.bf16.mxu0 0
      %1543 = vmatmul.mubr.bf16.gmra.mrb[0].mxu0 %v1486
      %v1544 = vpop.f32.mrb[0].mxu0
      %v1545 = vadd.f32 0.0, %v1544
      %v1546 = vpop.f32.mrb[0].mxu0
      %v1547 = vpop.f32.mrb[0].mxu0
      %v1548 = vadd.f32 0.0, %v1547
      %v1549 = vpop.f32.mrb[0].mxu0
      %1550 = vmatprep.mubr.bf16.mxu0 0
      %1551 = vmatmul.mubr.bf16.gmra.mrb[0].mxu0 %v1489
      %v1552 = vpop.f32.mrb[0].mxu0
      %v1553 = vadd.f32 0.0, %v1552
      %v1554 = vpop.f32.mrb[0].mxu0
      %v1555 = vpop.f32.mrb[0].mxu0
      %v1556 = vadd.f32 0.0, %v1555
      %v1557 = vpop.f32.mrb[0].mxu0
      %1558 = vmatprep.mubr.bf16.mxu0 0
      %1559 = vmatmul.mubr.bf16.gmra.mrb[0].mxu0 %v1492
      %v1560 = vpop.f32.mrb[0].mxu0
      %v1561 = vadd.f32 0.0, %v1560
      %v1562 = vpop.f32.mrb[0].mxu0
      %v1563 = vpop.f32.mrb[0].mxu0
      %v1564 = vadd.f32 0.0, %v1563
      %v1565 = vpop.f32.mrb[0].mxu0
      %1566 = vdwg.mxu0
      %v1567 = vadd.f32 %v1436, %v1529
      %v1568 = vadd.f32 %v1437, %v1532
      %v1569 = vadd.f32 %v1438, %v1537
      %v1570 = vadd.f32 %v1439, %v1540
      %v1571 = vadd.f32 %v1440, %v1545
      %v1572 = vadd.f32 %v1441, %v1548
      %v1573 = vadd.f32 %v1442, %v1553
      %v1574 = vadd.f32 %v1443, %v1556
      %v1575 = vadd.f32 %v1444, %v1561
      %v1576 = vadd.f32 %v1445, %v1564
      %v1577 = vld [vmem:[%s2] sm:$0x1]
      %v1579 = vlaneseq
      %v1580 = vshrl.u32 %v1579, 7
      %v1581 = vsub.s32 0, %v1580
      %v1582 = vrot.slane %v1577, %v1581
      %v1584 = vadd.f32 %v1567, %v1582
      %v1585 = vadd.f32 %v1568, %v1582
      %v1586 = vadd.f32 %v1569, %v1582
      %v1587 = vadd.f32 %v1570, %v1582
      %v1588 = vadd.f32 %v1571, %v1582
      %v1589 = vadd.f32 %v1572, %v1582
      %v1590 = vadd.f32 %v1573, %v1582
      %v1591 = vadd.f32 %v1574, %v1582
      %v1592 = vadd.f32 %v1575, %v1582
      %v1593 = vadd.f32 %v1576, %v1582
      %v1594 = vmax.f32 %v1584, 0.0
      %v1595 = vmax.f32 %v1585, 0.0
      %v1596 = vmax.f32 %v1586, 0.0
      %v1597 = vmax.f32 %v1587, 0.0
      %v1598 = vmax.f32 %v1588, 0.0
      %v1599 = vmax.f32 %v1589, 0.0
      %v1600 = vmax.f32 %v1590, 0.0
      %v1601 = vmax.f32 %v1591, 0.0
      %v1602 = vmax.f32 %v1592, 0.0
      %v1603 = vmax.f32 %v1593, 0.0
      %v1604 = vld [vmem:[%s212] sm:$0xf]
      %v1605 = vld [vmem:[%s212 + $0x4] sm:$0xf]
      %v1606 = vld [vmem:[%s212 + $0x8] sm:$0xf]
      %v1607 = vld [vmem:[%s212 + $0xc] sm:$0xf]
      %v1608 = vld [vmem:[%s212 + $0x10] sm:$0xf]
      %v1609 = vld [vmem:[%s212 + $0x14] sm:$0xf]
      %v1610 = vld [vmem:[%s212 + $0x18] sm:$0xf]
      %v1611 = vld [vmem:[%s212 + $0x1c] sm:$0xf]
      %v1612 = vld [vmem:[%s212 + $0x20] sm:$0xf]
      %v1613 = vld [vmem:[%s212 + $0x24] sm:$0xf]
      %v1614 = vunpack.c.l.bf16 %v1604
      %v1615 = vunpack.c.l.bf16 %v1605
      %v1616 = vunpack.c.l.bf16 %v1606
      %v1617 = vunpack.c.l.bf16 %v1607
      %v1618 = vunpack.c.l.bf16 %v1608
      %v1619 = vunpack.c.l.bf16 %v1609
      %v1620 = vunpack.c.l.bf16 %v1610
      %v1621 = vunpack.c.l.bf16 %v1611
      %v1622 = vunpack.c.l.bf16 %v1612
      %v1623 = vunpack.c.l.bf16 %v1613
      %v1624 = vadd.f32 %v1594, %v1614
      %v1625 = vadd.f32 %v1595, %v1615
      %v1626 = vadd.f32 %v1596, %v1616
      %v1627 = vadd.f32 %v1597, %v1617
      %v1628 = vadd.f32 %v1598, %v1618
      %v1629 = vadd.f32 %v1599, %v1619
      %v1630 = vadd.f32 %v1600, %v1620
      %v1631 = vadd.f32 %v1601, %v1621
      %v1632 = vadd.f32 %v1602, %v1622
      %v1633 = vadd.f32 %v1603, %v1623
      %v1634 = vpack.c.bf16 %v1625, %v1624
      %v1635 = vpack.c.bf16 %v1627, %v1626
      %v1636 = vpack.c.bf16 %v1629, %v1628
      %v1637 = vpack.c.bf16 %v1631, %v1630
      %v1638 = vpack.c.bf16 %v1633, %v1632
      %v1644 = vunpack.c.l.b16 %v1634
      %v1645 = vunpack.c.h.b16 %v1634
      %v1646 = vunpack.c.l.b16 %v1635
      %v1647 = vunpack.c.h.b16 %v1635
      %v1648 = vunpack.c.l.b16 %v1636
      %v1649 = vunpack.c.h.b16 %v1636
      %v1650 = vunpack.c.l.b16 %v1637
      %v1651 = vunpack.c.h.b16 %v1637
      %v1652 = vunpack.c.l.b16 %v1638
      %v1653 = vunpack.c.h.b16 %v1638
      %v1654 = vpack.c.b16 %v1644, %v1644
      %v1655 = vpack.c.b16 %v1645, %v1645
      %v1656 = vpack.c.b16 %v1646, %v1646
      %v1657 = vpack.c.b16 %v1647, %v1647
      %v1658 = vpack.c.b16 %v1648, %v1648
      %v1659 = vpack.c.b16 %v1649, %v1649
      %v1660 = vpack.c.b16 %v1650, %v1650
      %v1661 = vpack.c.b16 %v1651, %v1651
      %v1662 = vpack.c.b16 %v1652, %v1652
      %v1663 = vpack.c.b16 %v1653, %v1653
      %vm1674 = vcmask 257024
      %1675 = vst.msk [vmem:[%s217] sm:$0xf] %vm1674, %v1654
      %1676 = vst.msk [vmem:[%s217 + $0x4] sm:$0xf] %vm1674, %v1655
      %1677 = vst.msk [vmem:[%s217 + $0x8] sm:$0xf] %vm1674, %v1656
      %1678 = vst.msk [vmem:[%s217 + $0xc] sm:$0xf] %vm1674, %v1657
      %1679 = vst.msk [vmem:[%s217 + $0x10] sm:$0xf] %vm1674, %v1658
      %1680 = vst.msk [vmem:[%s217 + $0x14] sm:$0xf] %vm1674, %v1659
      %1681 = vst.msk [vmem:[%s217 + $0x18] sm:$0xf] %vm1674, %v1660
      %1682 = vst.msk [vmem:[%s217 + $0x1c] sm:$0xf] %vm1674, %v1661
      %1683 = vst.msk [vmem:[%s217 + $0x20] sm:$0xf] %vm1674, %v1662
      %1684 = vst.msk [vmem:[%s217 + $0x24] sm:$0xf] %vm1674, %v1663
      %p1685 = scmp.lt.s32.totalorder %s15, 1
      %s1686 = scalar_select %p1685, %s15, 1
      %s1687 = smul.addr %s1686, 10
      %s1688 = smul.addr %s1687, 4
      %s1689 = scalar_lea.vmem %s4, %s1688
      // Predicated region
      $region37: #{conv_block.5} parent=35 // pred_check
        %p1690 = pneg %p127
      $region38: #{conv_block.5} parent=35 // pred_check_branch
        %1692 = sbr.rel (%p1690) target = $region40
      $region39: #{conv_block.5} parent=35 // pred_region
        _
      $region40: #{conv_block.5} parent=35 // pred_fallthru
        _
    $region36: #{conv_block.5} parent=5 // pred_fallthru
      _
    %p1693 = scmp.le.s32.totalorder 2, %s10
    // Predicated region
    $region41: #{conv_block.5} parent=5 // pred_check
      %p1694 = pneg %p1693
    $region42: #{conv_block.5} parent=5 // pred_check_branch
      %1696 = sbr.rel (%p1694) target = $region44
    $region43: #{conv_block.5} parent=5 // pred_region
      %s1697 = ssub.s32 %s10, 2
      // Predicated region
      $region45: #{conv_block.5} parent=43 // pred_check
        %p1698 = pneg %p133
      $region46: #{conv_block.5} parent=43 // pred_check_branch
        %1700 = sbr.rel (%p1698) target = $region48
      $region47: #{conv_block.5} parent=43 // pred_region
        %p1701 = scmp.lt.s32.totalorder %s16, 1
        %s1702 = scalar_select %p1701, %s16, 1
        %s1703 = smul.addr %s1702, 10
        %s1704 = smul.addr %s1703, 4
        %s1705 = scalar_lea.vmem %s4, %s1704
      $region48: #{conv_block.5} parent=43 // pred_fallthru
        _
    $region44: #{conv_block.5} parent=5 // pred_fallthru
      _
  $region6: #{conv_block.5} parent=0 // loop_footer
    %s14 = sadd.s32 1, %s10
  $region7: #{conv_block.5} parent=0 // loop_footer_branch
    %9 = sbr.rel target = $region3
  $region8: #{conv_block.5} parent=0 // loop_exit
    _

</llo_original>
